<compile_context>
chip_gen: v6e
topology: v6e:2x2x1
jax: 0.10.0
libtpu: 0.0.40
codegen_flags: <defaults>
</compile_context>

<pallas_src>
import jax
import jax.numpy as jnp
from jax.experimental import pallas as pl
from jax.experimental.pallas import tpu as pltpu


# ----------------------------------------------------------------------------
# In-kernel conv helper: im2col (VMEM scratch) + single MXU matmul
# ----------------------------------------------------------------------------
def _conv3x3_lanes(x, w_ref, cols_ref, masks, cin, cpad, k, img_w, hw, relu):
    """3x3 SAME conv of one image in (C, H*W) lane-dense layout.

    x        : (cin, hw) f32 value (hw = H*W on the lane axis)
    w_ref    : (cout, k) bf16 weight ref, k = 9*cpad + 8, bias folded in at
               column 9*cpad (matching ones-row in cols).
    cols_ref : (>=k, hw) bf16 VMEM scratch for the im2col matrix.
    masks    : (9, hw) f32 boundary masks (1.0 where the shifted tap is valid).
    Returns (cout, hw) f32.
    """
    if cpad > cin:
        x = jnp.concatenate(
            [x, jnp.zeros((cpad - cin, hw), jnp.float32)], axis=0)

    t = 0
    for dy in range(3):
        for dx in range(3):
            # Flattened source offset of this tap; SAME zero-padding handled
            # by the boundary mask (no padded copy ever touches HBM).
            off = (dy - 1) * img_w + (dx - 1)
            s = off % hw
            if s == 0:
                shifted = x
            else:
                # Cyclic lane roll: shifted[:, i] == x[:, (i + off) % hw];
                # out-of-row wraparound positions are zeroed by the mask.
                shifted = jnp.concatenate([x[:, s:], x[:, :s]], axis=1)
            shifted = shifted * masks[t:t + 1, :]
            cols_ref[pl.ds(t * cpad, cpad), :] = shifted.astype(jnp.bfloat16)
            t += 1

    # Bias block: one ones-row (at k-8) followed by 7 zero rows keeps K a
    # multiple of 8; the matching weight column holds the bias.
    tail = jnp.concatenate(
        [jnp.ones((1, hw), jnp.float32), jnp.zeros((7, hw), jnp.float32)],
        axis=0)
    cols_ref[pl.ds(9 * cpad, 8), :] = tail.astype(jnp.bfloat16)

    acc = jnp.dot(w_ref[...], cols_ref[pl.ds(0, k), :],
                  preferred_element_type=jnp.float32)
    if relu:
        acc = jnp.maximum(acc, 0.0)
    return acc


# ----------------------------------------------------------------------------
# Fused generator kernel: normalize + 3 convs + residual, one grid step/image
# ----------------------------------------------------------------------------
def _make_gen_kernel(img_w, hw, hid, k1, k2):
    def kernel(x_ref, masks_ref, w1_ref, w2_ref, w3_ref,
               xn_ref, gen_ref, cols_ref):
        masks = masks_ref[...]                                   # (9, hw) f32
        # myBatchNormlize surrogate, fused: [0,1] -> [-1,1].
        xn = x_ref[0] * 2.0 - 1.0                                # (3, hw)
        xn_ref[0] = xn
        # TODO(synk): MWUNet(3,3) internals unavailable; representative 3-layer
        # residual generator (derained = input - predicted rain layer).
        h = _conv3x3_lanes(xn, w1_ref, cols_ref, masks, 3, 8, k1,
                           img_w, hw, relu=True)
        h = _conv3x3_lanes(h, w2_ref, cols_ref, masks, hid, hid, k2,
                           img_w, hw, relu=True)
        rain = _conv3x3_lanes(h, w3_ref, cols_ref, masks, hid, hid, k2,
                              img_w, hw, relu=False)
        gen_ref[0] = xn - rain
    return kernel


def gen_forward(params, x_stack, masks, H, W):
    """x_stack: (G, 3, H*W) f32.  Returns (normalized_input, generator_out)."""
    G, C, HW = x_stack.shape
    HID = params['g_w1'].shape[0]
    K1 = params['g_w1'].shape[1]
    K2 = params['g_w2'].shape[1]
    return pl.pallas_call(
        _make_gen_kernel(W, HW, HID, K1, K2),
        out_shape=(jax.ShapeDtypeStruct((G, C, HW), jnp.float32),
                   jax.ShapeDtypeStruct((G, C, HW), jnp.float32)),
        grid_spec=pltpu.PrefetchScalarGridSpec(
            num_scalar_prefetch=0,
            grid=(G,),
            in_specs=[
                pl.BlockSpec((1, C, HW), lambda g: (g, 0, 0)),
                pl.BlockSpec((9, HW), lambda g: (0, 0)),
                pl.BlockSpec((HID, K1), lambda g: (0, 0)),
                pl.BlockSpec((HID, K2), lambda g: (0, 0)),
                pl.BlockSpec((C, K2), lambda g: (0, 0)),
            ],
            out_specs=[
                pl.BlockSpec((1, C, HW), lambda g: (g, 0, 0)),
                pl.BlockSpec((1, C, HW), lambda g: (g, 0, 0)),
            ],
            scratch_shapes=[pltpu.VMEM((K2, HW), jnp.bfloat16)],
        ),
        compiler_params=pltpu.CompilerParams(
            dimension_semantics=("parallel",)),
    )(x_stack, masks, params['g_w1'], params['g_w2'], params['g_w3'])


# ----------------------------------------------------------------------------
# VGG-surrogate feature kernel (single conv3x3 + relu), batched over inputs
# ----------------------------------------------------------------------------
def _make_vgg_kernel(img_w, hw, k1):
    def kernel(x_ref, masks_ref, w_ref, o_ref, cols_ref):
        masks = masks_ref[...]
        # TODO(synk): pretrained networks.Vgg16 weights unavailable; single
        # conv3x3+ReLU surrogate feature extractor.
        f = _conv3x3_lanes(x_ref[0], w_ref, cols_ref, masks, 3, 8, k1,
                           img_w, hw, relu=True)
        o_ref[0] = f
    return kernel


def vgg_forward(params, x_stack, masks, H, W):
    G, C, HW = x_stack.shape
    VC = params['v_w1'].shape[0]
    K1 = params['v_w1'].shape[1]
    return pl.pallas_call(
        _make_vgg_kernel(W, HW, K1),
        out_shape=jax.ShapeDtypeStruct((G, VC, HW), jnp.float32),
        grid_spec=pltpu.PrefetchScalarGridSpec(
            num_scalar_prefetch=0,
            grid=(G,),
            in_specs=[
                pl.BlockSpec((1, C, HW), lambda g: (g, 0, 0)),
                pl.BlockSpec((9, HW), lambda g: (0, 0)),
                pl.BlockSpec((VC, K1), lambda g: (0, 0)),
            ],
            out_specs=pl.BlockSpec((1, VC, HW), lambda g: (g, 0, 0)),
            scratch_shapes=[pltpu.VMEM((K1, HW), jnp.bfloat16)],
        ),
        compiler_params=pltpu.CompilerParams(
            dimension_semantics=("parallel",)),
    )(x_stack, masks, params['v_w1'])


# ----------------------------------------------------------------------------
# Elementwise Pallas kernels (lane-dense (N, C, H*W) layout)
# ----------------------------------------------------------------------------
def _add_noise_kernel(x_ref, n_ref, o_ref):
    o_ref[...] = jnp.clip(x_ref[...] + n_ref[...], 0.0, 1.0)


def gen_b_add_noise(x, key):
    # genB = add_noise(case=3, noise=[0.02, 0.12])
    # TODO(synk): add_noise implementation unavailable; gaussian noise with a
    # std drawn uniformly in [0.02, 0.12], clipped back to [0, 1].
    k1, k2 = jax.random.split(key)
    sigma = jax.random.uniform(k1, (), minval=0.02, maxval=0.12)
    noise = (sigma * jax.random.normal(k2, x.shape)).astype(x.dtype)
    return pl.pallas_call(
        _add_noise_kernel,
        out_shape=jax.ShapeDtypeStruct(x.shape, x.dtype))(x, noise)


def _unnorm_add_noise_kernel(x_ref, n_ref, t_ref, r_ref):
    # myUnormlize surrogate ([-1,1] -> [0,1]) fused with the genB noise path.
    t = x_ref[...] * 0.5 + 0.5
    t_ref[...] = t
    r_ref[...] = jnp.clip(t + n_ref[...], 0.0, 1.0)


def unnorm_and_add_noise(x, key):
    k1, k2 = jax.random.split(key)
    sigma = jax.random.uniform(k1, (), minval=0.02, maxval=0.12)
    noise = (sigma * jax.random.normal(k2, x.shape)).astype(x.dtype)
    return pl.pallas_call(
        _unnorm_add_noise_kernel,
        out_shape=(jax.ShapeDtypeStruct(x.shape, x.dtype),
                   jax.ShapeDtypeStruct(x.shape, x.dtype)))(x, noise)


# ----------------------------------------------------------------------------
# Parameter packing (bias folded into the flattened bf16 weight matrix)
# ----------------------------------------------------------------------------
def _pack_conv(w, b, cpad):
    """w: (3,3,Cin,Cout), b: (Cout,) -> (Cout, 9*cpad + 8) bf16.

    Column t*cpad + c holds w[dy, dx, c, :] for tap t = dy*3 + dx; column
    9*cpad holds the bias (matched by the ones-row of the im2col matrix).
    """
    cin, cout = w.shape[2], w.shape[3]
    k = 9 * cpad + 8
    wf = jnp.zeros((cout, k), jnp.float32)
    for dy in range(3):
        for dx in range(3):
            t = dy * 3 + dx
            wf = wf.at[:, t * cpad:t * cpad + cin].set(w[dy, dx].T)
    wf = wf.at[:, 9 * cpad].set(b)
    return wf.astype(jnp.bfloat16)


def init_params(key, hidden=16, vgg_ch=16):
    # gaussian_weights_init: N(0, 0.02) weights, zero bias (deterministic seed)
    assert hidden % 8 == 0, "hidden channels must be a multiple of 8"

    def conv_init(k, cin, cout):
        w = 0.02 * jax.random.normal(k, (3, 3, cin, cout), jnp.float32)
        b = jnp.zeros((cout,), jnp.float32)
        return w, b

    ks = jax.random.split(key, 4)
    w1, b1 = conv_init(ks[0], 3, hidden)
    w2, b2 = conv_init(ks[1], hidden, hidden)
    w3, b3 = conv_init(ks[2], hidden, 3)
    v1, vb1 = conv_init(ks[3], 3, vgg_ch)
    return {
        'g_w1': _pack_conv(w1, b1, 8),
        'g_w2': _pack_conv(w2, b2, hidden),
        'g_w3': _pack_conv(w3, b3, hidden),
        'v_w1': _pack_conv(v1, vb1, 8),
    }


def make_tap_masks(H, W):
    """(9, H*W) f32 masks: 1.0 where the 3x3 tap source pixel is in-bounds."""
    hh, ww = jnp.meshgrid(jnp.arange(H), jnp.arange(W), indexing='ij')
    hh = hh.reshape(-1)
    ww = ww.reshape(-1)
    masks = []
    for dy in range(3):
        for dx in range(3):
            valid = ((hh + dy - 1 >= 0) & (hh + dy - 1 < H) &
                     (ww + dx - 1 >= 0) & (ww + dx - 1 < W))
            masks.append(valid.astype(jnp.float32))
    return jnp.stack(masks, axis=0)


# ----------------------------------------------------------------------------
# DerainCycleGAN.forward(ep, opts) data flow
# ----------------------------------------------------------------------------
def derain_cyclegan_forward(params, input_A, input_B, key):
    """input_A / input_B: NCHW float32 images in [0, 1] (PyTorch convention)."""
    N, C, H, W = input_A.shape
    HW = H * W
    A = input_A.reshape(N, C, HW).astype(jnp.float32)
    B = input_B.reshape(N, C, HW).astype(jnp.float32)
    masks = make_tap_masks(H, W)
    k1, k2 = jax.random.split(key)

    # genB(real_B): noise applied in the [0,1] domain (reference ordering);
    # the [0,1]->[-1,1] normalize happens inside the fused generator kernel.
    fake_B_noisy = gen_b_add_noise(B, k1)

    # One batched fused-generator call covers all three genA passes:
    #   slice 0: real_A       -> (real_A_train,   fake_A_encoded)
    #   slice 1: genB(real_B) -> (fake_B_encoded, real_B_recon)
    #   slice 2: real_B       -> (real_B_train,   fake_B_I)
    stack = jnp.concatenate([A, fake_B_noisy, B], axis=0)       # (3N, 3, HW)
    xnorm, gen_out = gen_forward(params, stack, masks, H, W)
    real_A_train = xnorm[0:N]
    fake_B_encoded = xnorm[N:2 * N]
    real_B_train = xnorm[2 * N:3 * N]
    fake_A_encoded = gen_out[0:N]
    real_B_recon = gen_out[N:2 * N]
    fake_B_I = gen_out[2 * N:3 * N]

    # vgg perceptual features, both calls batched into one kernel.
    perc = vgg_forward(
        params, jnp.concatenate([real_A_train, fake_A_encoded], axis=0),
        masks, H, W)
    perc_real_A = perc[0:N]
    perc_fake_A = perc[N:2 * N]

    # fake_A_tensor = myUnormlize(fake_A_encoded);
    # real_A_recon  = genB(fake_A_tensor)          (fused into one kernel)
    fake_A_tensor, real_A_recon = unnorm_and_add_noise(fake_A_encoded, k2)

    def nchw(t):
        return t.reshape(t.shape[0], t.shape[1], H, W)

    return {
        'real_A_encoded': input_A,
        'real_B_encoded': input_B,
        'real_A_train': nchw(real_A_train),
        'fake_A_encoded': nchw(fake_A_encoded),
        'fake_B_encoded': nchw(fake_B_encoded),
        'fake_A_tensor': nchw(fake_A_tensor),
        'real_B_recon': nchw(real_B_recon),
        'real_A_recon': nchw(real_A_recon),
        'real_B_train': nchw(real_B_train),
        'fake_B_I': nchw(fake_B_I),
        'perc_real_A': nchw(perc_real_A),
        'perc_fake_A': nchw(perc_fake_A),
    }


# TODO(synk): update_D / update_EG (losses, Adam, ImagePool, MultiScaleDis
# backward) are training/host-side logic with no kernel forward equivalent.

if __name__ == "__main__":
    key = jax.random.PRNGKey(0)
    k_params, k_a, k_b, k_noise = jax.random.split(key, 4)

    params = init_params(k_params, hidden=16, vgg_ch=16)

    N, C, H, W = 2, 3, 16, 16
    input_A = jax.random.uniform(k_a, (N, C, H, W), jnp.float32)   # rainy image
    input_B = jax.random.uniform(k_b, (N, C, H, W), jnp.float32)   # clean image

    fwd = jax.jit(derain_cyclegan_forward)
    out = fwd(params, input_A, input_B, k_noise)
    out = jax.block_until_ready(out)

    # light sanity checks on shapes / finiteness
    assert out['fake_A_encoded'].shape == (N, C, H, W)
    assert out['real_B_recon'].shape == (N, C, H, W)
    assert out['perc_real_A'].shape == (N, 16, H, W)
    assert bool(jnp.isfinite(out['fake_A_encoded']).all())
    assert bool(jnp.isfinite(out['real_B_recon']).all())

    print("KERNEL_OK")
</pallas_src>

<mosaic_0001>
module attributes {stable_mosaic.version = 11 : i64} {
  func.func @_add_noise_kernel(%arg0: memref<2x3x256xf32, #tpu.memory_space<vmem>>, %arg1: memref<2x3x256xf32, #tpu.memory_space<vmem>>, %arg2: memref<2x3x256xf32, #tpu.memory_space<vmem>>) attributes {dimension_semantics = [], scalar_prefetch = 0 : i64, scratch_operands = 0 : i64, tpu.core_type = #tpu.core_type<tc>} {
    %c0 = arith.constant 0 : index
    %c0_0 = arith.constant 0 : index
    %c0_1 = arith.constant 0 : index
    %0 = vector.load %arg0[%c0, %c0_0, %c0_1] : memref<2x3x256xf32, #tpu.memory_space<vmem>>, vector<2x3x256xf32>
    %c0_2 = arith.constant 0 : index
    %c0_3 = arith.constant 0 : index
    %c0_4 = arith.constant 0 : index
    %1 = vector.load %arg1[%c0_2, %c0_3, %c0_4] : memref<2x3x256xf32, #tpu.memory_space<vmem>>, vector<2x3x256xf32>
    %2 = arith.addf %0, %1 : vector<2x3x256xf32>
    %cst = arith.constant 0.000000e+00 : f32
    %cst_5 = arith.constant 1.000000e+00 : f32
    %3 = vector.broadcast %cst : f32 to vector<2x3x256xf32>
    %4 = arith.maximumf %3, %2 : vector<2x3x256xf32>
    %5 = vector.broadcast %cst_5 : f32 to vector<2x3x256xf32>
    %6 = arith.minimumf %5, %4 : vector<2x3x256xf32>
    %c0_6 = arith.constant 0 : index
    %c0_7 = arith.constant 0 : index
    %c0_8 = arith.constant 0 : index
    %7 = vector.load %arg2[%c0_6, %c0_7, %c0_8] : memref<2x3x256xf32, #tpu.memory_space<vmem>>, vector<2x3x256xf32>
    tpu.vector_store %arg2[%c0_6, %c0_7, %c0_8], %6 {strides = array<i32>} : memref<2x3x256xf32, #tpu.memory_space<vmem>>, vector<2x3x256xf32>,
    return
  }
}

module attributes {stable_mosaic.version = 11 : i64} {
  func.func @kernel(%arg0: i32, %arg1: memref<1x3x256xf32, #tpu.memory_space<vmem>>, %arg2: memref<9x256xf32, #tpu.memory_space<vmem>>, %arg3: memref<16x80xbf16, #tpu.memory_space<vmem>>, %arg4: memref<16x152xbf16, #tpu.memory_space<vmem>>, %arg5: memref<3x152xbf16, #tpu.memory_space<vmem>>, %arg6: memref<1x3x256xf32, #tpu.memory_space<vmem>>, %arg7: memref<1x3x256xf32, #tpu.memory_space<vmem>>, %arg8: memref<152x256xbf16, #tpu.memory_space<vmem>>) attributes {dimension_semantics = [#tpu.dimension_semantics<parallel>], iteration_bounds = array<i64: 6>, scalar_prefetch = 0 : i64, scratch_operands = 1 : i64, tpu.core_type = #tpu.core_type<tc>, window_params = [{transform_indices = @transform_0, window_bounds = array<i64: 1, 3, 256>}, {pipeline_mode = #tpu.pipeline_mode<synchronous>, transform_indices = @transform_1, window_bounds = array<i64: 9, 256>}, {pipeline_mode = #tpu.pipeline_mode<synchronous>, transform_indices = @transform_2, window_bounds = array<i64: 16, 80>}, {pipeline_mode = #tpu.pipeline_mode<synchronous>, transform_indices = @transform_3, window_bounds = array<i64: 16, 152>}, {pipeline_mode = #tpu.pipeline_mode<synchronous>, transform_indices = @transform_4, window_bounds = array<i64: 3, 152>}, {transform_indices = @transform_5, window_bounds = array<i64: 1, 3, 256>}, {transform_indices = @transform_6, window_bounds = array<i64: 1, 3, 256>}]} {
    %c0 = arith.constant 0 : index
    %c0_0 = arith.constant 0 : index
    %0 = vector.load %arg2[%c0, %c0_0] : memref<9x256xf32, #tpu.memory_space<vmem>>, vector<9x256xf32>
    %c0_1 = arith.constant 0 : index
    %c0_2 = arith.constant 0 : index
    %c0_3 = arith.constant 0 : index
    %1 = vector.load %arg1[%c0_1, %c0_2, %c0_3] : memref<1x3x256xf32, #tpu.memory_space<vmem>>, vector<1x3x256xf32>
    %2 = vector.shape_cast %1 : vector<1x3x256xf32> to vector<3x256xf32>
    %cst = arith.constant 2.000000e+00 : f32
    %3 = vector.broadcast %cst : f32 to vector<3x256xf32>
    %4 = arith.mulf %2, %3 : vector<3x256xf32>
    %cst_4 = arith.constant 1.000000e+00 : f32
    %5 = vector.broadcast %cst_4 : f32 to vector<3x256xf32>
    %6 = arith.subf %4, %5 : vector<3x256xf32>
    %c0_5 = arith.constant 0 : index
    %c0_6 = arith.constant 0 : index
    %c0_7 = arith.constant 0 : index
    %7 = vector.load %arg6[%c0_5, %c0_6, %c0_7] : memref<1x3x256xf32, #tpu.memory_space<vmem>>, vector<1x3x256xf32>
    %8 = vector.shape_cast %7 : vector<1x3x256xf32> to vector<3x256xf32>
    %9 = vector.shape_cast %6 : vector<3x256xf32> to vector<1x3x256xf32>
    tpu.vector_store %arg6[%c0_5, %c0_6, %c0_7], %9 {strides = array<i32>} : memref<1x3x256xf32, #tpu.memory_space<vmem>>, vector<1x3x256xf32>,
    %cst_8 = arith.constant 0.000000e+00 : f32
    %10 = vector.broadcast %cst_8 : f32 to vector<5x256xf32>
    %11 = tpu.concatenate %6, %10 in 0 : vector<3x256xf32>, vector<5x256xf32> -> vector<8x256xf32>
    %12 = vector.extract_strided_slice %11 {offsets = [0, 239], sizes = [8, 17], strides = [1, 1]} : vector<8x256xf32> to vector<8x17xf32>
    %13 = vector.extract_strided_slice %11 {offsets = [0, 0], sizes = [8, 239], strides = [1, 1]} : vector<8x256xf32> to vector<8x239xf32>
    %14 = tpu.concatenate %12, %13 in 1 : vector<8x17xf32>, vector<8x239xf32> -> vector<8x256xf32>
    %15 = vector.extract_strided_slice %0 {offsets = [0, 0], sizes = [1, 256], strides = [1, 1]} : vector<9x256xf32> to vector<1x256xf32>
    %16 = vector.broadcast %15 : vector<1x256xf32> to vector<8x256xf32>
    %17 = arith.mulf %14, %16 : vector<8x256xf32>
    %18 = arith.truncf %17 : vector<8x256xf32> to vector<8x256xbf16>
    %c0_9 = arith.constant 0 : index
    %c0_10 = arith.constant 0 : index
    %19 = vector.load %arg8[%c0_9, %c0_10] : memref<152x256xbf16, #tpu.memory_space<vmem>>, vector<8x256xbf16>
    tpu.vector_store %arg8[%c0_9, %c0_10], %18 {strides = array<i32>} : memref<152x256xbf16, #tpu.memory_space<vmem>>, vector<8x256xbf16>,
    %20 = vector.extract_strided_slice %11 {offsets = [0, 240], sizes = [8, 16], strides = [1, 1]} : vector<8x256xf32> to vector<8x16xf32>
    %21 = vector.extract_strided_slice %11 {offsets = [0, 0], sizes = [8, 240], strides = [1, 1]} : vector<8x256xf32> to vector<8x240xf32>
    %22 = tpu.concatenate %20, %21 in 1 : vector<8x16xf32>, vector<8x240xf32> -> vector<8x256xf32>
    %23 = vector.extract_strided_slice %0 {offsets = [1, 0], sizes = [1, 256], strides = [1, 1]} : vector<9x256xf32> to vector<1x256xf32>
    %24 = vector.broadcast %23 : vector<1x256xf32> to vector<8x256xf32>
    %25 = arith.mulf %22, %24 : vector<8x256xf32>
    %26 = arith.truncf %25 : vector<8x256xf32> to vector<8x256xbf16>
    %c8 = arith.constant 8 : index
    %c0_11 = arith.constant 0 : index
    %27 = vector.load %arg8[%c8, %c0_11] : memref<152x256xbf16, #tpu.memory_space<vmem>>, vector<8x256xbf16>
    tpu.vector_store %arg8[%c8, %c0_11], %26 {strides = array<i32>} : memref<152x256xbf16, #tpu.memory_space<vmem>>, vector<8x256xbf16>,
    %28 = vector.extract_strided_slice %11 {offsets = [0, 241], sizes = [8, 15], strides = [1, 1]} : vector<8x256xf32> to vector<8x15xf32>
    %29 = vector.extract_strided_slice %11 {offsets = [0, 0], sizes = [8, 241], strides = [1, 1]} : vector<8x256xf32> to vector<8x241xf32>
    %30 = tpu.concatenate %28, %29 in 1 : vector<8x15xf32>, vector<8x241xf32> -> vector<8x256xf32>
    %31 = vector.extract_strided_slice %0 {offsets = [2, 0], sizes = [1, 256], strides = [1, 1]} : vector<9x256xf32> to vector<1x256xf32>
    %32 = vector.broadcast %31 : vector<1x256xf32> to vector<8x256xf32>
    %33 = arith.mulf %30, %32 : vector<8x256xf32>
    %34 = arith.truncf %33 : vector<8x256xf32> to vector<8x256xbf16>
    %c16 = arith.constant 16 : index
    %c0_12 = arith.constant 0 : index
    %35 = vector.load %arg8[%c16, %c0_12] : memref<152x256xbf16, #tpu.memory_space<vmem>>, vector<8x256xbf16>
    tpu.vector_store %arg8[%c16, %c0_12], %34 {strides = array<i32>} : memref<152x256xbf16, #tpu.memory_space<vmem>>, vector<8x256xbf16>,
    %36 = vector.extract_strided_slice %11 {offsets = [0, 255], sizes = [8, 1], strides = [1, 1]} : vector<8x256xf32> to vector<8x1xf32>
    %37 = vector.extract_strided_slice %11 {offsets = [0, 0], sizes = [8, 255], strides = [1, 1]} : vector<8x256xf32> to vector<8x255xf32>
    %38 = tpu.concatenate %36, %37 in 1 : vector<8x1xf32>, vector<8x255xf32> -> vector<8x256xf32>
    %39 = vector.extract_strided_slice %0 {offsets = [3, 0], sizes = [1, 256], strides = [1, 1]} : vector<9x256xf32> to vector<1x256xf32>
    %40 = vector.broadcast %39 : vector<1x256xf32> to vector<8x256xf32>
    %41 = arith.mulf %38, %40 : vector<8x256xf32>
    %42 = arith.truncf %41 : vector<8x256xf32> to vector<8x256xbf16>
    %c24 = arith.constant 24 : index
    %c0_13 = arith.constant 0 : index
    %43 = vector.load %arg8[%c24, %c0_13] : memref<152x256xbf16, #tpu.memory_space<vmem>>, vector<8x256xbf16>
    tpu.vector_store %arg8[%c24, %c0_13], %42 {strides = array<i32>} : memref<152x256xbf16, #tpu.memory_space<vmem>>, vector<8x256xbf16>,
    %44 = vector.extract_strided_slice %0 {offsets = [4, 0], sizes = [1, 256], strides = [1, 1]} : vector<9x256xf32> to vector<1x256xf32>
    %45 = vector.broadcast %44 : vector<1x256xf32> to vector<8x256xf32>
    %46 = arith.mulf %11, %45 : vector<8x256xf32>
    %47 = arith.truncf %46 : vector<8x256xf32> to vector<8x256xbf16>
    %c32 = arith.constant 32 : index
    %c0_14 = arith.constant 0 : index
    %48 = vector.load %arg8[%c32, %c0_14] : memref<152x256xbf16, #tpu.memory_space<vmem>>, vector<8x256xbf16>
    tpu.vector_store %arg8[%c32, %c0_14], %47 {strides = array<i32>} : memref<152x256xbf16, #tpu.memory_space<vmem>>, vector<8x256xbf16>,
    %49 = vector.extract_strided_slice %11 {offsets = [0, 1], sizes = [8, 255], strides = [1, 1]} : vector<8x256xf32> to vector<8x255xf32>
    %50 = vector.extract_strided_slice %11 {offsets = [0, 0], sizes = [8, 1], strides = [1, 1]} : vector<8x256xf32> to vector<8x1xf32>
    %51 = tpu.concatenate %49, %50 in 1 : vector<8x255xf32>, vector<8x1xf32> -> vector<8x256xf32>
    %52 = vector.extract_strided_slice %0 {offsets = [5, 0], sizes = [1, 256], strides = [1, 1]} : vector<9x256xf32> to vector<1x256xf32>
    %53 = vector.broadcast %52 : vector<1x256xf32> to vector<8x256xf32>
    %54 = arith.mulf %51, %53 : vector<8x256xf32>
    %55 = arith.truncf %54 : vector<8x256xf32> to vector<8x256xbf16>
    %c40 = arith.constant 40 : index
    %c0_15 = arith.constant 0 : index
    %56 = vector.load %arg8[%c40, %c0_15] : memref<152x256xbf16, #tpu.memory_space<vmem>>, vector<8x256xbf16>
    tpu.vector_store %arg8[%c40, %c0_15], %55 {strides = array<i32>} : memref<152x256xbf16, #tpu.memory_space<vmem>>, vector<8x256xbf16>,
    %57 = vector.extract_strided_slice %11 {offsets = [0, 15], sizes = [8, 241], strides = [1, 1]} : vector<8x256xf32> to vector<8x241xf32>
    %58 = vector.extract_strided_slice %11 {offsets = [0, 0], sizes = [8, 15], strides = [1, 1]} : vector<8x256xf32> to vector<8x15xf32>
    %59 = tpu.concatenate %57, %58 in 1 : vector<8x241xf32>, vector<8x15xf32> -> vector<8x256xf32>
    %60 = vector.extract_strided_slice %0 {offsets = [6, 0], sizes = [1, 256], strides = [1, 1]} : vector<9x256xf32> to vector<1x256xf32>
    %61 = vector.broadcast %60 : vector<1x256xf32> to vector<8x256xf32>
    %62 = arith.mulf %59, %61 : vector<8x256xf32>
    %63 = arith.truncf %62 : vector<8x256xf32> to vector<8x256xbf16>
    %c48 = arith.constant 48 : index
    %c0_16 = arith.constant 0 : index
    %64 = vector.load %arg8[%c48, %c0_16] : memref<152x256xbf16, #tpu.memory_space<vmem>>, vector<8x256xbf16>
    tpu.vector_store %arg8[%c48, %c0_16], %63 {strides = array<i32>} : memref<152x256xbf16, #tpu.memory_space<vmem>>, vector<8x256xbf16>,
    %65 = vector.extract_strided_slice %11 {offsets = [0, 16], sizes = [8, 240], strides = [1, 1]} : vector<8x256xf32> to vector<8x240xf32>
    %66 = vector.extract_strided_slice %11 {offsets = [0, 0], sizes = [8, 16], strides = [1, 1]} : vector<8x256xf32> to vector<8x16xf32>
    %67 = tpu.concatenate %65, %66 in 1 : vector<8x240xf32>, vector<8x16xf32> -> vector<8x256xf32>
    %68 = vector.extract_strided_slice %0 {offsets = [7, 0], sizes = [1, 256], strides = [1, 1]} : vector<9x256xf32> to vector<1x256xf32>
    %69 = vector.broadcast %68 : vector<1x256xf32> to vector<8x256xf32>
    %70 = arith.mulf %67, %69 : vector<8x256xf32>
    %71 = arith.truncf %70 : vector<8x256xf32> to vector<8x256xbf16>
    %c56 = arith.constant 56 : index
    %c0_17 = arith.constant 0 : index
    %72 = vector.load %arg8[%c56, %c0_17] : memref<152x256xbf16, #tpu.memory_space<vmem>>, vector<8x256xbf16>
    tpu.vector_store %arg8[%c56, %c0_17], %71 {strides = array<i32>} : memref<152x256xbf16, #tpu.memory_space<vmem>>, vector<8x256xbf16>,
    %73 = vector.extract_strided_slice %11 {offsets = [0, 17], sizes = [8, 239], strides = [1, 1]} : vector<8x256xf32> to vector<8x239xf32>
    %74 = vector.extract_strided_slice %11 {offsets = [0, 0], sizes = [8, 17], strides = [1, 1]} : vector<8x256xf32> to vector<8x17xf32>
    %75 = tpu.concatenate %73, %74 in 1 : vector<8x239xf32>, vector<8x17xf32> -> vector<8x256xf32>
    %76 = vector.extract_strided_slice %0 {offsets = [8, 0], sizes = [1, 256], strides = [1, 1]} : vector<9x256xf32> to vector<1x256xf32>
    %77 = vector.broadcast %76 : vector<1x256xf32> to vector<8x256xf32>
    %78 = arith.mulf %75, %77 : vector<8x256xf32>
    %79 = arith.truncf %78 : vector<8x256xf32> to vector<8x256xbf16>
    %c64 = arith.constant 64 : index
    %c0_18 = arith.constant 0 : index
    %80 = vector.load %arg8[%c64, %c0_18] : memref<152x256xbf16, #tpu.memory_space<vmem>>, vector<8x256xbf16>
    tpu.vector_store %arg8[%c64, %c0_18], %79 {strides = array<i32>} : memref<152x256xbf16, #tpu.memory_space<vmem>>, vector<8x256xbf16>,
    %cst_19 = arith.constant 1.000000e+00 : f32
    %81 = vector.broadcast %cst_19 : f32 to vector<1x256xf32>
    %cst_20 = arith.constant 0.000000e+00 : f32
    %82 = vector.broadcast %cst_20 : f32 to vector<7x256xf32>
    %83 = tpu.concatenate %81, %82 in 0 : vector<1x256xf32>, vector<7x256xf32> -> vector<8x256xf32>
    %84 = arith.truncf %83 : vector<8x256xf32> to vector<8x256xbf16>
    %c72 = arith.constant 72 : index
    %c0_21 = arith.constant 0 : index
    %85 = vector.load %arg8[%c72, %c0_21] : memref<152x256xbf16, #tpu.memory_space<vmem>>, vector<8x256xbf16>
    tpu.vector_store %arg8[%c72, %c0_21], %84 {strides = array<i32>} : memref<152x256xbf16, #tpu.memory_space<vmem>>, vector<8x256xbf16>,
    %c0_22 = arith.constant 0 : index
    %c0_23 = arith.constant 0 : index
    %86 = vector.load %arg3[%c0_22, %c0_23] : memref<16x80xbf16, #tpu.memory_space<vmem>>, vector<16x80xbf16>
    %c0_24 = arith.constant 0 : index
    %c0_25 = arith.constant 0 : index
    %87 = vector.load %arg8[%c0_24, %c0_25] : memref<152x256xbf16, #tpu.memory_space<vmem>>, vector<80x256xbf16>
    %cst_26 = arith.constant dense<0.000000e+00> : vector<16x256xf32>
    %88 = tpu.matmul %86, %87, %cst_26 {dimension_numbers = #tpu.dot_dimension_numbers<[1], [0], [0], [1], [0, 0, 1, 1], [], []>} : vector<16x80xbf16>, vector<80x256xbf16>, vector<16x256xf32> -> vector<16x256xf32>
    %cst_27 = arith.constant 0.000000e+00 : f32
    %89 = vector.broadcast %cst_27 : f32 to vector<16x256xf32>
    %90 = arith.maximumf %88, %89 : vector<16x256xf32>
    %91 = vector.extract_strided_slice %90 {offsets = [0, 239], sizes = [16, 17], strides = [1, 1]} : vector<16x256xf32> to vector<16x17xf32>
    %92 = vector.extract_strided_slice %90 {offsets = [0, 0], sizes = [16, 239], strides = [1, 1]} : vector<16x256xf32> to vector<16x239xf32>
    %93 = tpu.concatenate %91, %92 in 1 : vector<16x17xf32>, vector<16x239xf32> -> vector<16x256xf32>
    %94 = vector.extract_strided_slice %0 {offsets = [0, 0], sizes = [1, 256], strides = [1, 1]} : vector<9x256xf32> to vector<1x256xf32>
    %95 = vector.broadcast %94 : vector<1x256xf32> to vector<16x256xf32>
    %96 = arith.mulf %93, %95 : vector<16x256xf32>
    %97 = arith.truncf %96 : vector<16x256xf32> to vector<16x256xbf16>
    %c0_28 = arith.constant 0 : index
    %c0_29 = arith.constant 0 : index
    %98 = vector.load %arg8[%c0_28, %c0_29] : memref<152x256xbf16, #tpu.memory_space<vmem>>, vector<16x256xbf16>
    tpu.vector_store %arg8[%c0_28, %c0_29], %97 {strides = array<i32>} : memref<152x256xbf16, #tpu.memory_space<vmem>>, vector<16x256xbf16>,
    %99 = vector.extract_strided_slice %90 {offsets = [0, 240], sizes = [16, 16], strides = [1, 1]} : vector<16x256xf32> to vector<16x16xf32>
    %100 = vector.extract_strided_slice %90 {offsets = [0, 0], sizes = [16, 240], strides = [1, 1]} : vector<16x256xf32> to vector<16x240xf32>
    %101 = tpu.concatenate %99, %100 in 1 : vector<16x16xf32>, vector<16x240xf32> -> vector<16x256xf32>
    %102 = vector.extract_strided_slice %0 {offsets = [1, 0], sizes = [1, 256], strides = [1, 1]} : vector<9x256xf32> to vector<1x256xf32>
    %103 = vector.broadcast %102 : vector<1x256xf32> to vector<16x256xf32>
    %104 = arith.mulf %101, %103 : vector<16x256xf32>
    %105 = arith.truncf %104 : vector<16x256xf32> to vector<16x256xbf16>
    %c16_30 = arith.constant 16 : index
    %c0_31 = arith.constant 0 : index
    %106 = vector.load %arg8[%c16_30, %c0_31] : memref<152x256xbf16, #tpu.memory_space<vmem>>, vector<16x256xbf16>
    tpu.vector_store %arg8[%c16_30, %c0_31], %105 {strides = array<i32>} : memref<152x256xbf16, #tpu.memory_space<vmem>>, vector<16x256xbf16>,
    %107 = vector.extract_strided_slice %90 {offsets = [0, 241], sizes = [16, 15], strides = [1, 1]} : vector<16x256xf32> to vector<16x15xf32>
    %108 = vector.extract_strided_slice %90 {offsets = [0, 0], sizes = [16, 241], strides = [1, 1]} : vector<16x256xf32> to vector<16x241xf32>
    %109 = tpu.concatenate %107, %108 in 1 : vector<16x15xf32>, vector<16x241xf32> -> vector<16x256xf32>
    %110 = vector.extract_strided_slice %0 {offsets = [2, 0], sizes = [1, 256], strides = [1, 1]} : vector<9x256xf32> to vector<1x256xf32>
    %111 = vector.broadcast %110 : vector<1x256xf32> to vector<16x256xf32>
    %112 = arith.mulf %109, %111 : vector<16x256xf32>
    %113 = arith.truncf %112 : vector<16x256xf32> to vector<16x256xbf16>
    %c32_32 = arith.constant 32 : index
    %c0_33 = arith.constant 0 : index
    %114 = vector.load %arg8[%c32_32, %c0_33] : memref<152x256xbf16, #tpu.memory_space<vmem>>, vector<16x256xbf16>
    tpu.vector_store %arg8[%c32_32, %c0_33], %113 {strides = array<i32>} : memref<152x256xbf16, #tpu.memory_space<vmem>>, vector<16x256xbf16>,
    %115 = vector.extract_strided_slice %90 {offsets = [0, 255], sizes = [16, 1], strides = [1, 1]} : vector<16x256xf32> to vector<16x1xf32>
    %116 = vector.extract_strided_slice %90 {offsets = [0, 0], sizes = [16, 255], strides = [1, 1]} : vector<16x256xf32> to vector<16x255xf32>
    %117 = tpu.concatenate %115, %116 in 1 : vector<16x1xf32>, vector<16x255xf32> -> vector<16x256xf32>
    %118 = vector.extract_strided_slice %0 {offsets = [3, 0], sizes = [1, 256], strides = [1, 1]} : vector<9x256xf32> to vector<1x256xf32>
    %119 = vector.broadcast %118 : vector<1x256xf32> to vector<16x256xf32>
    %120 = arith.mulf %117, %119 : vector<16x256xf32>
    %121 = arith.truncf %120 : vector<16x256xf32> to vector<16x256xbf16>
    %c48_34 = arith.constant 48 : index
    %c0_35 = arith.constant 0 : index
    %122 = vector.load %arg8[%c48_34, %c0_35] : memref<152x256xbf16, #tpu.memory_space<vmem>>, vector<16x256xbf16>
    tpu.vector_store %arg8[%c48_34, %c0_35], %121 {strides = array<i32>} : memref<152x256xbf16, #tpu.memory_space<vmem>>, vector<16x256xbf16>,
    %123 = vector.extract_strided_slice %0 {offsets = [4, 0], sizes = [1, 256], strides = [1, 1]} : vector<9x256xf32> to vector<1x256xf32>
    %124 = vector.broadcast %123 : vector<1x256xf32> to vector<16x256xf32>
    %125 = arith.mulf %90, %124 : vector<16x256xf32>
    %126 = arith.truncf %125 : vector<16x256xf32> to vector<16x256xbf16>
    %c64_36 = arith.constant 64 : index
    %c0_37 = arith.constant 0 : index
    %127 = vector.load %arg8[%c64_36, %c0_37] : memref<152x256xbf16, #tpu.memory_space<vmem>>, vector<16x256xbf16>
    tpu.vector_store %arg8[%c64_36, %c0_37], %126 {strides = array<i32>} : memref<152x256xbf16, #tpu.memory_space<vmem>>, vector<16x256xbf16>,
    %128 = vector.extract_strided_slice %90 {offsets = [0, 1], sizes = [16, 255], strides = [1, 1]} : vector<16x256xf32> to vector<16x255xf32>
    %129 = vector.extract_strided_slice %90 {offsets = [0, 0], sizes = [16, 1], strides = [1, 1]} : vector<16x256xf32> to vector<16x1xf32>
    %130 = tpu.concatenate %128, %129 in 1 : vector<16x255xf32>, vector<16x1xf32> -> vector<16x256xf32>
    %131 = vector.extract_strided_slice %0 {offsets = [5, 0], sizes = [1, 256], strides = [1, 1]} : vector<9x256xf32> to vector<1x256xf32>
    %132 = vector.broadcast %131 : vector<1x256xf32> to vector<16x256xf32>
    %133 = arith.mulf %130, %132 : vector<16x256xf32>
    %134 = arith.truncf %133 : vector<16x256xf32> to vector<16x256xbf16>
    %c80 = arith.constant 80 : index
    %c0_38 = arith.constant 0 : index
    %135 = vector.load %arg8[%c80, %c0_38] : memref<152x256xbf16, #tpu.memory_space<vmem>>, vector<16x256xbf16>
    tpu.vector_store %arg8[%c80, %c0_38], %134 {strides = array<i32>} : memref<152x256xbf16, #tpu.memory_space<vmem>>, vector<16x256xbf16>,
    %136 = vector.extract_strided_slice %90 {offsets = [0, 15], sizes = [16, 241], strides = [1, 1]} : vector<16x256xf32> to vector<16x241xf32>
    %137 = vector.extract_strided_slice %90 {offsets = [0, 0], sizes = [16, 15], strides = [1, 1]} : vector<16x256xf32> to vector<16x15xf32>
    %138 = tpu.concatenate %136, %137 in 1 : vector<16x241xf32>, vector<16x15xf32> -> vector<16x256xf32>
    %139 = vector.extract_strided_slice %0 {offsets = [6, 0], sizes = [1, 256], strides = [1, 1]} : vector<9x256xf32> to vector<1x256xf32>
    %140 = vector.broadcast %139 : vector<1x256xf32> to vector<16x256xf32>
    %141 = arith.mulf %138, %140 : vector<16x256xf32>
    %142 = arith.truncf %141 : vector<16x256xf32> to vector<16x256xbf16>
    %c96 = arith.constant 96 : index
    %c0_39 = arith.constant 0 : index
    %143 = vector.load %arg8[%c96, %c0_39] : memref<152x256xbf16, #tpu.memory_space<vmem>>, vector<16x256xbf16>
    tpu.vector_store %arg8[%c96, %c0_39], %142 {strides = array<i32>} : memref<152x256xbf16, #tpu.memory_space<vmem>>, vector<16x256xbf16>,
    %144 = vector.extract_strided_slice %90 {offsets = [0, 16], sizes = [16, 240], strides = [1, 1]} : vector<16x256xf32> to vector<16x240xf32>
    %145 = vector.extract_strided_slice %90 {offsets = [0, 0], sizes = [16, 16], strides = [1, 1]} : vector<16x256xf32> to vector<16x16xf32>
    %146 = tpu.concatenate %144, %145 in 1 : vector<16x240xf32>, vector<16x16xf32> -> vector<16x256xf32>
    %147 = vector.extract_strided_slice %0 {offsets = [7, 0], sizes = [1, 256], strides = [1, 1]} : vector<9x256xf32> to vector<1x256xf32>
    %148 = vector.broadcast %147 : vector<1x256xf32> to vector<16x256xf32>
    %149 = arith.mulf %146, %148 : vector<16x256xf32>
    %150 = arith.truncf %149 : vector<16x256xf32> to vector<16x256xbf16>
    %c112 = arith.constant 112 : index
    %c0_40 = arith.constant 0 : index
    %151 = vector.load %arg8[%c112, %c0_40] : memref<152x256xbf16, #tpu.memory_space<vmem>>, vector<16x256xbf16>
    tpu.vector_store %arg8[%c112, %c0_40], %150 {strides = array<i32>} : memref<152x256xbf16, #tpu.memory_space<vmem>>, vector<16x256xbf16>,
    %152 = vector.extract_strided_slice %90 {offsets = [0, 17], sizes = [16, 239], strides = [1, 1]} : vector<16x256xf32> to vector<16x239xf32>
    %153 = vector.extract_strided_slice %90 {offsets = [0, 0], sizes = [16, 17], strides = [1, 1]} : vector<16x256xf32> to vector<16x17xf32>
    %154 = tpu.concatenate %152, %153 in 1 : vector<16x239xf32>, vector<16x17xf32> -> vector<16x256xf32>
    %155 = vector.extract_strided_slice %0 {offsets = [8, 0], sizes = [1, 256], strides = [1, 1]} : vector<9x256xf32> to vector<1x256xf32>
    %156 = vector.broadcast %155 : vector<1x256xf32> to vector<16x256xf32>
    %157 = arith.mulf %154, %156 : vector<16x256xf32>
    %158 = arith.truncf %157 : vector<16x256xf32> to vector<16x256xbf16>
    %c128 = arith.constant 128 : index
    %c0_41 = arith.constant 0 : index
    %159 = vector.load %arg8[%c128, %c0_41] : memref<152x256xbf16, #tpu.memory_space<vmem>>, vector<16x256xbf16>
    tpu.vector_store %arg8[%c128, %c0_41], %158 {strides = array<i32>} : memref<152x256xbf16, #tpu.memory_space<vmem>>, vector<16x256xbf16>,
    %cst_42 = arith.constant 1.000000e+00 : f32
    %160 = vector.broadcast %cst_42 : f32 to vector<1x256xf32>
    %cst_43 = arith.constant 0.000000e+00 : f32
    %161 = vector.broadcast %cst_43 : f32 to vector<7x256xf32>
    %162 = tpu.concatenate %160, %161 in 0 : vector<1x256xf32>, vector<7x256xf32> -> vector<8x256xf32>
    %163 = arith.truncf %162 : vector<8x256xf32> to vector<8x256xbf16>
    %c144 = arith.constant 144 : index
    %c0_44 = arith.constant 0 : index
    %164 = vector.load %arg8[%c144, %c0_44] : memref<152x256xbf16, #tpu.memory_space<vmem>>, vector<8x256xbf16>
    tpu.vector_store %arg8[%c144, %c0_44], %163 {strides = array<i32>} : memref<152x256xbf16, #tpu.memory_space<vmem>>, vector<8x256xbf16>,
    %c0_45 = arith.constant 0 : index
    %c0_46 = arith.constant 0 : index
    %165 = vector.load %arg4[%c0_45, %c0_46] : memref<16x152xbf16, #tpu.memory_space<vmem>>, vector<16x152xbf16>
    %c0_47 = arith.constant 0 : index
    %c0_48 = arith.constant 0 : index
    %166 = vector.load %arg8[%c0_47, %c0_48] : memref<152x256xbf16, #tpu.memory_space<vmem>>, vector<152x256xbf16>
    %cst_49 = arith.constant dense<0.000000e+00> : vector<16x256xf32>
    %167 = tpu.matmul %165, %166, %cst_49 {dimension_numbers = #tpu.dot_dimension_numbers<[1], [0], [0], [1], [0, 0, 1, 1], [], []>} : vector<16x152xbf16>, vector<152x256xbf16>, vector<16x256xf32> -> vector<16x256xf32>
    %cst_50 = arith.constant 0.000000e+00 : f32
    %168 = vector.broadcast %cst_50 : f32 to vector<16x256xf32>
    %169 = arith.maximumf %167, %168 : vector<16x256xf32>
    %170 = vector.extract_strided_slice %169 {offsets = [0, 239], sizes = [16, 17], strides = [1, 1]} : vector<16x256xf32> to vector<16x17xf32>
    %171 = vector.extract_strided_slice %169 {offsets = [0, 0], sizes = [16, 239], strides = [1, 1]} : vector<16x256xf32> to vector<16x239xf32>
    %172 = tpu.concatenate %170, %171 in 1 : vector<16x17xf32>, vector<16x239xf32> -> vector<16x256xf32>
    %173 = vector.extract_strided_slice %0 {offsets = [0, 0], sizes = [1, 256], strides = [1, 1]} : vector<9x256xf32> to vector<1x256xf32>
    %174 = vector.broadcast %173 : vector<1x256xf32> to vector<16x256xf32>
    %175 = arith.mulf %172, %174 : vector<16x256xf32>
    %176 = arith.truncf %175 : vector<16x256xf32> to vector<16x256xbf16>
    %c0_51 = arith.constant 0 : index
    %c0_52 = arith.constant 0 : index
    %177 = vector.load %arg8[%c0_51, %c0_52] : memref<152x256xbf16, #tpu.memory_space<vmem>>, vector<16x256xbf16>
    tpu.vector_store %arg8[%c0_51, %c0_52], %176 {strides = array<i32>} : memref<152x256xbf16, #tpu.memory_space<vmem>>, vector<16x256xbf16>,
    %178 = vector.extract_strided_slice %169 {offsets = [0, 240], sizes = [16, 16], strides = [1, 1]} : vector<16x256xf32> to vector<16x16xf32>
    %179 = vector.extract_strided_slice %169 {offsets = [0, 0], sizes = [16, 240], strides = [1, 1]} : vector<16x256xf32> to vector<16x240xf32>
    %180 = tpu.concatenate %178, %179 in 1 : vector<16x16xf32>, vector<16x240xf32> -> vector<16x256xf32>
    %181 = vector.extract_strided_slice %0 {offsets = [1, 0], sizes = [1, 256], strides = [1, 1]} : vector<9x256xf32> to vector<1x256xf32>
    %182 = vector.broadcast %181 : vector<1x256xf32> to vector<16x256xf32>
    %183 = arith.mulf %180, %182 : vector<16x256xf32>
    %184 = arith.truncf %183 : vector<16x256xf32> to vector<16x256xbf16>
    %c16_53 = arith.constant 16 : index
    %c0_54 = arith.constant 0 : index
    %185 = vector.load %arg8[%c16_53, %c0_54] : memref<152x256xbf16, #tpu.memory_space<vmem>>, vector<16x256xbf16>
    tpu.vector_store %arg8[%c16_53, %c0_54], %184 {strides = array<i32>} : memref<152x256xbf16, #tpu.memory_space<vmem>>, vector<16x256xbf16>,
    %186 = vector.extract_strided_slice %169 {offsets = [0, 241], sizes = [16, 15], strides = [1, 1]} : vector<16x256xf32> to vector<16x15xf32>
    %187 = vector.extract_strided_slice %169 {offsets = [0, 0], sizes = [16, 241], strides = [1, 1]} : vector<16x256xf32> to vector<16x241xf32>
    %188 = tpu.concatenate %186, %187 in 1 : vector<16x15xf32>, vector<16x241xf32> -> vector<16x256xf32>
    %189 = vector.extract_strided_slice %0 {offsets = [2, 0], sizes = [1, 256], strides = [1, 1]} : vector<9x256xf32> to vector<1x256xf32>
    %190 = vector.broadcast %189 : vector<1x256xf32> to vector<16x256xf32>
    %191 = arith.mulf %188, %190 : vector<16x256xf32>
    %192 = arith.truncf %191 : vector<16x256xf32> to vector<16x256xbf16>
    %c32_55 = arith.constant 32 : index
    %c0_56 = arith.constant 0 : index
    %193 = vector.load %arg8[%c32_55, %c0_56] : memref<152x256xbf16, #tpu.memory_space<vmem>>, vector<16x256xbf16>
    tpu.vector_store %arg8[%c32_55, %c0_56], %192 {strides = array<i32>} : memref<152x256xbf16, #tpu.memory_space<vmem>>, vector<16x256xbf16>,
    %194 = vector.extract_strided_slice %169 {offsets = [0, 255], sizes = [16, 1], strides = [1, 1]} : vector<16x256xf32> to vector<16x1xf32>
    %195 = vector.extract_strided_slice %169 {offsets = [0, 0], sizes = [16, 255], strides = [1, 1]} : vector<16x256xf32> to vector<16x255xf32>
    %196 = tpu.concatenate %194, %195 in 1 : vector<16x1xf32>, vector<16x255xf32> -> vector<16x256xf32>
    %197 = vector.extract_strided_slice %0 {offsets = [3, 0], sizes = [1, 256], strides = [1, 1]} : vector<9x256xf32> to vector<1x256xf32>
    %198 = vector.broadcast %197 : vector<1x256xf32> to vector<16x256xf32>
    %199 = arith.mulf %196, %198 : vector<16x256xf32>
    %200 = arith.truncf %199 : vector<16x256xf32> to vector<16x256xbf16>
    %c48_57 = arith.constant 48 : index
    %c0_58 = arith.constant 0 : index
    %201 = vector.load %arg8[%c48_57, %c0_58] : memref<152x256xbf16, #tpu.memory_space<vmem>>, vector<16x256xbf16>
    tpu.vector_store %arg8[%c48_57, %c0_58], %200 {strides = array<i32>} : memref<152x256xbf16, #tpu.memory_space<vmem>>, vector<16x256xbf16>,
    %202 = vector.extract_strided_slice %0 {offsets = [4, 0], sizes = [1, 256], strides = [1, 1]} : vector<9x256xf32> to vector<1x256xf32>
    %203 = vector.broadcast %202 : vector<1x256xf32> to vector<16x256xf32>
    %204 = arith.mulf %169, %203 : vector<16x256xf32>
    %205 = arith.truncf %204 : vector<16x256xf32> to vector<16x256xbf16>
    %c64_59 = arith.constant 64 : index
    %c0_60 = arith.constant 0 : index
    %206 = vector.load %arg8[%c64_59, %c0_60] : memref<152x256xbf16, #tpu.memory_space<vmem>>, vector<16x256xbf16>
    tpu.vector_store %arg8[%c64_59, %c0_60], %205 {strides = array<i32>} : memref<152x256xbf16, #tpu.memory_space<vmem>>, vector<16x256xbf16>,
    %207 = vector.extract_strided_slice %169 {offsets = [0, 1], sizes = [16, 255], strides = [1, 1]} : vector<16x256xf32> to vector<16x255xf32>
    %208 = vector.extract_strided_slice %169 {offsets = [0, 0], sizes = [16, 1], strides = [1, 1]} : vector<16x256xf32> to vector<16x1xf32>
    %209 = tpu.concatenate %207, %208 in 1 : vector<16x255xf32>, vector<16x1xf32> -> vector<16x256xf32>
    %210 = vector.extract_strided_slice %0 {offsets = [5, 0], sizes = [1, 256], strides = [1, 1]} : vector<9x256xf32> to vector<1x256xf32>
    %211 = vector.broadcast %210 : vector<1x256xf32> to vector<16x256xf32>
    %212 = arith.mulf %209, %211 : vector<16x256xf32>
    %213 = arith.truncf %212 : vector<16x256xf32> to vector<16x256xbf16>
    %c80_61 = arith.constant 80 : index
    %c0_62 = arith.constant 0 : index
    %214 = vector.load %arg8[%c80_61, %c0_62] : memref<152x256xbf16, #tpu.memory_space<vmem>>, vector<16x256xbf16>
    tpu.vector_store %arg8[%c80_61, %c0_62], %213 {strides = array<i32>} : memref<152x256xbf16, #tpu.memory_space<vmem>>, vector<16x256xbf16>,
    %215 = vector.extract_strided_slice %169 {offsets = [0, 15], sizes = [16, 241], strides = [1, 1]} : vector<16x256xf32> to vector<16x241xf32>
    %216 = vector.extract_strided_slice %169 {offsets = [0, 0], sizes = [16, 15], strides = [1, 1]} : vector<16x256xf32> to vector<16x15xf32>
    %217 = tpu.concatenate %215, %216 in 1 : vector<16x241xf32>, vector<16x15xf32> -> vector<16x256xf32>
    %218 = vector.extract_strided_slice %0 {offsets = [6, 0], sizes = [1, 256], strides = [1, 1]} : vector<9x256xf32> to vector<1x256xf32>
    %219 = vector.broadcast %218 : vector<1x256xf32> to vector<16x256xf32>
    %220 = arith.mulf %217, %219 : vector<16x256xf32>
    %221 = arith.truncf %220 : vector<16x256xf32> to vector<16x256xbf16>
    %c96_63 = arith.constant 96 : index
    %c0_64 = arith.constant 0 : index
    %222 = vector.load %arg8[%c96_63, %c0_64] : memref<152x256xbf16, #tpu.memory_space<vmem>>, vector<16x256xbf16>
    tpu.vector_store %arg8[%c96_63, %c0_64], %221 {strides = array<i32>} : memref<152x256xbf16, #tpu.memory_space<vmem>>, vector<16x256xbf16>,
    %223 = vector.extract_strided_slice %169 {offsets = [0, 16], sizes = [16, 240], strides = [1, 1]} : vector<16x256xf32> to vector<16x240xf32>
    %224 = vector.extract_strided_slice %169 {offsets = [0, 0], sizes = [16, 16], strides = [1, 1]} : vector<16x256xf32> to vector<16x16xf32>
    %225 = tpu.concatenate %223, %224 in 1 : vector<16x240xf32>, vector<16x16xf32> -> vector<16x256xf32>
    %226 = vector.extract_strided_slice %0 {offsets = [7, 0], sizes = [1, 256], strides = [1, 1]} : vector<9x256xf32> to vector<1x256xf32>
    %227 = vector.broadcast %226 : vector<1x256xf32> to vector<16x256xf32>
    %228 = arith.mulf %225, %227 : vector<16x256xf32>
    %229 = arith.truncf %228 : vector<16x256xf32> to vector<16x256xbf16>
    %c112_65 = arith.constant 112 : index
    %c0_66 = arith.constant 0 : index
    %230 = vector.load %arg8[%c112_65, %c0_66] : memref<152x256xbf16, #tpu.memory_space<vmem>>, vector<16x256xbf16>
    tpu.vector_store %arg8[%c112_65, %c0_66], %229 {strides = array<i32>} : memref<152x256xbf16, #tpu.memory_space<vmem>>, vector<16x256xbf16>,
    %231 = vector.extract_strided_slice %169 {offsets = [0, 17], sizes = [16, 239], strides = [1, 1]} : vector<16x256xf32> to vector<16x239xf32>
    %232 = vector.extract_strided_slice %169 {offsets = [0, 0], sizes = [16, 17], strides = [1, 1]} : vector<16x256xf32> to vector<16x17xf32>
    %233 = tpu.concatenate %231, %232 in 1 : vector<16x239xf32>, vector<16x17xf32> -> vector<16x256xf32>
    %234 = vector.extract_strided_slice %0 {offsets = [8, 0], sizes = [1, 256], strides = [1, 1]} : vector<9x256xf32> to vector<1x256xf32>
    %235 = vector.broadcast %234 : vector<1x256xf32> to vector<16x256xf32>
    %236 = arith.mulf %233, %235 : vector<16x256xf32>
    %237 = arith.truncf %236 : vector<16x256xf32> to vector<16x256xbf16>
    %c128_67 = arith.constant 128 : index
    %c0_68 = arith.constant 0 : index
    %238 = vector.load %arg8[%c128_67, %c0_68] : memref<152x256xbf16, #tpu.memory_space<vmem>>, vector<16x256xbf16>
    tpu.vector_store %arg8[%c128_67, %c0_68], %237 {strides = array<i32>} : memref<152x256xbf16, #tpu.memory_space<vmem>>, vector<16x256xbf16>,
    %cst_69 = arith.constant 1.000000e+00 : f32
    %239 = vector.broadcast %cst_69 : f32 to vector<1x256xf32>
    %cst_70 = arith.constant 0.000000e+00 : f32
    %240 = vector.broadcast %cst_70 : f32 to vector<7x256xf32>
    %241 = tpu.concatenate %239, %240 in 0 : vector<1x256xf32>, vector<7x256xf32> -> vector<8x256xf32>
    %242 = arith.truncf %241 : vector<8x256xf32> to vector<8x256xbf16>
    %c144_71 = arith.constant 144 : index
    %c0_72 = arith.constant 0 : index
    %243 = vector.load %arg8[%c144_71, %c0_72] : memref<152x256xbf16, #tpu.memory_space<vmem>>, vector<8x256xbf16>
    tpu.vector_store %arg8[%c144_71, %c0_72], %242 {strides = array<i32>} : memref<152x256xbf16, #tpu.memory_space<vmem>>, vector<8x256xbf16>,
    %c0_73 = arith.constant 0 : index
    %c0_74 = arith.constant 0 : index
    %244 = vector.load %arg5[%c0_73, %c0_74] : memref<3x152xbf16, #tpu.memory_space<vmem>>, vector<3x152xbf16>
    %c0_75 = arith.constant 0 : index
    %c0_76 = arith.constant 0 : index
    %245 = vector.load %arg8[%c0_75, %c0_76] : memref<152x256xbf16, #tpu.memory_space<vmem>>, vector<152x256xbf16>
    %cst_77 = arith.constant dense<0.000000e+00> : vector<3x256xf32>
    %246 = tpu.matmul %244, %245, %cst_77 {dimension_numbers = #tpu.dot_dimension_numbers<[1], [0], [0], [1], [0, 0, 1, 1], [], []>} : vector<3x152xbf16>, vector<152x256xbf16>, vector<3x256xf32> -> vector<3x256xf32>
    %247 = arith.subf %6, %246 : vector<3x256xf32>
    %c0_78 = arith.constant 0 : index
    %c0_79 = arith.constant 0 : index
    %c0_80 = arith.constant 0 : index
    %248 = vector.load %arg7[%c0_78, %c0_79, %c0_80] : memref<1x3x256xf32, #tpu.memory_space<vmem>>, vector<1x3x256xf32>
    %249 = vector.shape_cast %248 : vector<1x3x256xf32> to vector<3x256xf32>
    %250 = vector.shape_cast %247 : vector<3x256xf32> to vector<1x3x256xf32>
    tpu.vector_store %arg7[%c0_78, %c0_79, %c0_80], %250 {strides = array<i32>} : memref<1x3x256xf32, #tpu.memory_space<vmem>>, vector<1x3x256xf32>,
    return
  }
  func.func @transform_0(%arg0: i32) -> (i32, i32, i32) {
    %c0_i32 = arith.constant 0 : i32
    %c0_i32_0 = arith.constant 0 : i32
    %c0_i32_1 = arith.constant 0 : i32
    return %arg0, %c0_i32, %c0_i32_0 : i32, i32, i32
  }
  func.func @transform_1(%arg0: i32) -> (i32, i32) {
    %c0_i32 = arith.constant 0 : i32
    %c0_i32_0 = arith.constant 0 : i32
    %c0_i32_1 = arith.constant 0 : i32
    return %c0_i32, %c0_i32_0 : i32, i32
  }
  func.func @transform_2(%arg0: i32) -> (i32, i32) {
    %c0_i32 = arith.constant 0 : i32
    %c0_i32_0 = arith.constant 0 : i32
    %c0_i32_1 = arith.constant 0 : i32
    return %c0_i32, %c0_i32_0 : i32, i32
  }
  func.func @transform_3(%arg0: i32) -> (i32, i32) {
    %c0_i32 = arith.constant 0 : i32
    %c0_i32_0 = arith.constant 0 : i32
    %c0_i32_1 = arith.constant 0 : i32
    return %c0_i32, %c0_i32_0 : i32, i32
  }
  func.func @transform_4(%arg0: i32) -> (i32, i32) {
    %c0_i32 = arith.constant 0 : i32
    %c0_i32_0 = arith.constant 0 : i32
    %c0_i32_1 = arith.constant 0 : i32
    return %c0_i32, %c0_i32_0 : i32, i32
  }
  func.func @transform_5(%arg0: i32) -> (i32, i32, i32) {
    %c0_i32 = arith.constant 0 : i32
    %c0_i32_0 = arith.constant 0 : i32
    %c0_i32_1 = arith.constant 0 : i32
    return %arg0, %c0_i32, %c0_i32_0 : i32, i32, i32
  }
  func.func @transform_6(%arg0: i32) -> (i32, i32, i32) {
    %c0_i32 = arith.constant 0 : i32
    %c0_i32_0 = arith.constant 0 : i32
    %c0_i32_1 = arith.constant 0 : i32
    return %arg0, %c0_i32, %c0_i32_0 : i32, i32, i32
  }
}

module attributes {stable_mosaic.version = 11 : i64} {
  func.func @kernel(%arg0: i32, %arg1: memref<1x3x256xf32, #tpu.memory_space<vmem>>, %arg2: memref<9x256xf32, #tpu.memory_space<vmem>>, %arg3: memref<16x80xbf16, #tpu.memory_space<vmem>>, %arg4: memref<1x16x256xf32, #tpu.memory_space<vmem>>, %arg5: memref<80x256xbf16, #tpu.memory_space<vmem>>) attributes {dimension_semantics = [#tpu.dimension_semantics<parallel>], iteration_bounds = array<i64: 4>, scalar_prefetch = 0 : i64, scratch_operands = 1 : i64, tpu.core_type = #tpu.core_type<tc>, window_params = [{transform_indices = @transform_0, window_bounds = array<i64: 1, 3, 256>}, {pipeline_mode = #tpu.pipeline_mode<synchronous>, transform_indices = @transform_1, window_bounds = array<i64: 9, 256>}, {pipeline_mode = #tpu.pipeline_mode<synchronous>, transform_indices = @transform_2, window_bounds = array<i64: 16, 80>}, {transform_indices = @transform_3, window_bounds = array<i64: 1, 16, 256>}]} {
    %c0 = arith.constant 0 : index
    %c0_0 = arith.constant 0 : index
    %0 = vector.load %arg2[%c0, %c0_0] : memref<9x256xf32, #tpu.memory_space<vmem>>, vector<9x256xf32>
    %c0_1 = arith.constant 0 : index
    %c0_2 = arith.constant 0 : index
    %c0_3 = arith.constant 0 : index
    %1 = vector.load %arg1[%c0_1, %c0_2, %c0_3] : memref<1x3x256xf32, #tpu.memory_space<vmem>>, vector<1x3x256xf32>
    %2 = vector.shape_cast %1 : vector<1x3x256xf32> to vector<3x256xf32>
    %cst = arith.constant 0.000000e+00 : f32
    %3 = vector.broadcast %cst : f32 to vector<5x256xf32>
    %4 = tpu.concatenate %2, %3 in 0 : vector<3x256xf32>, vector<5x256xf32> -> vector<8x256xf32>
    %5 = vector.extract_strided_slice %4 {offsets = [0, 239], sizes = [8, 17], strides = [1, 1]} : vector<8x256xf32> to vector<8x17xf32>
    %6 = vector.extract_strided_slice %4 {offsets = [0, 0], sizes = [8, 239], strides = [1, 1]} : vector<8x256xf32> to vector<8x239xf32>
    %7 = tpu.concatenate %5, %6 in 1 : vector<8x17xf32>, vector<8x239xf32> -> vector<8x256xf32>
    %8 = vector.extract_strided_slice %0 {offsets = [0, 0], sizes = [1, 256], strides = [1, 1]} : vector<9x256xf32> to vector<1x256xf32>
    %9 = vector.broadcast %8 : vector<1x256xf32> to vector<8x256xf32>
    %10 = arith.mulf %7, %9 : vector<8x256xf32>
    %11 = arith.truncf %10 : vector<8x256xf32> to vector<8x256xbf16>
    %c0_4 = arith.constant 0 : index
    %c0_5 = arith.constant 0 : index
    %12 = vector.load %arg5[%c0_4, %c0_5] : memref<80x256xbf16, #tpu.memory_space<vmem>>, vector<8x256xbf16>
    tpu.vector_store %arg5[%c0_4, %c0_5], %11 {strides = array<i32>} : memref<80x256xbf16, #tpu.memory_space<vmem>>, vector<8x256xbf16>,
    %13 = vector.extract_strided_slice %4 {offsets = [0, 240], sizes = [8, 16], strides = [1, 1]} : vector<8x256xf32> to vector<8x16xf32>
    %14 = vector.extract_strided_slice %4 {offsets = [0, 0], sizes = [8, 240], strides = [1, 1]} : vector<8x256xf32> to vector<8x240xf32>
    %15 = tpu.concatenate %13, %14 in 1 : vector<8x16xf32>, vector<8x240xf32> -> vector<8x256xf32>
    %16 = vector.extract_strided_slice %0 {offsets = [1, 0], sizes = [1, 256], strides = [1, 1]} : vector<9x256xf32> to vector<1x256xf32>
    %17 = vector.broadcast %16 : vector<1x256xf32> to vector<8x256xf32>
    %18 = arith.mulf %15, %17 : vector<8x256xf32>
    %19 = arith.truncf %18 : vector<8x256xf32> to vector<8x256xbf16>
    %c8 = arith.constant 8 : index
    %c0_6 = arith.constant 0 : index
    %20 = vector.load %arg5[%c8, %c0_6] : memref<80x256xbf16, #tpu.memory_space<vmem>>, vector<8x256xbf16>
    tpu.vector_store %arg5[%c8, %c0_6], %19 {strides = array<i32>} : memref<80x256xbf16, #tpu.memory_space<vmem>>, vector<8x256xbf16>,
    %21 = vector.extract_strided_slice %4 {offsets = [0, 241], sizes = [8, 15], strides = [1, 1]} : vector<8x256xf32> to vector<8x15xf32>
    %22 = vector.extract_strided_slice %4 {offsets = [0, 0], sizes = [8, 241], strides = [1, 1]} : vector<8x256xf32> to vector<8x241xf32>
    %23 = tpu.concatenate %21, %22 in 1 : vector<8x15xf32>, vector<8x241xf32> -> vector<8x256xf32>
    %24 = vector.extract_strided_slice %0 {offsets = [2, 0], sizes = [1, 256], strides = [1, 1]} : vector<9x256xf32> to vector<1x256xf32>
    %25 = vector.broadcast %24 : vector<1x256xf32> to vector<8x256xf32>
    %26 = arith.mulf %23, %25 : vector<8x256xf32>
    %27 = arith.truncf %26 : vector<8x256xf32> to vector<8x256xbf16>
    %c16 = arith.constant 16 : index
    %c0_7 = arith.constant 0 : index
    %28 = vector.load %arg5[%c16, %c0_7] : memref<80x256xbf16, #tpu.memory_space<vmem>>, vector<8x256xbf16>
    tpu.vector_store %arg5[%c16, %c0_7], %27 {strides = array<i32>} : memref<80x256xbf16, #tpu.memory_space<vmem>>, vector<8x256xbf16>,
    %29 = vector.extract_strided_slice %4 {offsets = [0, 255], sizes = [8, 1], strides = [1, 1]} : vector<8x256xf32> to vector<8x1xf32>
    %30 = vector.extract_strided_slice %4 {offsets = [0, 0], sizes = [8, 255], strides = [1, 1]} : vector<8x256xf32> to vector<8x255xf32>
    %31 = tpu.concatenate %29, %30 in 1 : vector<8x1xf32>, vector<8x255xf32> -> vector<8x256xf32>
    %32 = vector.extract_strided_slice %0 {offsets = [3, 0], sizes = [1, 256], strides = [1, 1]} : vector<9x256xf32> to vector<1x256xf32>
    %33 = vector.broadcast %32 : vector<1x256xf32> to vector<8x256xf32>
    %34 = arith.mulf %31, %33 : vector<8x256xf32>
    %35 = arith.truncf %34 : vector<8x256xf32> to vector<8x256xbf16>
    %c24 = arith.constant 24 : index
    %c0_8 = arith.constant 0 : index
    %36 = vector.load %arg5[%c24, %c0_8] : memref<80x256xbf16, #tpu.memory_space<vmem>>, vector<8x256xbf16>
    tpu.vector_store %arg5[%c24, %c0_8], %35 {strides = array<i32>} : memref<80x256xbf16, #tpu.memory_space<vmem>>, vector<8x256xbf16>,
    %37 = vector.extract_strided_slice %0 {offsets = [4, 0], sizes = [1, 256], strides = [1, 1]} : vector<9x256xf32> to vector<1x256xf32>
    %38 = vector.broadcast %37 : vector<1x256xf32> to vector<8x256xf32>
    %39 = arith.mulf %4, %38 : vector<8x256xf32>
    %40 = arith.truncf %39 : vector<8x256xf32> to vector<8x256xbf16>
    %c32 = arith.constant 32 : index
    %c0_9 = arith.constant 0 : index
    %41 = vector.load %arg5[%c32, %c0_9] : memref<80x256xbf16, #tpu.memory_space<vmem>>, vector<8x256xbf16>
    tpu.vector_store %arg5[%c32, %c0_9], %40 {strides = array<i32>} : memref<80x256xbf16, #tpu.memory_space<vmem>>, vector<8x256xbf16>,
    %42 = vector.extract_strided_slice %4 {offsets = [0, 1], sizes = [8, 255], strides = [1, 1]} : vector<8x256xf32> to vector<8x255xf32>
    %43 = vector.extract_strided_slice %4 {offsets = [0, 0], sizes = [8, 1], strides = [1, 1]} : vector<8x256xf32> to vector<8x1xf32>
    %44 = tpu.concatenate %42, %43 in 1 : vector<8x255xf32>, vector<8x1xf32> -> vector<8x256xf32>
    %45 = vector.extract_strided_slice %0 {offsets = [5, 0], sizes = [1, 256], strides = [1, 1]} : vector<9x256xf32> to vector<1x256xf32>
    %46 = vector.broadcast %45 : vector<1x256xf32> to vector<8x256xf32>
    %47 = arith.mulf %44, %46 : vector<8x256xf32>
    %48 = arith.truncf %47 : vector<8x256xf32> to vector<8x256xbf16>
    %c40 = arith.constant 40 : index
    %c0_10 = arith.constant 0 : index
    %49 = vector.load %arg5[%c40, %c0_10] : memref<80x256xbf16, #tpu.memory_space<vmem>>, vector<8x256xbf16>
    tpu.vector_store %arg5[%c40, %c0_10], %48 {strides = array<i32>} : memref<80x256xbf16, #tpu.memory_space<vmem>>, vector<8x256xbf16>,
    %50 = vector.extract_strided_slice %4 {offsets = [0, 15], sizes = [8, 241], strides = [1, 1]} : vector<8x256xf32> to vector<8x241xf32>
    %51 = vector.extract_strided_slice %4 {offsets = [0, 0], sizes = [8, 15], strides = [1, 1]} : vector<8x256xf32> to vector<8x15xf32>
    %52 = tpu.concatenate %50, %51 in 1 : vector<8x241xf32>, vector<8x15xf32> -> vector<8x256xf32>
    %53 = vector.extract_strided_slice %0 {offsets = [6, 0], sizes = [1, 256], strides = [1, 1]} : vector<9x256xf32> to vector<1x256xf32>
    %54 = vector.broadcast %53 : vector<1x256xf32> to vector<8x256xf32>
    %55 = arith.mulf %52, %54 : vector<8x256xf32>
    %56 = arith.truncf %55 : vector<8x256xf32> to vector<8x256xbf16>
    %c48 = arith.constant 48 : index
    %c0_11 = arith.constant 0 : index
    %57 = vector.load %arg5[%c48, %c0_11] : memref<80x256xbf16, #tpu.memory_space<vmem>>, vector<8x256xbf16>
    tpu.vector_store %arg5[%c48, %c0_11], %56 {strides = array<i32>} : memref<80x256xbf16, #tpu.memory_space<vmem>>, vector<8x256xbf16>,
    %58 = vector.extract_strided_slice %4 {offsets = [0, 16], sizes = [8, 240], strides = [1, 1]} : vector<8x256xf32> to vector<8x240xf32>
    %59 = vector.extract_strided_slice %4 {offsets = [0, 0], sizes = [8, 16], strides = [1, 1]} : vector<8x256xf32> to vector<8x16xf32>
    %60 = tpu.concatenate %58, %59 in 1 : vector<8x240xf32>, vector<8x16xf32> -> vector<8x256xf32>
    %61 = vector.extract_strided_slice %0 {offsets = [7, 0], sizes = [1, 256], strides = [1, 1]} : vector<9x256xf32> to vector<1x256xf32>
    %62 = vector.broadcast %61 : vector<1x256xf32> to vector<8x256xf32>
    %63 = arith.mulf %60, %62 : vector<8x256xf32>
    %64 = arith.truncf %63 : vector<8x256xf32> to vector<8x256xbf16>
    %c56 = arith.constant 56 : index
    %c0_12 = arith.constant 0 : index
    %65 = vector.load %arg5[%c56, %c0_12] : memref<80x256xbf16, #tpu.memory_space<vmem>>, vector<8x256xbf16>
    tpu.vector_store %arg5[%c56, %c0_12], %64 {strides = array<i32>} : memref<80x256xbf16, #tpu.memory_space<vmem>>, vector<8x256xbf16>,
    %66 = vector.extract_strided_slice %4 {offsets = [0, 17], sizes = [8, 239], strides = [1, 1]} : vector<8x256xf32> to vector<8x239xf32>
    %67 = vector.extract_strided_slice %4 {offsets = [0, 0], sizes = [8, 17], strides = [1, 1]} : vector<8x256xf32> to vector<8x17xf32>
    %68 = tpu.concatenate %66, %67 in 1 : vector<8x239xf32>, vector<8x17xf32> -> vector<8x256xf32>
    %69 = vector.extract_strided_slice %0 {offsets = [8, 0], sizes = [1, 256], strides = [1, 1]} : vector<9x256xf32> to vector<1x256xf32>
    %70 = vector.broadcast %69 : vector<1x256xf32> to vector<8x256xf32>
    %71 = arith.mulf %68, %70 : vector<8x256xf32>
    %72 = arith.truncf %71 : vector<8x256xf32> to vector<8x256xbf16>
    %c64 = arith.constant 64 : index
    %c0_13 = arith.constant 0 : index
    %73 = vector.load %arg5[%c64, %c0_13] : memref<80x256xbf16, #tpu.memory_space<vmem>>, vector<8x256xbf16>
    tpu.vector_store %arg5[%c64, %c0_13], %72 {strides = array<i32>} : memref<80x256xbf16, #tpu.memory_space<vmem>>, vector<8x256xbf16>,
    %cst_14 = arith.constant 1.000000e+00 : f32
    %74 = vector.broadcast %cst_14 : f32 to vector<1x256xf32>
    %cst_15 = arith.constant 0.000000e+00 : f32
    %75 = vector.broadcast %cst_15 : f32 to vector<7x256xf32>
    %76 = tpu.concatenate %74, %75 in 0 : vector<1x256xf32>, vector<7x256xf32> -> vector<8x256xf32>
    %77 = arith.truncf %76 : vector<8x256xf32> to vector<8x256xbf16>
    %c72 = arith.constant 72 : index
    %c0_16 = arith.constant 0 : index
    %78 = vector.load %arg5[%c72, %c0_16] : memref<80x256xbf16, #tpu.memory_space<vmem>>, vector<8x256xbf16>
    tpu.vector_store %arg5[%c72, %c0_16], %77 {strides = array<i32>} : memref<80x256xbf16, #tpu.memory_space<vmem>>, vector<8x256xbf16>,
    %c0_17 = arith.constant 0 : index
    %c0_18 = arith.constant 0 : index
    %79 = vector.load %arg3[%c0_17, %c0_18] : memref<16x80xbf16, #tpu.memory_space<vmem>>, vector<16x80xbf16>
    %c0_19 = arith.constant 0 : index
    %c0_20 = arith.constant 0 : index
    %80 = vector.load %arg5[%c0_19, %c0_20] : memref<80x256xbf16, #tpu.memory_space<vmem>>, vector<80x256xbf16>
    %cst_21 = arith.constant dense<0.000000e+00> : vector<16x256xf32>
    %81 = tpu.matmul %79, %80, %cst_21 {dimension_numbers = #tpu.dot_dimension_numbers<[1], [0], [0], [1], [0, 0, 1, 1], [], []>} : vector<16x80xbf16>, vector<80x256xbf16>, vector<16x256xf32> -> vector<16x256xf32>
    %cst_22 = arith.constant 0.000000e+00 : f32
    %82 = vector.broadcast %cst_22 : f32 to vector<16x256xf32>
    %83 = arith.maximumf %81, %82 : vector<16x256xf32>
    %c0_23 = arith.constant 0 : index
    %c0_24 = arith.constant 0 : index
    %c0_25 = arith.constant 0 : index
    %84 = vector.load %arg4[%c0_23, %c0_24, %c0_25] : memref<1x16x256xf32, #tpu.memory_space<vmem>>, vector<1x16x256xf32>
    %85 = vector.shape_cast %84 : vector<1x16x256xf32> to vector<16x256xf32>
    %86 = vector.shape_cast %83 : vector<16x256xf32> to vector<1x16x256xf32>
    tpu.vector_store %arg4[%c0_23, %c0_24, %c0_25], %86 {strides = array<i32>} : memref<1x16x256xf32, #tpu.memory_space<vmem>>, vector<1x16x256xf32>,
    return
  }
  func.func @transform_0(%arg0: i32) -> (i32, i32, i32) {
    %c0_i32 = arith.constant 0 : i32
    %c0_i32_0 = arith.constant 0 : i32
    %c0_i32_1 = arith.constant 0 : i32
    return %arg0, %c0_i32, %c0_i32_0 : i32, i32, i32
  }
  func.func @transform_1(%arg0: i32) -> (i32, i32) {
    %c0_i32 = arith.constant 0 : i32
    %c0_i32_0 = arith.constant 0 : i32
    %c0_i32_1 = arith.constant 0 : i32
    return %c0_i32, %c0_i32_0 : i32, i32
  }
  func.func @transform_2(%arg0: i32) -> (i32, i32) {
    %c0_i32 = arith.constant 0 : i32
    %c0_i32_0 = arith.constant 0 : i32
    %c0_i32_1 = arith.constant 0 : i32
    return %c0_i32, %c0_i32_0 : i32, i32
  }
  func.func @transform_3(%arg0: i32) -> (i32, i32, i32) {
    %c0_i32 = arith.constant 0 : i32
    %c0_i32_0 = arith.constant 0 : i32
    %c0_i32_1 = arith.constant 0 : i32
    return %arg0, %c0_i32, %c0_i32_0 : i32, i32, i32
  }
}

module attributes {stable_mosaic.version = 11 : i64} {
  func.func @_unnorm_add_noise_kernel(%arg0: memref<2x3x256xf32, #tpu.memory_space<vmem>>, %arg1: memref<2x3x256xf32, #tpu.memory_space<vmem>>, %arg2: memref<2x3x256xf32, #tpu.memory_space<vmem>>, %arg3: memref<2x3x256xf32, #tpu.memory_space<vmem>>) attributes {dimension_semantics = [], scalar_prefetch = 0 : i64, scratch_operands = 0 : i64, tpu.core_type = #tpu.core_type<tc>} {
    %c0 = arith.constant 0 : index
    %c0_0 = arith.constant 0 : index
    %c0_1 = arith.constant 0 : index
    %0 = vector.load %arg0[%c0, %c0_0, %c0_1] : memref<2x3x256xf32, #tpu.memory_space<vmem>>, vector<2x3x256xf32>
    %cst = arith.constant 5.000000e-01 : f32
    %1 = vector.broadcast %cst : f32 to vector<2x3x256xf32>
    %2 = arith.mulf %0, %1 : vector<2x3x256xf32>
    %cst_2 = arith.constant 5.000000e-01 : f32
    %3 = vector.broadcast %cst_2 : f32 to vector<2x3x256xf32>
    %4 = arith.addf %2, %3 : vector<2x3x256xf32>
    %c0_3 = arith.constant 0 : index
    %c0_4 = arith.constant 0 : index
    %c0_5 = arith.constant 0 : index
    %5 = vector.load %arg2[%c0_3, %c0_4, %c0_5] : memref<2x3x256xf32, #tpu.memory_space<vmem>>, vector<2x3x256xf32>
    tpu.vector_store %arg2[%c0_3, %c0_4, %c0_5], %4 {strides = array<i32>} : memref<2x3x256xf32, #tpu.memory_space<vmem>>, vector<2x3x256xf32>,
    %c0_6 = arith.constant 0 : index
    %c0_7 = arith.constant 0 : index
    %c0_8 = arith.constant 0 : index
    %6 = vector.load %arg1[%c0_6, %c0_7, %c0_8] : memref<2x3x256xf32, #tpu.memory_space<vmem>>, vector<2x3x256xf32>
    %7 = arith.addf %4, %6 : vector<2x3x256xf32>
    %cst_9 = arith.constant 0.000000e+00 : f32
    %cst_10 = arith.constant 1.000000e+00 : f32
    %8 = vector.broadcast %cst_9 : f32 to vector<2x3x256xf32>
    %9 = arith.maximumf %8, %7 : vector<2x3x256xf32>
    %10 = vector.broadcast %cst_10 : f32 to vector<2x3x256xf32>
    %11 = arith.minimumf %10, %9 : vector<2x3x256xf32>
    %c0_11 = arith.constant 0 : index
    %c0_12 = arith.constant 0 : index
    %c0_13 = arith.constant 0 : index
    %12 = vector.load %arg3[%c0_11, %c0_12, %c0_13] : memref<2x3x256xf32, #tpu.memory_space<vmem>>, vector<2x3x256xf32>
    tpu.vector_store %arg3[%c0_11, %c0_12, %c0_13], %11 {strides = array<i32>} : memref<2x3x256xf32, #tpu.memory_space<vmem>>, vector<2x3x256xf32>,
    return
  }
}

</mosaic_0001>

<llo_original>
// kernel: derain_cyclegan_forward.4
$region0: #{derain_cyclegan_forward.4}
  #allocation0 [shape = 'u32[]', space=smem, size = 0x4, offset = 0x4, fixed_abs, tag = 'smem constant byte address 0x4 - core index']
  #allocation1 [shape = 'u32[144,128]{1,0:T(1,128)}', space=vmem, size = 0x12000, scoped, tag = 'internal scratch']
  %s0 = inlined_call_operand.vmem [shape: f32[2,3,256], index: 0, kind: input, shape index: {}]
  %s1 = inlined_call_operand.vmem [shape: f32[2,3,256], index: 1, kind: input, shape index: {}]
  %s2 = inlined_call_operand.vmem [shape: f32[2,3,256], index: 2, kind: output, shape index: {}]
  %s3 = sld [smem:[#allocation0]]
  $region18: #{derain_cyclegan_forward.4} parent=0
    _
  %s5 = ssub.s32 1, %s3
  %s6 = scalar_select 0, %s5, %s3
  // Predicated region
  $region2: #{derain_cyclegan_forward.4} parent=0 // pred_check
    _
  $region3: #{derain_cyclegan_forward.4} parent=0 // pred_check_branch
    %8 = sbr.rel (0) target = $region5
  $region4: #{derain_cyclegan_forward.4} parent=0 // pred_region
    _
  $region5: #{derain_cyclegan_forward.4} parent=0 // pred_fallthru
    _
  // Predicated region
  $region6: #{derain_cyclegan_forward.4} parent=0 // pred_check
    _
  $region7: #{derain_cyclegan_forward.4} parent=0 // pred_check_branch
    %10 = sbr.rel (0) target = $region9
  $region8: #{derain_cyclegan_forward.4} parent=0 // pred_region
    _
  $region9: #{derain_cyclegan_forward.4} parent=0 // pred_fallthru
    _
  %v11 = vld [vmem:[%s0] sm:$0x77]
  %v12 = vld [vmem:[%s0 + $0x8] sm:$0x77]
  %v13 = vld [vmem:[%s1] sm:$0x77]
  %v14 = vld [vmem:[%s1 + $0x8] sm:$0x77]
  %v15 = vadd.f32 %v11, %v13
  %v16 = vadd.f32 %v12, %v14
  %v17 = vmax.f32 %v15, 0.0
  %v18 = vmax.f32 %v16, 0.0
  %v19 = vmin.f32 %v17, 1.0
  %v20 = vmin.f32 %v18, 1.0
  %21 = vst [vmem:[%s2] sm:$0x77] %v19
  %22 = vst [vmem:[%s2 + $0x8] sm:$0x77] %v20
  // Predicated region
  $region10: #{derain_cyclegan_forward.4} parent=0 // pred_check
    _
  $region11: #{derain_cyclegan_forward.4} parent=0 // pred_check_branch
    %24 = sbr.rel (0) target = $region13
  $region12: #{derain_cyclegan_forward.4} parent=0 // pred_region
    _
  $region13: #{derain_cyclegan_forward.4} parent=0 // pred_fallthru
    _
  // Predicated region
  $region14: #{derain_cyclegan_forward.4} parent=0 // pred_check
    _
  $region15: #{derain_cyclegan_forward.4} parent=0 // pred_check_branch
    %26 = sbr.rel (0) target = $region17
  $region16: #{derain_cyclegan_forward.4} parent=0 // pred_region
    _
  $region17: #{derain_cyclegan_forward.4} parent=0 // pred_fallthru
    _

// kernel: derain_cyclegan_forward.6
$region0: #{derain_cyclegan_forward.6}
  #allocation0 [shape = 'u32[]', space=smem, size = 0x4, offset = 0x4, fixed_abs, tag = 'smem constant byte address 0x4 - core index']
  #allocation1 [shape = 'u32[144,128]{1,0:T(1,128)}', space=vmem, size = 0x12000, scoped, tag = 'internal scratch']
  %s0 = inlined_call_operand.vmem [shape: f32[2,3,256], index: 0, kind: input, shape index: {}]
  %s1 = inlined_call_operand.vmem [shape: f32[2,3,256], index: 1, kind: input, shape index: {}]
  %s2 = inlined_call_operand.vmem [shape: f32[2,3,256], index: 2, kind: output, shape index: {0}]
  %s3 = inlined_call_operand.vmem [shape: f32[2,3,256], index: 3, kind: output, shape index: {1}]
  %4 = xla_tuple %s2, %s3
  %s5 = sld [smem:[#allocation0]]
  $region26: #{derain_cyclegan_forward.6} parent=0
    _
  %s7 = ssub.s32 1, %s5
  %s8 = scalar_select 0, %s7, %s5
  // Predicated region
  $region2: #{derain_cyclegan_forward.6} parent=0 // pred_check
    _
  $region3: #{derain_cyclegan_forward.6} parent=0 // pred_check_branch
    %10 = sbr.rel (0) target = $region5
  $region4: #{derain_cyclegan_forward.6} parent=0 // pred_region
    _
  $region5: #{derain_cyclegan_forward.6} parent=0 // pred_fallthru
    _
  // Predicated region
  $region6: #{derain_cyclegan_forward.6} parent=0 // pred_check
    _
  $region7: #{derain_cyclegan_forward.6} parent=0 // pred_check_branch
    %12 = sbr.rel (0) target = $region9
  $region8: #{derain_cyclegan_forward.6} parent=0 // pred_region
    _
  $region9: #{derain_cyclegan_forward.6} parent=0 // pred_fallthru
    _
  %v13 = vld [vmem:[%s0] sm:$0x77]
  %v14 = vld [vmem:[%s0 + $0x8] sm:$0x77]
  %v15 = vmul.f32 %v13, 0.5
  %v16 = vmul.f32 %v14, 0.5
  %v17 = vadd.f32 %v15, 0.5
  %v18 = vadd.f32 %v16, 0.5
  %19 = vst [vmem:[%s2] sm:$0x77] %v17
  %20 = vst [vmem:[%s2 + $0x8] sm:$0x77] %v18
  %v21 = vld [vmem:[%s1] sm:$0x77]
  %v22 = vld [vmem:[%s1 + $0x8] sm:$0x77]
  %v23 = vadd.f32 %v17, %v21
  %v24 = vadd.f32 %v18, %v22
  %v25 = vmax.f32 %v23, 0.0
  %v26 = vmax.f32 %v24, 0.0
  %v27 = vmin.f32 %v25, 1.0
  %v28 = vmin.f32 %v26, 1.0
  %29 = vst [vmem:[%s3] sm:$0x77] %v27
  %30 = vst [vmem:[%s3 + $0x8] sm:$0x77] %v28
  // Predicated region
  $region10: #{derain_cyclegan_forward.6} parent=0 // pred_check
    _
  $region11: #{derain_cyclegan_forward.6} parent=0 // pred_check_branch
    %32 = sbr.rel (0) target = $region13
  $region12: #{derain_cyclegan_forward.6} parent=0 // pred_region
    _
  $region13: #{derain_cyclegan_forward.6} parent=0 // pred_fallthru
    _
  // Predicated region
  $region14: #{derain_cyclegan_forward.6} parent=0 // pred_check
    _
  $region15: #{derain_cyclegan_forward.6} parent=0 // pred_check_branch
    %34 = sbr.rel (0) target = $region17
  $region16: #{derain_cyclegan_forward.6} parent=0 // pred_region
    _
  $region17: #{derain_cyclegan_forward.6} parent=0 // pred_fallthru
    _
  // Predicated region
  $region18: #{derain_cyclegan_forward.6} parent=0 // pred_check
    _
  $region19: #{derain_cyclegan_forward.6} parent=0 // pred_check_branch
    %36 = sbr.rel (0) target = $region21
  $region20: #{derain_cyclegan_forward.6} parent=0 // pred_region
    _
  $region21: #{derain_cyclegan_forward.6} parent=0 // pred_fallthru
    _
  // Predicated region
  $region22: #{derain_cyclegan_forward.6} parent=0 // pred_check
    _
  $region23: #{derain_cyclegan_forward.6} parent=0 // pred_check_branch
    %38 = sbr.rel (0) target = $region25
  $region24: #{derain_cyclegan_forward.6} parent=0 // pred_region
    _
  $region25: #{derain_cyclegan_forward.6} parent=0 // pred_fallthru
    _

// kernel: derain_cyclegan_forward.7
$region0: #{derain_cyclegan_forward.7}
  #allocation0 [shape = 'u32[]', space=smem, size = 0x4, offset = 0x4, fixed_abs, tag = 'smem constant byte address 0x4 - core index']
  #allocation1 [shape = 'u32[144,128]{1,0:T(1,128)}', space=vmem, size = 0x12000, scoped, tag = 'internal scratch']
  #allocation2 [shape = 'bf16[80,256]{1,0:T(8,128)(2,1)}', space=vmem, size = 0xa000, scoped, tag = 'scratch operand']
  %s0 = inlined_call_operand.vmem [shape: f32[4,3,256], index: 0, kind: input, shape index: {}]
  %s1 = inlined_call_operand.vmem [shape: f32[9,256], index: 1, kind: input, shape index: {}]
  %s2 = inlined_call_operand.vmem [shape: bf16[16,80], index: 2, kind: input, shape index: {}]
  %s3 = inlined_call_operand.vmem [shape: f32[4,16,256], index: 3, kind: output, shape index: {}]
  %s4 = sld [smem:[#allocation0]]
  $region45: #{derain_cyclegan_forward.7} parent=0
    _
  %s6 = ssub.s32 1, %s4
  %s7 = scalar_select 0, %s6, %s4
  loop: start=0, step=1, limit=6
  $region2: #{derain_cyclegan_forward.7} parent=0 // loop_pre_header
    _
  $region3: #{derain_cyclegan_forward.7} parent=0 // loop_header
    %s9 = sphi 0, %s13
    %p10 = scmp.ge.s32.totalorder %s9, 6
    %s19 = sphi 0, %s21
    %s22 = sphi 0, %s19
    %s23 = sphi 0, %s22
    %s39 = sphi 0, %s23
    %s43 = sphi 0, %s43
    %s45 = sphi 0, %s43
    %s46 = sphi 0, %s45
    %s60 = sphi 0, %s46
    %s64 = sphi 0, %s64
    %s66 = sphi 0, %s64
    %s67 = sphi 0, %s66
    %s81 = sphi 0, %s67
    %s87 = sphi 0, %s89
    %s90 = sphi 0, %s87
    %s91 = sphi 0, %s90
    %s107 = sphi 0, %s91
  $region4: #{derain_cyclegan_forward.7} parent=0 // loop_header_branch
    %12 = sbr.rel (%p10) target = $region8
  $region5: #{derain_cyclegan_forward.7} parent=0 // loop_body
    %s14 = ssub.s32 %s9, 1
    %s15 = ssub.s32 %s9, 2
    %s16 = sadd.s32 %s9, 1
    %s17 = ssub.s32 %s9, %s16
    %p18 = scmp.eq.s32.totalorder %s17, 0
    %s20 = sadd.s32 %s19, 1
    %s21 = scalar_select %p18, %s19, %s20
    %p24 = pneg %p18
    %p25 = scmp.eq.s32.totalorder %s9, 3
    %p26 = por %p24, %p25
    %p27 = scmp.ne.s32.totalorder %s19, %s22
    %p28 = scmp.eq.s32.totalorder %s9, 0
    %p29 = por %p27, %p28
    %p30 = scmp.ne.s32.totalorder %s19, %s22
    %p31 = scmp.eq.s32.totalorder %s14, 3
    %p32 = por %p30, %p31
    %p33 = scmp.ne.s32.totalorder %s22, %s23
    %p34 = scmp.eq.s32.totalorder %s14, 0
    %p35 = por %p33, %p34
    %p36 = scmp.ne.s32.totalorder %s22, %s23
    %p37 = scmp.eq.s32.totalorder %s15, 3
    %p38 = por %p36, %p37
    %p40 = scmp.ne.s32.totalorder %s23, %s39
    %p41 = scmp.eq.s32.totalorder %s15, 0
    %p42 = por %p40, %p41
    %s44 = sadd.s32 %s43, 1
    %p47 = scmp.eq.s32.totalorder %s9, 3
    %p48 = scmp.ne.s32.totalorder %s43, %s45
    %p49 = scmp.eq.s32.totalorder %s9, 0
    %p50 = por %p48, %p49
    %p51 = scmp.ne.s32.totalorder %s43, %s45
    %p52 = scmp.eq.s32.totalorder %s14, 3
    %p53 = por %p51, %p52
    %p54 = scmp.ne.s32.totalorder %s45, %s46
    %p55 = scmp.eq.s32.totalorder %s14, 0
    %p56 = por %p54, %p55
    %p57 = scmp.ne.s32.totalorder %s45, %s46
    %p58 = scmp.eq.s32.totalorder %s15, 3
    %p59 = por %p57, %p58
    %p61 = scmp.ne.s32.totalorder %s46, %s60
    %p62 = scmp.eq.s32.totalorder %s15, 0
    %p63 = por %p61, %p62
    %s65 = sadd.s32 %s64, 1
    %p68 = scmp.eq.s32.totalorder %s9, 3
    %p69 = scmp.ne.s32.totalorder %s64, %s66
    %p70 = scmp.eq.s32.totalorder %s9, 0
    %p71 = por %p69, %p70
    %p72 = scmp.ne.s32.totalorder %s64, %s66
    %p73 = scmp.eq.s32.totalorder %s14, 3
    %p74 = por %p72, %p73
    %p75 = scmp.ne.s32.totalorder %s66, %s67
    %p76 = scmp.eq.s32.totalorder %s14, 0
    %p77 = por %p75, %p76
    %p78 = scmp.ne.s32.totalorder %s66, %s67
    %p79 = scmp.eq.s32.totalorder %s15, 3
    %p80 = por %p78, %p79
    %p82 = scmp.ne.s32.totalorder %s67, %s81
    %p83 = scmp.eq.s32.totalorder %s15, 0
    %p84 = por %p82, %p83
    %s85 = ssub.s32 %s9, %s16
    %p86 = scmp.eq.s32.totalorder %s85, 0
    %s88 = sadd.s32 %s87, 1
    %s89 = scalar_select %p86, %s87, %s88
    %p92 = pneg %p86
    %p93 = scmp.eq.s32.totalorder %s9, 3
    %p94 = por %p92, %p93
    %p95 = scmp.ne.s32.totalorder %s87, %s90
    %p96 = scmp.eq.s32.totalorder %s9, 0
    %p97 = por %p95, %p96
    %p98 = scmp.ne.s32.totalorder %s87, %s90
    %p99 = scmp.eq.s32.totalorder %s14, 3
    %p100 = por %p98, %p99
    %p101 = scmp.ne.s32.totalorder %s90, %s91
    %p102 = scmp.eq.s32.totalorder %s14, 0
    %p103 = por %p101, %p102
    %p104 = scmp.ne.s32.totalorder %s90, %s91
    %p105 = scmp.eq.s32.totalorder %s15, 3
    %p106 = por %p104, %p105
    %p108 = scmp.ne.s32.totalorder %s91, %s107
    %p109 = scmp.eq.s32.totalorder %s15, 0
    %p110 = por %p108, %p109
    %p111 = scmp.le.s32.totalorder 1, %s9
    %p112 = scmp.lt.s32.totalorder %s9, 5
    %p113 = pnand %p111, %p112
    %p114 = pneg %p113
    // Predicated region
    $region9: #{derain_cyclegan_forward.7} parent=5 // pred_check
      _
    $region10: #{derain_cyclegan_forward.7} parent=5 // pred_check_branch
      %116 = sbr.rel (%p113) target = $region12
    $region11: #{derain_cyclegan_forward.7} parent=5 // pred_region
      %s117 = ssub.s32 %s9, 1
      // Predicated region
      $region13: #{derain_cyclegan_forward.7} parent=11 // pred_check
        %p118 = pneg %p56
      $region14: #{derain_cyclegan_forward.7} parent=11 // pred_check_branch
        %120 = sbr.rel (%p118) target = $region16
      $region15: #{derain_cyclegan_forward.7} parent=11 // pred_region
        _
      $region16: #{derain_cyclegan_forward.7} parent=11 // pred_fallthru
        _
      // Predicated region
      $region17: #{derain_cyclegan_forward.7} parent=11 // pred_check
        %p121 = pneg %p77
      $region18: #{derain_cyclegan_forward.7} parent=11 // pred_check_branch
        %123 = sbr.rel (%p121) target = $region20
      $region19: #{derain_cyclegan_forward.7} parent=11 // pred_region
        _
      $region20: #{derain_cyclegan_forward.7} parent=11 // pred_fallthru
        _
    $region12: #{derain_cyclegan_forward.7} parent=5 // pred_fallthru
      _
    %p124 = scmp.lt.s32.totalorder %s9, 4
    // Predicated region
    $region21: #{derain_cyclegan_forward.7} parent=5 // pred_check
      %p125 = pneg %p124
    $region22: #{derain_cyclegan_forward.7} parent=5 // pred_check_branch
      %127 = sbr.rel (%p125) target = $region24
    $region23: #{derain_cyclegan_forward.7} parent=5 // pred_region
      // Predicated region
      $region25: #{derain_cyclegan_forward.7} parent=23 // pred_check
        %p128 = pneg %p29
      $region26: #{derain_cyclegan_forward.7} parent=23 // pred_check_branch
        %130 = sbr.rel (%p128) target = $region28
      $region27: #{derain_cyclegan_forward.7} parent=23 // pred_region
        %p131 = scmp.lt.s32.totalorder %s9, 3
        %s132 = scalar_select %p131, %s9, 3
        %s133 = smul.addr %s132, 2
        %s134 = smul.addr %s133, 4
        %s135 = scalar_lea.vmem %s0, %s134
      $region28: #{derain_cyclegan_forward.7} parent=23 // pred_fallthru
        _
    $region24: #{derain_cyclegan_forward.7} parent=5 // pred_fallthru
      _
    %p136 = scmp.le.s32.totalorder 1, %s9
    %p137 = scmp.lt.s32.totalorder %s9, 5
    %p138 = pnand %p136, %p137
    %p139 = pneg %p138
    // Predicated region
    $region29: #{derain_cyclegan_forward.7} parent=5 // pred_check
      _
    $region30: #{derain_cyclegan_forward.7} parent=5 // pred_check_branch
      %141 = sbr.rel (%p138) target = $region32
    $region31: #{derain_cyclegan_forward.7} parent=5 // pred_region
      %s142 = ssub.s32 %s9, 1
      %p143 = scmp.lt.s32.totalorder %s14, 3
      %s144 = scalar_select %p143, %s14, 3
      %s145 = smul.addr %s144, 2
      %s146 = smul.addr %s145, 4
      %s147 = scalar_lea.vmem %s0, %s146
      %p148 = pneg %p35
      %p149 = pneg %p32
      %p150 = pneg %p56
      %p151 = pneg %p53
      %p152 = pneg %p77
      %p153 = pneg %p74
      %p154 = pneg %p103
      %p155 = pneg %p100
      %p156 = scmp.lt.s32.totalorder %s14, 3
      %s157 = scalar_select %p156, %s14, 3
      %s158 = smul.addr %s157, 4
      %s159 = smul.addr %s158, 8
      %s160 = scalar_lea.vmem %s3, %s159
      %p161 = scmp.lt.s32.totalorder %s14, 3
      %s162 = scalar_select %p161, %s14, 3
      %s163 = smul.addr %s162, 2
      %s164 = smul.addr %s163, 4
      %s165 = scalar_lea.vmem %s0, %s164
      %p166 = scmp.lt.s32.totalorder %s14, 3
      %s167 = scalar_select %p166, %s14, 3
      %s168 = smul.addr %s167, 4
      %s169 = smul.addr %s168, 8
      %s170 = scalar_lea.vmem %s3, %s169
      %v172 = vld [vmem:[%s1] sm:$0xff]
      %v173 = vld [vmem:[%s1 + $0x8] sm:$0xff]
      %v174 = vld [vmem:[%s1 + $0x10] sm:$0x1]
      %v175 = vld [vmem:[%s1 + $0x18] sm:$0x1]
      %v176 = vld [vmem:[%s165] sm:$0x77]
      %v178 = vcombine.high %v176, %v176
      %vm180 = vcmask 1042432
      %v181 = vsel %vm180, %v176, 0.0
      %v182 = vsel %vm180, %v178, 0.0
      %184 = vrot.lane.b32.xlu0 %v182, 17
      %v185 = vpop.permute.xlu0 %184
      %188 = vrot.lane.b32.xlu0 %v181, 17
      %v189 = vpop.permute.xlu0 %188
      %vm190 = vcmask 138240
      %v191 = vsel %vm190, %v189, %v185
      %v194 = vsel %vm190, %v185, %v189
      %v195 = vlaneseq
      %v196 = vshrl.u32 %v195, 7
      %v197 = vsub.s32 0, %v196
      %v198 = vrot.slane %v172, %v197
      %v199 = vlaneseq
      %v200 = vshrl.u32 %v199, 7
      %v201 = vsub.s32 0, %v200
      %v202 = vrot.slane %v173, %v201
      %v203 = vmul.f32 %v194, %v198
      %v204 = vmul.f32 %v191, %v202
      %v205 = vpack.c.bf16 %v203, %v203
      %v206 = vpack.c.bf16 %v204, %v204
      %v209 = vunpack.c.l.b16 %v205
      %v210 = vunpack.c.l.b16 %v206
      %v211 = vpack.c.b16 %v210, %v209
      %213 = vst [vmem:[#allocation2] sm:$0xff] %v211
      %214 = vrot.lane.b32.xlu0 %v182, 16
      %v215 = vpop.permute.xlu0 %214
      %217 = vrot.lane.b32.xlu0 %v181, 16
      %v218 = vpop.permute.xlu0 %217
      %vm219 = vcmask 130048
      %v220 = vsel %vm219, %v218, %v215
      %v223 = vsel %vm219, %v215, %v218
      %v224 = vlaneseq
      %v225 = vshrl.u32 %v224, 7
      %v226 = vsub.s32 1, %v225
      %v227 = vrot.slane %v172, %v226
      %v228 = vlaneseq
      %v229 = vshrl.u32 %v228, 7
      %v230 = vsub.s32 1, %v229
      %v231 = vrot.slane %v173, %v230
      %v232 = vmul.f32 %v223, %v227
      %v233 = vmul.f32 %v220, %v231
      %v234 = vpack.c.bf16 %v232, %v232
      %v235 = vpack.c.bf16 %v233, %v233
      %v238 = vunpack.c.l.b16 %v234
      %v239 = vunpack.c.l.b16 %v235
      %v240 = vpack.c.b16 %v239, %v238
      %242 = vst [vmem:[#allocation2 + $0x8] sm:$0xff] %v240
      %243 = vrot.lane.b32.xlu0 %v182, 15
      %v244 = vpop.permute.xlu0 %243
      %246 = vrot.lane.b32.xlu0 %v181, 15
      %v247 = vpop.permute.xlu0 %246
      %vm248 = vcmask 121856
      %v249 = vsel %vm248, %v247, %v244
      %v252 = vsel %vm248, %v244, %v247
      %v253 = vlaneseq
      %v254 = vshrl.u32 %v253, 7
      %v255 = vsub.s32 2, %v254
      %v256 = vrot.slane %v172, %v255
      %v257 = vlaneseq
      %v258 = vshrl.u32 %v257, 7
      %v259 = vsub.s32 2, %v258
      %v260 = vrot.slane %v173, %v259
      %v261 = vmul.f32 %v252, %v256
      %v262 = vmul.f32 %v249, %v260
      %v263 = vpack.c.bf16 %v261, %v261
      %v264 = vpack.c.bf16 %v262, %v262
      %v267 = vunpack.c.l.b16 %v263
      %v268 = vunpack.c.l.b16 %v264
      %v269 = vpack.c.b16 %v268, %v267
      %271 = vst [vmem:[#allocation2 + $0x10] sm:$0xff] %v269
      %272 = vrot.lane.b32.xlu0 %v182, 1
      %v273 = vpop.permute.xlu0 %272
      %275 = vrot.lane.b32.xlu0 %v181, 1
      %v276 = vpop.permute.xlu0 %275
      %vm277 = vcmask 7168
      %v278 = vsel %vm277, %v276, %v273
      %v281 = vsel %vm277, %v273, %v276
      %v282 = vlaneseq
      %v283 = vshrl.u32 %v282, 7
      %v284 = vsub.s32 3, %v283
      %v285 = vrot.slane %v172, %v284
      %v286 = vlaneseq
      %v287 = vshrl.u32 %v286, 7
      %v288 = vsub.s32 3, %v287
      %v289 = vrot.slane %v173, %v288
      %v290 = vmul.f32 %v281, %v285
      %v291 = vmul.f32 %v278, %v289
      %v292 = vpack.c.bf16 %v290, %v290
      %v293 = vpack.c.bf16 %v291, %v291
      %v296 = vunpack.c.l.b16 %v292
      %v297 = vunpack.c.l.b16 %v293
      %v298 = vpack.c.b16 %v297, %v296
      %300 = vst [vmem:[#allocation2 + $0x18] sm:$0xff] %v298
      %v301 = vlaneseq
      %v302 = vshrl.u32 %v301, 7
      %v303 = vsub.s32 4, %v302
      %v304 = vrot.slane %v172, %v303
      %v305 = vlaneseq
      %v306 = vshrl.u32 %v305, 7
      %v307 = vsub.s32 4, %v306
      %v308 = vrot.slane %v173, %v307
      %v309 = vmul.f32 %v181, %v304
      %v310 = vmul.f32 %v182, %v308
      %v311 = vpack.c.bf16 %v309, %v309
      %v312 = vpack.c.bf16 %v310, %v310
      %v315 = vunpack.c.l.b16 %v311
      %v316 = vunpack.c.l.b16 %v312
      %v317 = vpack.c.b16 %v316, %v315
      %319 = vst [vmem:[#allocation2 + $0x20] sm:$0xff] %v317
      %320 = vrot.lane.b32.xlu0 %v181, 127
      %v321 = vpop.permute.xlu0 %320
      %322 = vrot.lane.b32.xlu0 %v182, 127
      %v323 = vpop.permute.xlu0 %322
      %vm324 = vcmask 1039360
      %v325 = vsel %vm324, %v321, %v323
      %v329 = vsel %vm324, %v323, %v321
      %v330 = vlaneseq
      %v331 = vshrl.u32 %v330, 7
      %v332 = vsub.s32 5, %v331
      %v333 = vrot.slane %v172, %v332
      %v334 = vlaneseq
      %v335 = vshrl.u32 %v334, 7
      %v336 = vsub.s32 5, %v335
      %v337 = vrot.slane %v173, %v336
      %v338 = vmul.f32 %v325, %v333
      %v339 = vmul.f32 %v329, %v337
      %v340 = vpack.c.bf16 %v338, %v338
      %v341 = vpack.c.bf16 %v339, %v339
      %v344 = vunpack.c.l.b16 %v340
      %v345 = vunpack.c.l.b16 %v341
      %v346 = vpack.c.b16 %v345, %v344
      %348 = vst [vmem:[#allocation2 + $0x28] sm:$0xff] %v346
      %349 = vrot.lane.b32.xlu0 %v181, 113
      %v350 = vpop.permute.xlu0 %349
      %351 = vrot.lane.b32.xlu0 %v182, 113
      %v352 = vpop.permute.xlu0 %351
      %vm353 = vcmask 924672
      %v354 = vsel %vm353, %v350, %v352
      %v358 = vsel %vm353, %v352, %v350
      %v359 = vlaneseq
      %v360 = vshrl.u32 %v359, 7
      %v361 = vsub.s32 6, %v360
      %v362 = vrot.slane %v172, %v361
      %v363 = vlaneseq
      %v364 = vshrl.u32 %v363, 7
      %v365 = vsub.s32 6, %v364
      %v366 = vrot.slane %v173, %v365
      %v367 = vmul.f32 %v354, %v362
      %v368 = vmul.f32 %v358, %v366
      %v369 = vpack.c.bf16 %v367, %v367
      %v370 = vpack.c.bf16 %v368, %v368
      %v373 = vunpack.c.l.b16 %v369
      %v374 = vunpack.c.l.b16 %v370
      %v375 = vpack.c.b16 %v374, %v373
      %377 = vst [vmem:[#allocation2 + $0x30] sm:$0xff] %v375
      %378 = vrot.lane.b32.xlu0 %v181, 112
      %v379 = vpop.permute.xlu0 %378
      %380 = vrot.lane.b32.xlu0 %v182, 112
      %v381 = vpop.permute.xlu0 %380
      %vm382 = vcmask 916480
      %v383 = vsel %vm382, %v379, %v381
      %v387 = vsel %vm382, %v381, %v379
      %v388 = vlaneseq
      %v389 = vshrl.u32 %v388, 7
      %v390 = vsub.s32 7, %v389
      %v391 = vrot.slane %v172, %v390
      %v392 = vlaneseq
      %v393 = vshrl.u32 %v392, 7
      %v394 = vsub.s32 7, %v393
      %v395 = vrot.slane %v173, %v394
      %v396 = vmul.f32 %v383, %v391
      %v397 = vmul.f32 %v387, %v395
      %v398 = vpack.c.bf16 %v396, %v396
      %v399 = vpack.c.bf16 %v397, %v397
      %v402 = vunpack.c.l.b16 %v398
      %v403 = vunpack.c.l.b16 %v399
      %v404 = vpack.c.b16 %v403, %v402
      %406 = vst [vmem:[#allocation2 + $0x38] sm:$0xff] %v404
      %407 = vrot.lane.b32.xlu0 %v181, 111
      %v408 = vpop.permute.xlu0 %407
      %409 = vrot.lane.b32.xlu0 %v182, 111
      %v410 = vpop.permute.xlu0 %409
      %vm411 = vcmask 908288
      %v412 = vsel %vm411, %v408, %v410
      %v416 = vsel %vm411, %v410, %v408
      %v417 = vlaneseq
      %v418 = vshrl.u32 %v417, 7
      %v419 = vsub.s32 0, %v418
      %v420 = vrot.slane %v174, %v419
      %v421 = vlaneseq
      %v422 = vshrl.u32 %v421, 7
      %v423 = vsub.s32 0, %v422
      %v424 = vrot.slane %v175, %v423
      %v425 = vmul.f32 %v412, %v420
      %v426 = vmul.f32 %v416, %v424
      %v427 = vpack.c.bf16 %v425, %v425
      %v428 = vpack.c.bf16 %v426, %v426
      %v431 = vunpack.c.l.b16 %v427
      %v432 = vunpack.c.l.b16 %v428
      %v433 = vpack.c.b16 %v432, %v431
      %435 = vst [vmem:[#allocation2 + $0x40] sm:$0xff] %v433
      %vm436 = vcmask 1040384
      %v437 = vsel %vm436, 1.0, 0.0
      %v438 = vpack.c.bf16 %v437, %v437
      %v440 = vunpack.c.l.b16 %v438
      %v441 = vpack.c.b16 %v440, %v440
      %443 = vst [vmem:[#allocation2 + $0x48] sm:$0xff] %v441
      %v444 = vld [vmem:[%s2] sm:$0xf]
      %v445 = vld [vmem:[%s2 + $0x4] sm:$0xf]
      %v446 = vld [vmem:[#allocation2] sm:$0xff]
      %v447 = vld [vmem:[#allocation2 + $0x8] sm:$0xff]
      %v448 = vld [vmem:[#allocation2 + $0x10] sm:$0xff]
      %v449 = vld [vmem:[#allocation2 + $0x18] sm:$0xff]
      %v450 = vld [vmem:[#allocation2 + $0x20] sm:$0xff]
      %v451 = vld [vmem:[#allocation2 + $0x28] sm:$0xff]
      %v452 = vld [vmem:[#allocation2 + $0x30] sm:$0xff]
      %v453 = vld [vmem:[#allocation2 + $0x38] sm:$0xff]
      %v454 = vld [vmem:[#allocation2 + $0x40] sm:$0xff]
      %v455 = vld [vmem:[#allocation2 + $0x48] sm:$0xff]
      %v458 = vunpack.c.l.b16 %v444
      %v459 = vunpack.c.l.b16 %v445
      %v460 = vpack.c.b16 %v459, %v458
      %v471 = vunpack.c.l.b16 %v446
      %v472 = vunpack.c.h.b16 %v446
      %v473 = vunpack.c.l.b16 %v447
      %v474 = vunpack.c.h.b16 %v447
      %v475 = vunpack.c.l.b16 %v448
      %v476 = vunpack.c.h.b16 %v448
      %v477 = vunpack.c.l.b16 %v449
      %v478 = vunpack.c.h.b16 %v449
      %v479 = vunpack.c.l.b16 %v450
      %v480 = vunpack.c.h.b16 %v450
      %v481 = vunpack.c.l.b16 %v451
      %v482 = vunpack.c.h.b16 %v451
      %v483 = vunpack.c.l.b16 %v452
      %v484 = vunpack.c.h.b16 %v452
      %v485 = vunpack.c.l.b16 %v453
      %v486 = vunpack.c.h.b16 %v453
      %v487 = vunpack.c.l.b16 %v454
      %v488 = vunpack.c.h.b16 %v454
      %v489 = vunpack.c.l.b16 %v455
      %v490 = vunpack.c.h.b16 %v455
      %v491 = vpack.c.b16 %v473, %v471
      %v492 = vpack.c.b16 %v474, %v472
      %v493 = vpack.c.b16 %v477, %v475
      %v494 = vpack.c.b16 %v478, %v476
      %v495 = vpack.c.b16 %v481, %v479
      %v496 = vpack.c.b16 %v482, %v480
      %v497 = vpack.c.b16 %v485, %v483
      %v498 = vpack.c.b16 %v486, %v484
      %v499 = vpack.c.b16 %v489, %v487
      %v500 = vpack.c.b16 %v490, %v488
      %vm511 = vcmask 654336
      %v513 = vsel %vm511, %v460, 0
      %515 = vmatprep.subr.bf16.mxu0 0
      %516 = vmatpush1.bf16.msra.mxu0 0
      %517 = vmatprep.subr.bf16.mxu0 0
      %518 = vmatpush1.bf16.msra.mxu0 0
      %519 = vmatprep.subr.bf16.mxu0 0
      %520 = vmatpush1.bf16.msra.mxu0 0
      %521 = vmatprep.subr.bf16.mxu0 %v500
      %522 = vmatpush1.bf16.msra.mxu0 %v499
      %523 = vmatprep.subr.bf16.mxu0 %v498
      %524 = vmatpush1.bf16.msra.mxu0 %v497
      %525 = vmatprep.subr.bf16.mxu0 %v496
      %526 = vmatpush1.bf16.msra.mxu0 %v495
      %527 = vmatprep.subr.bf16.mxu0 %v494
      %528 = vmatpush1.bf16.msra.mxu0 %v493
      %529 = vmatprep.subr.bf16.mxu0 %v492
      %530 = vmatpush1.bf16.msra.mxu0 %v491
      %531 = vmatprep.subr.bf16.mxu0 0
      %532 = vmatpush2.bf16.msra.mxu0 0
      %533 = vmatprep.subr.bf16.mxu0 0
      %534 = vmatpush2.bf16.msra.mxu0 0
      %535 = vmatprep.subr.bf16.mxu0 0
      %536 = vmatpush2.bf16.msra.mxu0 0
      %537 = vmatprep.subr.bf16.mxu0 0
      %538 = vmatpush2.bf16.msra.mxu0 0
      %539 = vmatprep.subr.bf16.mxu0 0
      %540 = vmatpush2.bf16.msra.mxu0 0
      %541 = vmatprep.subr.bf16.mxu0 0
      %542 = vmatpush2.bf16.msra.mxu0 0
      %543 = vmatprep.subr.bf16.mxu0 0
      %544 = vmatpush2.bf16.msra.mxu0 0
      %545 = vmatprep.subr.bf16.mxu0 0
      %546 = vmatpush2.bf16.msra.mxu0 0
      %547 = vmatprep.mubr.bf16.mxu0 0
      %548 = vmatmul.mubr.bf16.gmra.mxu0 %v513
      %v549 = vpop.f32.mrf.mxu0
      %v550 = vadd.f32 0.0, %v549
      %v551 = vpop.f32.mrf.mxu0
      %v552 = vadd.f32 0.0, %v551
      %v553 = vpop.f32.mrf.mxu0
      %v554 = vadd.f32 0.0, %v553
      %v555 = vpop.f32.mrf.mxu0
      %v556 = vadd.f32 0.0, %v555
      %557 = vdwg.mxu0
      %v558 = vmax.f32 %v550, 0.0
      %v559 = vmax.f32 %v552, 0.0
      %v560 = vmax.f32 %v554, 0.0
      %v561 = vmax.f32 %v556, 0.0
      %562 = vst [vmem:[%s170] sm:$0xff] %v558
      %563 = vst [vmem:[%s170 + $0x8] sm:$0xff] %v559
      %564 = vst [vmem:[%s170 + $0x10] sm:$0xff] %v560
      %565 = vst [vmem:[%s170 + $0x18] sm:$0xff] %v561
      %p566 = scmp.lt.s32.totalorder %s14, 3
      %s567 = scalar_select %p566, %s14, 3
      %s568 = smul.addr %s567, 4
      %s569 = smul.addr %s568, 8
      %s570 = scalar_lea.vmem %s3, %s569
      // Predicated region
      $region33: #{derain_cyclegan_forward.7} parent=31 // pred_check
        %p571 = pneg %p100
      $region34: #{derain_cyclegan_forward.7} parent=31 // pred_check_branch
        %573 = sbr.rel (%p571) target = $region36
      $region35: #{derain_cyclegan_forward.7} parent=31 // pred_region
        _
      $region36: #{derain_cyclegan_forward.7} parent=31 // pred_fallthru
        _
    $region32: #{derain_cyclegan_forward.7} parent=5 // pred_fallthru
      _
    %p574 = scmp.le.s32.totalorder 2, %s9
    // Predicated region
    $region37: #{derain_cyclegan_forward.7} parent=5 // pred_check
      %p575 = pneg %p574
    $region38: #{derain_cyclegan_forward.7} parent=5 // pred_check_branch
      %577 = sbr.rel (%p575) target = $region40
    $region39: #{derain_cyclegan_forward.7} parent=5 // pred_region
      %s578 = ssub.s32 %s9, 2
      // Predicated region
      $region41: #{derain_cyclegan_forward.7} parent=39 // pred_check
        %p579 = pneg %p106
      $region42: #{derain_cyclegan_forward.7} parent=39 // pred_check_branch
        %581 = sbr.rel (%p579) target = $region44
      $region43: #{derain_cyclegan_forward.7} parent=39 // pred_region
        %p582 = scmp.lt.s32.totalorder %s15, 3
        %s583 = scalar_select %p582, %s15, 3
        %s584 = smul.addr %s583, 4
        %s585 = smul.addr %s584, 8
        %s586 = scalar_lea.vmem %s3, %s585
      $region44: #{derain_cyclegan_forward.7} parent=39 // pred_fallthru
        _
    $region40: #{derain_cyclegan_forward.7} parent=5 // pred_fallthru
      _
  $region6: #{derain_cyclegan_forward.7} parent=0 // loop_footer
    %s13 = sadd.s32 1, %s9
  $region7: #{derain_cyclegan_forward.7} parent=0 // loop_footer_branch
    %8 = sbr.rel target = $region3
  $region8: #{derain_cyclegan_forward.7} parent=0 // loop_exit
    _

// kernel: derain_cyclegan_forward.5
$region0: #{derain_cyclegan_forward.5}
  #allocation0 [shape = 'u32[]', space=smem, size = 0x4, offset = 0x4, fixed_abs, tag = 'smem constant byte address 0x4 - core index']
  #allocation1 [shape = 'u32[144,128]{1,0:T(1,128)}', space=vmem, size = 0x12000, scoped, tag = 'internal scratch']
  #allocation2 [shape = 'bf16[152,256]{1,0:T(8,128)(2,1)}', space=vmem, size = 0x13000, scoped, tag = 'scratch operand']
  %s0 = inlined_call_operand.vmem [shape: f32[6,3,256], index: 0, kind: input, shape index: {}]
  %s1 = inlined_call_operand.vmem [shape: f32[9,256], index: 1, kind: input, shape index: {}]
  %s2 = inlined_call_operand.vmem [shape: bf16[16,80], index: 2, kind: input, shape index: {}]
  %s3 = inlined_call_operand.vmem [shape: bf16[16,152], index: 3, kind: input, shape index: {}]
  %s4 = inlined_call_operand.vmem [shape: bf16[3,152], index: 4, kind: input, shape index: {}]
  %s5 = inlined_call_operand.vmem [shape: f32[6,3,256], index: 5, kind: output, shape index: {0}]
  %s6 = inlined_call_operand.vmem [shape: f32[6,3,256], index: 6, kind: output, shape index: {1}]
  %7 = xla_tuple %s5, %s6
  %s8 = sld [smem:[#allocation0]]
  $region61: #{derain_cyclegan_forward.5} parent=0
    _
  %s10 = ssub.s32 1, %s8
  %s11 = scalar_select 0, %s10, %s8
  loop: start=0, step=1, limit=8
  $region2: #{derain_cyclegan_forward.5} parent=0 // loop_pre_header
    _
  $region3: #{derain_cyclegan_forward.5} parent=0 // loop_header
    %s13 = sphi 0, %s17
    %p14 = scmp.ge.s32.totalorder %s13, 8
    %s23 = sphi 0, %s25
    %s26 = sphi 0, %s23
    %s27 = sphi 0, %s26
    %s43 = sphi 0, %s27
    %s47 = sphi 0, %s47
    %s49 = sphi 0, %s47
    %s50 = sphi 0, %s49
    %s64 = sphi 0, %s50
    %s68 = sphi 0, %s68
    %s70 = sphi 0, %s68
    %s71 = sphi 0, %s70
    %s85 = sphi 0, %s71
    %s89 = sphi 0, %s89
    %s91 = sphi 0, %s89
    %s92 = sphi 0, %s91
    %s106 = sphi 0, %s92
    %s110 = sphi 0, %s110
    %s112 = sphi 0, %s110
    %s113 = sphi 0, %s112
    %s127 = sphi 0, %s113
    %s133 = sphi 0, %s135
    %s136 = sphi 0, %s133
    %s137 = sphi 0, %s136
    %s153 = sphi 0, %s137
    %s159 = sphi 0, %s161
    %s162 = sphi 0, %s159
    %s163 = sphi 0, %s162
    %s179 = sphi 0, %s163
  $region4: #{derain_cyclegan_forward.5} parent=0 // loop_header_branch
    %16 = sbr.rel (%p14) target = $region8
  $region5: #{derain_cyclegan_forward.5} parent=0 // loop_body
    %s18 = ssub.s32 %s13, 1
    %s19 = ssub.s32 %s13, 2
    %s20 = sadd.s32 %s13, 1
    %s21 = ssub.s32 %s13, %s20
    %p22 = scmp.eq.s32.totalorder %s21, 0
    %s24 = sadd.s32 %s23, 1
    %s25 = scalar_select %p22, %s23, %s24
    %p28 = pneg %p22
    %p29 = scmp.eq.s32.totalorder %s13, 5
    %p30 = por %p28, %p29
    %p31 = scmp.ne.s32.totalorder %s23, %s26
    %p32 = scmp.eq.s32.totalorder %s13, 0
    %p33 = por %p31, %p32
    %p34 = scmp.ne.s32.totalorder %s23, %s26
    %p35 = scmp.eq.s32.totalorder %s18, 5
    %p36 = por %p34, %p35
    %p37 = scmp.ne.s32.totalorder %s26, %s27
    %p38 = scmp.eq.s32.totalorder %s18, 0
    %p39 = por %p37, %p38
    %p40 = scmp.ne.s32.totalorder %s26, %s27
    %p41 = scmp.eq.s32.totalorder %s19, 5
    %p42 = por %p40, %p41
    %p44 = scmp.ne.s32.totalorder %s27, %s43
    %p45 = scmp.eq.s32.totalorder %s19, 0
    %p46 = por %p44, %p45
    %s48 = sadd.s32 %s47, 1
    %p51 = scmp.eq.s32.totalorder %s13, 5
    %p52 = scmp.ne.s32.totalorder %s47, %s49
    %p53 = scmp.eq.s32.totalorder %s13, 0
    %p54 = por %p52, %p53
    %p55 = scmp.ne.s32.totalorder %s47, %s49
    %p56 = scmp.eq.s32.totalorder %s18, 5
    %p57 = por %p55, %p56
    %p58 = scmp.ne.s32.totalorder %s49, %s50
    %p59 = scmp.eq.s32.totalorder %s18, 0
    %p60 = por %p58, %p59
    %p61 = scmp.ne.s32.totalorder %s49, %s50
    %p62 = scmp.eq.s32.totalorder %s19, 5
    %p63 = por %p61, %p62
    %p65 = scmp.ne.s32.totalorder %s50, %s64
    %p66 = scmp.eq.s32.totalorder %s19, 0
    %p67 = por %p65, %p66
    %s69 = sadd.s32 %s68, 1
    %p72 = scmp.eq.s32.totalorder %s13, 5
    %p73 = scmp.ne.s32.totalorder %s68, %s70
    %p74 = scmp.eq.s32.totalorder %s13, 0
    %p75 = por %p73, %p74
    %p76 = scmp.ne.s32.totalorder %s68, %s70
    %p77 = scmp.eq.s32.totalorder %s18, 5
    %p78 = por %p76, %p77
    %p79 = scmp.ne.s32.totalorder %s70, %s71
    %p80 = scmp.eq.s32.totalorder %s18, 0
    %p81 = por %p79, %p80
    %p82 = scmp.ne.s32.totalorder %s70, %s71
    %p83 = scmp.eq.s32.totalorder %s19, 5
    %p84 = por %p82, %p83
    %p86 = scmp.ne.s32.totalorder %s71, %s85
    %p87 = scmp.eq.s32.totalorder %s19, 0
    %p88 = por %p86, %p87
    %s90 = sadd.s32 %s89, 1
    %p93 = scmp.eq.s32.totalorder %s13, 5
    %p94 = scmp.ne.s32.totalorder %s89, %s91
    %p95 = scmp.eq.s32.totalorder %s13, 0
    %p96 = por %p94, %p95
    %p97 = scmp.ne.s32.totalorder %s89, %s91
    %p98 = scmp.eq.s32.totalorder %s18, 5
    %p99 = por %p97, %p98
    %p100 = scmp.ne.s32.totalorder %s91, %s92
    %p101 = scmp.eq.s32.totalorder %s18, 0
    %p102 = por %p100, %p101
    %p103 = scmp.ne.s32.totalorder %s91, %s92
    %p104 = scmp.eq.s32.totalorder %s19, 5
    %p105 = por %p103, %p104
    %p107 = scmp.ne.s32.totalorder %s92, %s106
    %p108 = scmp.eq.s32.totalorder %s19, 0
    %p109 = por %p107, %p108
    %s111 = sadd.s32 %s110, 1
    %p114 = scmp.eq.s32.totalorder %s13, 5
    %p115 = scmp.ne.s32.totalorder %s110, %s112
    %p116 = scmp.eq.s32.totalorder %s13, 0
    %p117 = por %p115, %p116
    %p118 = scmp.ne.s32.totalorder %s110, %s112
    %p119 = scmp.eq.s32.totalorder %s18, 5
    %p120 = por %p118, %p119
    %p121 = scmp.ne.s32.totalorder %s112, %s113
    %p122 = scmp.eq.s32.totalorder %s18, 0
    %p123 = por %p121, %p122
    %p124 = scmp.ne.s32.totalorder %s112, %s113
    %p125 = scmp.eq.s32.totalorder %s19, 5
    %p126 = por %p124, %p125
    %p128 = scmp.ne.s32.totalorder %s113, %s127
    %p129 = scmp.eq.s32.totalorder %s19, 0
    %p130 = por %p128, %p129
    %s131 = ssub.s32 %s13, %s20
    %p132 = scmp.eq.s32.totalorder %s131, 0
    %s134 = sadd.s32 %s133, 1
    %s135 = scalar_select %p132, %s133, %s134
    %p138 = pneg %p132
    %p139 = scmp.eq.s32.totalorder %s13, 5
    %p140 = por %p138, %p139
    %p141 = scmp.ne.s32.totalorder %s133, %s136
    %p142 = scmp.eq.s32.totalorder %s13, 0
    %p143 = por %p141, %p142
    %p144 = scmp.ne.s32.totalorder %s133, %s136
    %p145 = scmp.eq.s32.totalorder %s18, 5
    %p146 = por %p144, %p145
    %p147 = scmp.ne.s32.totalorder %s136, %s137
    %p148 = scmp.eq.s32.totalorder %s18, 0
    %p149 = por %p147, %p148
    %p150 = scmp.ne.s32.totalorder %s136, %s137
    %p151 = scmp.eq.s32.totalorder %s19, 5
    %p152 = por %p150, %p151
    %p154 = scmp.ne.s32.totalorder %s137, %s153
    %p155 = scmp.eq.s32.totalorder %s19, 0
    %p156 = por %p154, %p155
    %s157 = ssub.s32 %s13, %s20
    %p158 = scmp.eq.s32.totalorder %s157, 0
    %s160 = sadd.s32 %s159, 1
    %s161 = scalar_select %p158, %s159, %s160
    %p164 = pneg %p158
    %p165 = scmp.eq.s32.totalorder %s13, 5
    %p166 = por %p164, %p165
    %p167 = scmp.ne.s32.totalorder %s159, %s162
    %p168 = scmp.eq.s32.totalorder %s13, 0
    %p169 = por %p167, %p168
    %p170 = scmp.ne.s32.totalorder %s159, %s162
    %p171 = scmp.eq.s32.totalorder %s18, 5
    %p172 = por %p170, %p171
    %p173 = scmp.ne.s32.totalorder %s162, %s163
    %p174 = scmp.eq.s32.totalorder %s18, 0
    %p175 = por %p173, %p174
    %p176 = scmp.ne.s32.totalorder %s162, %s163
    %p177 = scmp.eq.s32.totalorder %s19, 5
    %p178 = por %p176, %p177
    %p180 = scmp.ne.s32.totalorder %s163, %s179
    %p181 = scmp.eq.s32.totalorder %s19, 0
    %p182 = por %p180, %p181
    %p183 = scmp.le.s32.totalorder 1, %s13
    %p184 = scmp.lt.s32.totalorder %s13, 7
    %p185 = pnand %p183, %p184
    %p186 = pneg %p185
    // Predicated region
    $region9: #{derain_cyclegan_forward.5} parent=5 // pred_check
      _
    $region10: #{derain_cyclegan_forward.5} parent=5 // pred_check_branch
      %188 = sbr.rel (%p185) target = $region12
    $region11: #{derain_cyclegan_forward.5} parent=5 // pred_region
      %s189 = ssub.s32 %s13, 1
      // Predicated region
      $region13: #{derain_cyclegan_forward.5} parent=11 // pred_check
        %p190 = pneg %p60
      $region14: #{derain_cyclegan_forward.5} parent=11 // pred_check_branch
        %192 = sbr.rel (%p190) target = $region16
      $region15: #{derain_cyclegan_forward.5} parent=11 // pred_region
        _
      $region16: #{derain_cyclegan_forward.5} parent=11 // pred_fallthru
        _
      // Predicated region
      $region17: #{derain_cyclegan_forward.5} parent=11 // pred_check
        %p193 = pneg %p81
      $region18: #{derain_cyclegan_forward.5} parent=11 // pred_check_branch
        %195 = sbr.rel (%p193) target = $region20
      $region19: #{derain_cyclegan_forward.5} parent=11 // pred_region
        _
      $region20: #{derain_cyclegan_forward.5} parent=11 // pred_fallthru
        _
      // Predicated region
      $region21: #{derain_cyclegan_forward.5} parent=11 // pred_check
        %p196 = pneg %p102
      $region22: #{derain_cyclegan_forward.5} parent=11 // pred_check_branch
        %198 = sbr.rel (%p196) target = $region24
      $region23: #{derain_cyclegan_forward.5} parent=11 // pred_region
        _
      $region24: #{derain_cyclegan_forward.5} parent=11 // pred_fallthru
        _
      // Predicated region
      $region25: #{derain_cyclegan_forward.5} parent=11 // pred_check
        %p199 = pneg %p123
      $region26: #{derain_cyclegan_forward.5} parent=11 // pred_check_branch
        %201 = sbr.rel (%p199) target = $region28
      $region27: #{derain_cyclegan_forward.5} parent=11 // pred_region
        _
      $region28: #{derain_cyclegan_forward.5} parent=11 // pred_fallthru
        _
    $region12: #{derain_cyclegan_forward.5} parent=5 // pred_fallthru
      _
    %p202 = scmp.lt.s32.totalorder %s13, 6
    // Predicated region
    $region29: #{derain_cyclegan_forward.5} parent=5 // pred_check
      %p203 = pneg %p202
    $region30: #{derain_cyclegan_forward.5} parent=5 // pred_check_branch
      %205 = sbr.rel (%p203) target = $region32
    $region31: #{derain_cyclegan_forward.5} parent=5 // pred_region
      // Predicated region
      $region33: #{derain_cyclegan_forward.5} parent=31 // pred_check
        %p206 = pneg %p33
      $region34: #{derain_cyclegan_forward.5} parent=31 // pred_check_branch
        %208 = sbr.rel (%p206) target = $region36
      $region35: #{derain_cyclegan_forward.5} parent=31 // pred_region
        %p209 = scmp.lt.s32.totalorder %s13, 5
        %s210 = scalar_select %p209, %s13, 5
        %s211 = smul.addr %s210, 2
        %s212 = smul.addr %s211, 4
        %s213 = scalar_lea.vmem %s0, %s212
      $region36: #{derain_cyclegan_forward.5} parent=31 // pred_fallthru
        _
    $region32: #{derain_cyclegan_forward.5} parent=5 // pred_fallthru
      _
    %p214 = scmp.le.s32.totalorder 1, %s13
    %p215 = scmp.lt.s32.totalorder %s13, 7
    %p216 = pnand %p214, %p215
    %p217 = pneg %p216
    // Predicated region
    $region37: #{derain_cyclegan_forward.5} parent=5 // pred_check
      _
    $region38: #{derain_cyclegan_forward.5} parent=5 // pred_check_branch
      %219 = sbr.rel (%p216) target = $region40
    $region39: #{derain_cyclegan_forward.5} parent=5 // pred_region
      %s220 = ssub.s32 %s13, 1
      %p221 = scmp.lt.s32.totalorder %s18, 5
      %s222 = scalar_select %p221, %s18, 5
      %s223 = smul.addr %s222, 2
      %s224 = smul.addr %s223, 4
      %s225 = scalar_lea.vmem %s0, %s224
      %p226 = pneg %p39
      %p227 = pneg %p36
      %p228 = pneg %p60
      %p229 = pneg %p57
      %p230 = pneg %p81
      %p231 = pneg %p78
      %p232 = pneg %p102
      %p233 = pneg %p99
      %p234 = pneg %p123
      %p235 = pneg %p120
      %p236 = pneg %p149
      %p237 = pneg %p146
      %p238 = scmp.lt.s32.totalorder %s18, 5
      %s239 = scalar_select %p238, %s18, 5
      %s240 = smul.addr %s239, 2
      %s241 = smul.addr %s240, 4
      %s242 = scalar_lea.vmem %s5, %s241
      %p243 = pneg %p175
      %p244 = pneg %p172
      %p245 = scmp.lt.s32.totalorder %s18, 5
      %s246 = scalar_select %p245, %s18, 5
      %s247 = smul.addr %s246, 2
      %s248 = smul.addr %s247, 4
      %s249 = scalar_lea.vmem %s6, %s248
      %p250 = scmp.lt.s32.totalorder %s18, 5
      %s251 = scalar_select %p250, %s18, 5
      %s252 = smul.addr %s251, 2
      %s253 = smul.addr %s252, 4
      %s254 = scalar_lea.vmem %s0, %s253
      %p255 = scmp.lt.s32.totalorder %s18, 5
      %s256 = scalar_select %p255, %s18, 5
      %s257 = smul.addr %s256, 2
      %s258 = smul.addr %s257, 4
      %s259 = scalar_lea.vmem %s5, %s258
      %p260 = scmp.lt.s32.totalorder %s18, 5
      %s261 = scalar_select %p260, %s18, 5
      %s262 = smul.addr %s261, 2
      %s263 = smul.addr %s262, 4
      %s264 = scalar_lea.vmem %s6, %s263
      %v266 = vld [vmem:[%s1] sm:$0xff]
      %v267 = vld [vmem:[%s1 + $0x8] sm:$0xff]
      %v268 = vld [vmem:[%s1 + $0x10] sm:$0x1]
      %v269 = vld [vmem:[%s1 + $0x18] sm:$0x1]
      %v270 = vld [vmem:[%s254] sm:$0x77]
      %v271 = vmul.f32 %v270, 2.0
      %v272 = vsub.f32 %v271, 1.0
      %273 = vst [vmem:[%s259] sm:$0x77] %v272
      %v275 = vcombine.high %v272, %v272
      %vm277 = vcmask 1042432
      %v278 = vsel %vm277, %v272, 0.0
      %v279 = vsel %vm277, %v275, 0.0
      %281 = vrot.lane.b32.xlu0 %v279, 17
      %v282 = vpop.permute.xlu0 %281
      %285 = vrot.lane.b32.xlu0 %v278, 17
      %v286 = vpop.permute.xlu0 %285
      %vm287 = vcmask 138240
      %v288 = vsel %vm287, %v286, %v282
      %v291 = vsel %vm287, %v282, %v286
      %v292 = vlaneseq
      %v293 = vshrl.u32 %v292, 7
      %v294 = vsub.s32 0, %v293
      %v295 = vrot.slane %v266, %v294
      %v296 = vlaneseq
      %v297 = vshrl.u32 %v296, 7
      %v298 = vsub.s32 0, %v297
      %v299 = vrot.slane %v267, %v298
      %v300 = vmul.f32 %v291, %v295
      %v301 = vmul.f32 %v288, %v299
      %v302 = vpack.c.bf16 %v300, %v300
      %v303 = vpack.c.bf16 %v301, %v301
      %v306 = vunpack.c.l.b16 %v302
      %v307 = vunpack.c.l.b16 %v303
      %v308 = vpack.c.b16 %v307, %v306
      %310 = vst [vmem:[#allocation2] sm:$0xff] %v308
      %311 = vrot.lane.b32.xlu0 %v279, 16
      %v312 = vpop.permute.xlu0 %311
      %314 = vrot.lane.b32.xlu0 %v278, 16
      %v315 = vpop.permute.xlu0 %314
      %vm316 = vcmask 130048
      %v317 = vsel %vm316, %v315, %v312
      %v320 = vsel %vm316, %v312, %v315
      %v321 = vlaneseq
      %v322 = vshrl.u32 %v321, 7
      %v323 = vsub.s32 1, %v322
      %v324 = vrot.slane %v266, %v323
      %v325 = vlaneseq
      %v326 = vshrl.u32 %v325, 7
      %v327 = vsub.s32 1, %v326
      %v328 = vrot.slane %v267, %v327
      %v329 = vmul.f32 %v320, %v324
      %v330 = vmul.f32 %v317, %v328
      %v331 = vpack.c.bf16 %v329, %v329
      %v332 = vpack.c.bf16 %v330, %v330
      %v335 = vunpack.c.l.b16 %v331
      %v336 = vunpack.c.l.b16 %v332
      %v337 = vpack.c.b16 %v336, %v335
      %339 = vst [vmem:[#allocation2 + $0x8] sm:$0xff] %v337
      %340 = vrot.lane.b32.xlu0 %v279, 15
      %v341 = vpop.permute.xlu0 %340
      %343 = vrot.lane.b32.xlu0 %v278, 15
      %v344 = vpop.permute.xlu0 %343
      %vm345 = vcmask 121856
      %v346 = vsel %vm345, %v344, %v341
      %v349 = vsel %vm345, %v341, %v344
      %v350 = vlaneseq
      %v351 = vshrl.u32 %v350, 7
      %v352 = vsub.s32 2, %v351
      %v353 = vrot.slane %v266, %v352
      %v354 = vlaneseq
      %v355 = vshrl.u32 %v354, 7
      %v356 = vsub.s32 2, %v355
      %v357 = vrot.slane %v267, %v356
      %v358 = vmul.f32 %v349, %v353
      %v359 = vmul.f32 %v346, %v357
      %v360 = vpack.c.bf16 %v358, %v358
      %v361 = vpack.c.bf16 %v359, %v359
      %v364 = vunpack.c.l.b16 %v360
      %v365 = vunpack.c.l.b16 %v361
      %v366 = vpack.c.b16 %v365, %v364
      %368 = vst [vmem:[#allocation2 + $0x10] sm:$0xff] %v366
      %369 = vrot.lane.b32.xlu0 %v279, 1
      %v370 = vpop.permute.xlu0 %369
      %372 = vrot.lane.b32.xlu0 %v278, 1
      %v373 = vpop.permute.xlu0 %372
      %vm374 = vcmask 7168
      %v375 = vsel %vm374, %v373, %v370
      %v378 = vsel %vm374, %v370, %v373
      %v379 = vlaneseq
      %v380 = vshrl.u32 %v379, 7
      %v381 = vsub.s32 3, %v380
      %v382 = vrot.slane %v266, %v381
      %v383 = vlaneseq
      %v384 = vshrl.u32 %v383, 7
      %v385 = vsub.s32 3, %v384
      %v386 = vrot.slane %v267, %v385
      %v387 = vmul.f32 %v378, %v382
      %v388 = vmul.f32 %v375, %v386
      %v389 = vpack.c.bf16 %v387, %v387
      %v390 = vpack.c.bf16 %v388, %v388
      %v393 = vunpack.c.l.b16 %v389
      %v394 = vunpack.c.l.b16 %v390
      %v395 = vpack.c.b16 %v394, %v393
      %397 = vst [vmem:[#allocation2 + $0x18] sm:$0xff] %v395
      %v398 = vlaneseq
      %v399 = vshrl.u32 %v398, 7
      %v400 = vsub.s32 4, %v399
      %v401 = vrot.slane %v266, %v400
      %v402 = vlaneseq
      %v403 = vshrl.u32 %v402, 7
      %v404 = vsub.s32 4, %v403
      %v405 = vrot.slane %v267, %v404
      %v406 = vmul.f32 %v278, %v401
      %v407 = vmul.f32 %v279, %v405
      %v408 = vpack.c.bf16 %v406, %v406
      %v409 = vpack.c.bf16 %v407, %v407
      %v412 = vunpack.c.l.b16 %v408
      %v413 = vunpack.c.l.b16 %v409
      %v414 = vpack.c.b16 %v413, %v412
      %416 = vst [vmem:[#allocation2 + $0x20] sm:$0xff] %v414
      %417 = vrot.lane.b32.xlu0 %v278, 127
      %v418 = vpop.permute.xlu0 %417
      %419 = vrot.lane.b32.xlu0 %v279, 127
      %v420 = vpop.permute.xlu0 %419
      %vm421 = vcmask 1039360
      %v422 = vsel %vm421, %v418, %v420
      %v426 = vsel %vm421, %v420, %v418
      %v427 = vlaneseq
      %v428 = vshrl.u32 %v427, 7
      %v429 = vsub.s32 5, %v428
      %v430 = vrot.slane %v266, %v429
      %v431 = vlaneseq
      %v432 = vshrl.u32 %v431, 7
      %v433 = vsub.s32 5, %v432
      %v434 = vrot.slane %v267, %v433
      %v435 = vmul.f32 %v422, %v430
      %v436 = vmul.f32 %v426, %v434
      %v437 = vpack.c.bf16 %v435, %v435
      %v438 = vpack.c.bf16 %v436, %v436
      %v441 = vunpack.c.l.b16 %v437
      %v442 = vunpack.c.l.b16 %v438
      %v443 = vpack.c.b16 %v442, %v441
      %445 = vst [vmem:[#allocation2 + $0x28] sm:$0xff] %v443
      %446 = vrot.lane.b32.xlu0 %v278, 113
      %v447 = vpop.permute.xlu0 %446
      %448 = vrot.lane.b32.xlu0 %v279, 113
      %v449 = vpop.permute.xlu0 %448
      %vm450 = vcmask 924672
      %v451 = vsel %vm450, %v447, %v449
      %v455 = vsel %vm450, %v449, %v447
      %v456 = vlaneseq
      %v457 = vshrl.u32 %v456, 7
      %v458 = vsub.s32 6, %v457
      %v459 = vrot.slane %v266, %v458
      %v460 = vlaneseq
      %v461 = vshrl.u32 %v460, 7
      %v462 = vsub.s32 6, %v461
      %v463 = vrot.slane %v267, %v462
      %v464 = vmul.f32 %v451, %v459
      %v465 = vmul.f32 %v455, %v463
      %v466 = vpack.c.bf16 %v464, %v464
      %v467 = vpack.c.bf16 %v465, %v465
      %v470 = vunpack.c.l.b16 %v466
      %v471 = vunpack.c.l.b16 %v467
      %v472 = vpack.c.b16 %v471, %v470
      %474 = vst [vmem:[#allocation2 + $0x30] sm:$0xff] %v472
      %475 = vrot.lane.b32.xlu0 %v278, 112
      %v476 = vpop.permute.xlu0 %475
      %477 = vrot.lane.b32.xlu0 %v279, 112
      %v478 = vpop.permute.xlu0 %477
      %vm479 = vcmask 916480
      %v480 = vsel %vm479, %v476, %v478
      %v484 = vsel %vm479, %v478, %v476
      %v485 = vlaneseq
      %v486 = vshrl.u32 %v485, 7
      %v487 = vsub.s32 7, %v486
      %v488 = vrot.slane %v266, %v487
      %v489 = vlaneseq
      %v490 = vshrl.u32 %v489, 7
      %v491 = vsub.s32 7, %v490
      %v492 = vrot.slane %v267, %v491
      %v493 = vmul.f32 %v480, %v488
      %v494 = vmul.f32 %v484, %v492
      %v495 = vpack.c.bf16 %v493, %v493
      %v496 = vpack.c.bf16 %v494, %v494
      %v499 = vunpack.c.l.b16 %v495
      %v500 = vunpack.c.l.b16 %v496
      %v501 = vpack.c.b16 %v500, %v499
      %503 = vst [vmem:[#allocation2 + $0x38] sm:$0xff] %v501
      %504 = vrot.lane.b32.xlu0 %v278, 111
      %v505 = vpop.permute.xlu0 %504
      %506 = vrot.lane.b32.xlu0 %v279, 111
      %v507 = vpop.permute.xlu0 %506
      %vm508 = vcmask 908288
      %v509 = vsel %vm508, %v505, %v507
      %v513 = vsel %vm508, %v507, %v505
      %v514 = vlaneseq
      %v515 = vshrl.u32 %v514, 7
      %v516 = vsub.s32 0, %v515
      %v517 = vrot.slane %v268, %v516
      %v518 = vlaneseq
      %v519 = vshrl.u32 %v518, 7
      %v520 = vsub.s32 0, %v519
      %v521 = vrot.slane %v269, %v520
      %v522 = vmul.f32 %v509, %v517
      %v523 = vmul.f32 %v513, %v521
      %v524 = vpack.c.bf16 %v522, %v522
      %v525 = vpack.c.bf16 %v523, %v523
      %v528 = vunpack.c.l.b16 %v524
      %v529 = vunpack.c.l.b16 %v525
      %v530 = vpack.c.b16 %v529, %v528
      %532 = vst [vmem:[#allocation2 + $0x40] sm:$0xff] %v530
      %vm533 = vcmask 1040384
      %v534 = vsel %vm533, 1.0, 0.0
      %v535 = vpack.c.bf16 %v534, %v534
      %v537 = vunpack.c.l.b16 %v535
      %v538 = vpack.c.b16 %v537, %v537
      %540 = vst [vmem:[#allocation2 + $0x48] sm:$0xff] %v538
      %v541 = vld [vmem:[%s2] sm:$0xf]
      %v542 = vld [vmem:[%s2 + $0x4] sm:$0xf]
      %v543 = vld [vmem:[#allocation2] sm:$0xff]
      %v544 = vld [vmem:[#allocation2 + $0x8] sm:$0xff]
      %v545 = vld [vmem:[#allocation2 + $0x10] sm:$0xff]
      %v546 = vld [vmem:[#allocation2 + $0x18] sm:$0xff]
      %v547 = vld [vmem:[#allocation2 + $0x20] sm:$0xff]
      %v548 = vld [vmem:[#allocation2 + $0x28] sm:$0xff]
      %v549 = vld [vmem:[#allocation2 + $0x30] sm:$0xff]
      %v550 = vld [vmem:[#allocation2 + $0x38] sm:$0xff]
      %v551 = vld [vmem:[#allocation2 + $0x40] sm:$0xff]
      %v552 = vld [vmem:[#allocation2 + $0x48] sm:$0xff]
      %v555 = vunpack.c.l.b16 %v541
      %v556 = vunpack.c.l.b16 %v542
      %v557 = vpack.c.b16 %v556, %v555
      %v568 = vunpack.c.l.b16 %v543
      %v569 = vunpack.c.h.b16 %v543
      %v570 = vunpack.c.l.b16 %v544
      %v571 = vunpack.c.h.b16 %v544
      %v572 = vunpack.c.l.b16 %v545
      %v573 = vunpack.c.h.b16 %v545
      %v574 = vunpack.c.l.b16 %v546
      %v575 = vunpack.c.h.b16 %v546
      %v576 = vunpack.c.l.b16 %v547
      %v577 = vunpack.c.h.b16 %v547
      %v578 = vunpack.c.l.b16 %v548
      %v579 = vunpack.c.h.b16 %v548
      %v580 = vunpack.c.l.b16 %v549
      %v581 = vunpack.c.h.b16 %v549
      %v582 = vunpack.c.l.b16 %v550
      %v583 = vunpack.c.h.b16 %v550
      %v584 = vunpack.c.l.b16 %v551
      %v585 = vunpack.c.h.b16 %v551
      %v586 = vunpack.c.l.b16 %v552
      %v587 = vunpack.c.h.b16 %v552
      %v588 = vpack.c.b16 %v570, %v568
      %v589 = vpack.c.b16 %v571, %v569
      %v590 = vpack.c.b16 %v574, %v572
      %v591 = vpack.c.b16 %v575, %v573
      %v592 = vpack.c.b16 %v578, %v576
      %v593 = vpack.c.b16 %v579, %v577
      %v594 = vpack.c.b16 %v582, %v580
      %v595 = vpack.c.b16 %v583, %v581
      %v596 = vpack.c.b16 %v586, %v584
      %v597 = vpack.c.b16 %v587, %v585
      %vm608 = vcmask 654336
      %v610 = vsel %vm608, %v557, 0
      %612 = vmatprep.subr.bf16.mxu0 0
      %613 = vmatpush1.bf16.msra.mxu0 0
      %614 = vmatprep.subr.bf16.mxu0 0
      %615 = vmatpush1.bf16.msra.mxu0 0
      %616 = vmatprep.subr.bf16.mxu0 0
      %617 = vmatpush1.bf16.msra.mxu0 0
      %618 = vmatprep.subr.bf16.mxu0 %v597
      %619 = vmatpush1.bf16.msra.mxu0 %v596
      %620 = vmatprep.subr.bf16.mxu0 %v595
      %621 = vmatpush1.bf16.msra.mxu0 %v594
      %622 = vmatprep.subr.bf16.mxu0 %v593
      %623 = vmatpush1.bf16.msra.mxu0 %v592
      %624 = vmatprep.subr.bf16.mxu0 %v591
      %625 = vmatpush1.bf16.msra.mxu0 %v590
      %626 = vmatprep.subr.bf16.mxu0 %v589
      %627 = vmatpush1.bf16.msra.mxu0 %v588
      %628 = vmatprep.subr.bf16.mxu0 0
      %629 = vmatpush2.bf16.msra.mxu0 0
      %630 = vmatprep.subr.bf16.mxu0 0
      %631 = vmatpush2.bf16.msra.mxu0 0
      %632 = vmatprep.subr.bf16.mxu0 0
      %633 = vmatpush2.bf16.msra.mxu0 0
      %634 = vmatprep.subr.bf16.mxu0 0
      %635 = vmatpush2.bf16.msra.mxu0 0
      %636 = vmatprep.subr.bf16.mxu0 0
      %637 = vmatpush2.bf16.msra.mxu0 0
      %638 = vmatprep.subr.bf16.mxu0 0
      %639 = vmatpush2.bf16.msra.mxu0 0
      %640 = vmatprep.subr.bf16.mxu0 0
      %641 = vmatpush2.bf16.msra.mxu0 0
      %642 = vmatprep.subr.bf16.mxu0 0
      %643 = vmatpush2.bf16.msra.mxu0 0
      %644 = vmatprep.mubr.bf16.mxu0 0
      %645 = vmatmul.mubr.bf16.gmra.mxu0 %v610
      %v646 = vpop.f32.mrf.mxu0
      %v647 = vadd.f32 0.0, %v646
      %v648 = vpop.f32.mrf.mxu0
      %v649 = vadd.f32 0.0, %v648
      %v650 = vpop.f32.mrf.mxu0
      %v651 = vadd.f32 0.0, %v650
      %v652 = vpop.f32.mrf.mxu0
      %v653 = vadd.f32 0.0, %v652
      %654 = vdwg.mxu0
      %v655 = vmax.f32 %v647, 0.0
      %v656 = vmax.f32 %v649, 0.0
      %v657 = vmax.f32 %v651, 0.0
      %v658 = vmax.f32 %v653, 0.0
      %661 = vrot.lane.b32.xlu0 %v656, 17
      %v662 = vpop.permute.xlu0 %661
      %663 = vrot.lane.b32.xlu0 %v658, 17
      %v664 = vpop.permute.xlu0 %663
      %669 = vrot.lane.b32.xlu0 %v655, 17
      %v670 = vpop.permute.xlu0 %669
      %671 = vrot.lane.b32.xlu0 %v657, 17
      %v672 = vpop.permute.xlu0 %671
      %v673 = vsel %vm287, %v670, %v662
      %v674 = vsel %vm287, %v672, %v664
      %v679 = vsel %vm287, %v662, %v670
      %v680 = vsel %vm287, %v664, %v672
      %v681 = vmul.f32 %v679, %v295
      %v682 = vmul.f32 %v673, %v299
      %v683 = vmul.f32 %v680, %v295
      %v684 = vmul.f32 %v674, %v299
      %v685 = vpack.c.bf16 %v683, %v681
      %v686 = vpack.c.bf16 %v684, %v682
      %v689 = vunpack.c.l.b16 %v685
      %v690 = vunpack.c.l.b16 %v686
      %v691 = vunpack.c.h.b16 %v685
      %v692 = vunpack.c.h.b16 %v686
      %v693 = vpack.c.b16 %v690, %v689
      %v694 = vpack.c.b16 %v692, %v691
      %697 = vst [vmem:[#allocation2] sm:$0xff] %v693
      %698 = vst [vmem:[#allocation2 + $0x8] sm:$0xff] %v694
      %699 = vrot.lane.b32.xlu0 %v656, 16
      %v700 = vpop.permute.xlu0 %699
      %701 = vrot.lane.b32.xlu0 %v658, 16
      %v702 = vpop.permute.xlu0 %701
      %705 = vrot.lane.b32.xlu0 %v655, 16
      %v706 = vpop.permute.xlu0 %705
      %707 = vrot.lane.b32.xlu0 %v657, 16
      %v708 = vpop.permute.xlu0 %707
      %v709 = vsel %vm316, %v706, %v700
      %v710 = vsel %vm316, %v708, %v702
      %v715 = vsel %vm316, %v700, %v706
      %v716 = vsel %vm316, %v702, %v708
      %v717 = vmul.f32 %v715, %v324
      %v718 = vmul.f32 %v709, %v328
      %v719 = vmul.f32 %v716, %v324
      %v720 = vmul.f32 %v710, %v328
      %v721 = vpack.c.bf16 %v719, %v717
      %v722 = vpack.c.bf16 %v720, %v718
      %v725 = vunpack.c.l.b16 %v721
      %v726 = vunpack.c.l.b16 %v722
      %v727 = vunpack.c.h.b16 %v721
      %v728 = vunpack.c.h.b16 %v722
      %v729 = vpack.c.b16 %v726, %v725
      %v730 = vpack.c.b16 %v728, %v727
      %733 = vst [vmem:[#allocation2 + $0x10] sm:$0xff] %v729
      %734 = vst [vmem:[#allocation2 + $0x18] sm:$0xff] %v730
      %735 = vrot.lane.b32.xlu0 %v656, 15
      %v736 = vpop.permute.xlu0 %735
      %737 = vrot.lane.b32.xlu0 %v658, 15
      %v738 = vpop.permute.xlu0 %737
      %741 = vrot.lane.b32.xlu0 %v655, 15
      %v742 = vpop.permute.xlu0 %741
      %743 = vrot.lane.b32.xlu0 %v657, 15
      %v744 = vpop.permute.xlu0 %743
      %v745 = vsel %vm345, %v742, %v736
      %v746 = vsel %vm345, %v744, %v738
      %v751 = vsel %vm345, %v736, %v742
      %v752 = vsel %vm345, %v738, %v744
      %v753 = vmul.f32 %v751, %v353
      %v754 = vmul.f32 %v745, %v357
      %v755 = vmul.f32 %v752, %v353
      %v756 = vmul.f32 %v746, %v357
      %v757 = vpack.c.bf16 %v755, %v753
      %v758 = vpack.c.bf16 %v756, %v754
      %v761 = vunpack.c.l.b16 %v757
      %v762 = vunpack.c.l.b16 %v758
      %v763 = vunpack.c.h.b16 %v757
      %v764 = vunpack.c.h.b16 %v758
      %v765 = vpack.c.b16 %v762, %v761
      %v766 = vpack.c.b16 %v764, %v763
      %769 = vst [vmem:[#allocation2 + $0x20] sm:$0xff] %v765
      %770 = vst [vmem:[#allocation2 + $0x28] sm:$0xff] %v766
      %771 = vrot.lane.b32.xlu0 %v656, 1
      %v772 = vpop.permute.xlu0 %771
      %773 = vrot.lane.b32.xlu0 %v658, 1
      %v774 = vpop.permute.xlu0 %773
      %777 = vrot.lane.b32.xlu0 %v655, 1
      %v778 = vpop.permute.xlu0 %777
      %779 = vrot.lane.b32.xlu0 %v657, 1
      %v780 = vpop.permute.xlu0 %779
      %v781 = vsel %vm374, %v778, %v772
      %v782 = vsel %vm374, %v780, %v774
      %v787 = vsel %vm374, %v772, %v778
      %v788 = vsel %vm374, %v774, %v780
      %v789 = vmul.f32 %v787, %v382
      %v790 = vmul.f32 %v781, %v386
      %v791 = vmul.f32 %v788, %v382
      %v792 = vmul.f32 %v782, %v386
      %v793 = vpack.c.bf16 %v791, %v789
      %v794 = vpack.c.bf16 %v792, %v790
      %v797 = vunpack.c.l.b16 %v793
      %v798 = vunpack.c.l.b16 %v794
      %v799 = vunpack.c.h.b16 %v793
      %v800 = vunpack.c.h.b16 %v794
      %v801 = vpack.c.b16 %v798, %v797
      %v802 = vpack.c.b16 %v800, %v799
      %805 = vst [vmem:[#allocation2 + $0x30] sm:$0xff] %v801
      %806 = vst [vmem:[#allocation2 + $0x38] sm:$0xff] %v802
      %v807 = vmul.f32 %v655, %v401
      %v808 = vmul.f32 %v656, %v405
      %v809 = vmul.f32 %v657, %v401
      %v810 = vmul.f32 %v658, %v405
      %v811 = vpack.c.bf16 %v809, %v807
      %v812 = vpack.c.bf16 %v810, %v808
      %v815 = vunpack.c.l.b16 %v811
      %v816 = vunpack.c.l.b16 %v812
      %v817 = vunpack.c.h.b16 %v811
      %v818 = vunpack.c.h.b16 %v812
      %v819 = vpack.c.b16 %v816, %v815
      %v820 = vpack.c.b16 %v818, %v817
      %823 = vst [vmem:[#allocation2 + $0x40] sm:$0xff] %v819
      %824 = vst [vmem:[#allocation2 + $0x48] sm:$0xff] %v820
      %825 = vrot.lane.b32.xlu0 %v655, 127
      %v826 = vpop.permute.xlu0 %825
      %827 = vrot.lane.b32.xlu0 %v656, 127
      %v828 = vpop.permute.xlu0 %827
      %829 = vrot.lane.b32.xlu0 %v657, 127
      %v830 = vpop.permute.xlu0 %829
      %831 = vrot.lane.b32.xlu0 %v658, 127
      %v832 = vpop.permute.xlu0 %831
      %v833 = vsel %vm421, %v826, %v828
      %v834 = vsel %vm421, %v830, %v832
      %v841 = vsel %vm421, %v828, %v826
      %v842 = vsel %vm421, %v832, %v830
      %v843 = vmul.f32 %v833, %v430
      %v844 = vmul.f32 %v841, %v434
      %v845 = vmul.f32 %v834, %v430
      %v846 = vmul.f32 %v842, %v434
      %v847 = vpack.c.bf16 %v845, %v843
      %v848 = vpack.c.bf16 %v846, %v844
      %v851 = vunpack.c.l.b16 %v847
      %v852 = vunpack.c.l.b16 %v848
      %v853 = vunpack.c.h.b16 %v847
      %v854 = vunpack.c.h.b16 %v848
      %v855 = vpack.c.b16 %v852, %v851
      %v856 = vpack.c.b16 %v854, %v853
      %859 = vst [vmem:[#allocation2 + $0x50] sm:$0xff] %v855
      %860 = vst [vmem:[#allocation2 + $0x58] sm:$0xff] %v856
      %861 = vrot.lane.b32.xlu0 %v655, 113
      %v862 = vpop.permute.xlu0 %861
      %863 = vrot.lane.b32.xlu0 %v656, 113
      %v864 = vpop.permute.xlu0 %863
      %865 = vrot.lane.b32.xlu0 %v657, 113
      %v866 = vpop.permute.xlu0 %865
      %867 = vrot.lane.b32.xlu0 %v658, 113
      %v868 = vpop.permute.xlu0 %867
      %v869 = vsel %vm450, %v862, %v864
      %v870 = vsel %vm450, %v866, %v868
      %v877 = vsel %vm450, %v864, %v862
      %v878 = vsel %vm450, %v868, %v866
      %v879 = vmul.f32 %v869, %v459
      %v880 = vmul.f32 %v877, %v463
      %v881 = vmul.f32 %v870, %v459
      %v882 = vmul.f32 %v878, %v463
      %v883 = vpack.c.bf16 %v881, %v879
      %v884 = vpack.c.bf16 %v882, %v880
      %v887 = vunpack.c.l.b16 %v883
      %v888 = vunpack.c.l.b16 %v884
      %v889 = vunpack.c.h.b16 %v883
      %v890 = vunpack.c.h.b16 %v884
      %v891 = vpack.c.b16 %v888, %v887
      %v892 = vpack.c.b16 %v890, %v889
      %895 = vst [vmem:[#allocation2 + $0x60] sm:$0xff] %v891
      %896 = vst [vmem:[#allocation2 + $0x68] sm:$0xff] %v892
      %897 = vrot.lane.b32.xlu0 %v655, 112
      %v898 = vpop.permute.xlu0 %897
      %899 = vrot.lane.b32.xlu0 %v656, 112
      %v900 = vpop.permute.xlu0 %899
      %901 = vrot.lane.b32.xlu0 %v657, 112
      %v902 = vpop.permute.xlu0 %901
      %903 = vrot.lane.b32.xlu0 %v658, 112
      %v904 = vpop.permute.xlu0 %903
      %v905 = vsel %vm479, %v898, %v900
      %v906 = vsel %vm479, %v902, %v904
      %v913 = vsel %vm479, %v900, %v898
      %v914 = vsel %vm479, %v904, %v902
      %v915 = vmul.f32 %v905, %v488
      %v916 = vmul.f32 %v913, %v492
      %v917 = vmul.f32 %v906, %v488
      %v918 = vmul.f32 %v914, %v492
      %v919 = vpack.c.bf16 %v917, %v915
      %v920 = vpack.c.bf16 %v918, %v916
      %v923 = vunpack.c.l.b16 %v919
      %v924 = vunpack.c.l.b16 %v920
      %v925 = vunpack.c.h.b16 %v919
      %v926 = vunpack.c.h.b16 %v920
      %v927 = vpack.c.b16 %v924, %v923
      %v928 = vpack.c.b16 %v926, %v925
      %931 = vst [vmem:[#allocation2 + $0x70] sm:$0xff] %v927
      %932 = vst [vmem:[#allocation2 + $0x78] sm:$0xff] %v928
      %933 = vrot.lane.b32.xlu0 %v655, 111
      %v934 = vpop.permute.xlu0 %933
      %935 = vrot.lane.b32.xlu0 %v656, 111
      %v936 = vpop.permute.xlu0 %935
      %937 = vrot.lane.b32.xlu0 %v657, 111
      %v938 = vpop.permute.xlu0 %937
      %939 = vrot.lane.b32.xlu0 %v658, 111
      %v940 = vpop.permute.xlu0 %939
      %v941 = vsel %vm508, %v934, %v936
      %v942 = vsel %vm508, %v938, %v940
      %v949 = vsel %vm508, %v936, %v934
      %v950 = vsel %vm508, %v940, %v938
      %v951 = vmul.f32 %v941, %v517
      %v952 = vmul.f32 %v949, %v521
      %v953 = vmul.f32 %v942, %v517
      %v954 = vmul.f32 %v950, %v521
      %v955 = vpack.c.bf16 %v953, %v951
      %v956 = vpack.c.bf16 %v954, %v952
      %v959 = vunpack.c.l.b16 %v955
      %v960 = vunpack.c.l.b16 %v956
      %v961 = vunpack.c.h.b16 %v955
      %v962 = vunpack.c.h.b16 %v956
      %v963 = vpack.c.b16 %v960, %v959
      %v964 = vpack.c.b16 %v962, %v961
      %967 = vst [vmem:[#allocation2 + $0x80] sm:$0xff] %v963
      %968 = vst [vmem:[#allocation2 + $0x88] sm:$0xff] %v964
      %969 = vst [vmem:[#allocation2 + $0x90] sm:$0xff] %v538
      %v970 = vld [vmem:[%s3] sm:$0xff]
      %v971 = vld [vmem:[%s3 + $0x8] sm:$0xff]
      %v972 = vld [vmem:[#allocation2] sm:$0xff]
      %v973 = vld [vmem:[#allocation2 + $0x8] sm:$0xff]
      %v974 = vld [vmem:[#allocation2 + $0x10] sm:$0xff]
      %v975 = vld [vmem:[#allocation2 + $0x18] sm:$0xff]
      %v976 = vld [vmem:[#allocation2 + $0x20] sm:$0xff]
      %v977 = vld [vmem:[#allocation2 + $0x28] sm:$0xff]
      %v978 = vld [vmem:[#allocation2 + $0x30] sm:$0xff]
      %v979 = vld [vmem:[#allocation2 + $0x38] sm:$0xff]
      %v980 = vld [vmem:[#allocation2 + $0x40] sm:$0xff]
      %v981 = vld [vmem:[#allocation2 + $0x48] sm:$0xff]
      %v982 = vld [vmem:[#allocation2 + $0x50] sm:$0xff]
      %v983 = vld [vmem:[#allocation2 + $0x58] sm:$0xff]
      %v984 = vld [vmem:[#allocation2 + $0x60] sm:$0xff]
      %v985 = vld [vmem:[#allocation2 + $0x68] sm:$0xff]
      %v986 = vld [vmem:[#allocation2 + $0x70] sm:$0xff]
      %v987 = vld [vmem:[#allocation2 + $0x78] sm:$0xff]
      %v988 = vld [vmem:[#allocation2 + $0x80] sm:$0xff]
      %v989 = vld [vmem:[#allocation2 + $0x88] sm:$0xff]
      %v990 = vld [vmem:[#allocation2 + $0x90] sm:$0xff]
      %v993 = vunpack.c.l.b16 %v970
      %v994 = vunpack.c.h.b16 %v970
      %v995 = vunpack.c.l.b16 %v971
      %v996 = vunpack.c.h.b16 %v971
      %v997 = vpack.c.b16 %v995, %v993
      %v998 = vpack.c.b16 %v996, %v994
      %v1019 = vunpack.c.l.b16 %v972
      %v1020 = vunpack.c.h.b16 %v972
      %v1021 = vunpack.c.l.b16 %v973
      %v1022 = vunpack.c.h.b16 %v973
      %v1023 = vunpack.c.l.b16 %v974
      %v1024 = vunpack.c.h.b16 %v974
      %v1025 = vunpack.c.l.b16 %v975
      %v1026 = vunpack.c.h.b16 %v975
      %v1027 = vunpack.c.l.b16 %v976
      %v1028 = vunpack.c.h.b16 %v976
      %v1029 = vunpack.c.l.b16 %v977
      %v1030 = vunpack.c.h.b16 %v977
      %v1031 = vunpack.c.l.b16 %v978
      %v1032 = vunpack.c.h.b16 %v978
      %v1033 = vunpack.c.l.b16 %v979
      %v1034 = vunpack.c.h.b16 %v979
      %v1035 = vunpack.c.l.b16 %v980
      %v1036 = vunpack.c.h.b16 %v980
      %v1037 = vunpack.c.l.b16 %v981
      %v1038 = vunpack.c.h.b16 %v981
      %v1039 = vunpack.c.l.b16 %v982
      %v1040 = vunpack.c.h.b16 %v982
      %v1041 = vunpack.c.l.b16 %v983
      %v1042 = vunpack.c.h.b16 %v983
      %v1043 = vunpack.c.l.b16 %v984
      %v1044 = vunpack.c.h.b16 %v984
      %v1045 = vunpack.c.l.b16 %v985
      %v1046 = vunpack.c.h.b16 %v985
      %v1047 = vunpack.c.l.b16 %v986
      %v1048 = vunpack.c.h.b16 %v986
      %v1049 = vunpack.c.l.b16 %v987
      %v1050 = vunpack.c.h.b16 %v987
      %v1051 = vunpack.c.l.b16 %v988
      %v1052 = vunpack.c.h.b16 %v988
      %v1053 = vunpack.c.l.b16 %v989
      %v1054 = vunpack.c.h.b16 %v989
      %v1055 = vunpack.c.l.b16 %v990
      %v1056 = vunpack.c.h.b16 %v990
      %v1057 = vpack.c.b16 %v1021, %v1019
      %v1058 = vpack.c.b16 %v1022, %v1020
      %v1059 = vpack.c.b16 %v1025, %v1023
      %v1060 = vpack.c.b16 %v1026, %v1024
      %v1061 = vpack.c.b16 %v1029, %v1027
      %v1062 = vpack.c.b16 %v1030, %v1028
      %v1063 = vpack.c.b16 %v1033, %v1031
      %v1064 = vpack.c.b16 %v1034, %v1032
      %v1065 = vpack.c.b16 %v1037, %v1035
      %v1066 = vpack.c.b16 %v1038, %v1036
      %v1067 = vpack.c.b16 %v1041, %v1039
      %v1068 = vpack.c.b16 %v1042, %v1040
      %v1069 = vpack.c.b16 %v1045, %v1043
      %v1070 = vpack.c.b16 %v1046, %v1044
      %v1071 = vpack.c.b16 %v1049, %v1047
      %v1072 = vpack.c.b16 %v1050, %v1048
      %v1073 = vpack.c.b16 %v1053, %v1051
      %v1074 = vpack.c.b16 %v1054, %v1052
      %v1075 = vpack.c.b16 %v1055, %v1055
      %v1076 = vpack.c.b16 %v1056, %v1056
      %vm1095 = vcmask 195584
      %v1097 = vsel %vm1095, %v998, 0
      %vm1099 = vcmask 1043456
      %v1101 = vsel %vm1099, %v1075, 0
      %v1104 = vsel %vm1099, %v1076, 0
      %1106 = vmatprep.subr.bf16.mxu0 %v1072
      %1107 = vmatpush1.bf16.msra.mxu0 %v1071
      %1108 = vmatprep.subr.bf16.mxu0 %v1070
      %1109 = vmatpush1.bf16.msra.mxu0 %v1069
      %1110 = vmatprep.subr.bf16.mxu0 %v1068
      %1111 = vmatpush1.bf16.msra.mxu0 %v1067
      %1112 = vmatprep.subr.bf16.mxu0 %v1066
      %1113 = vmatpush1.bf16.msra.mxu0 %v1065
      %1114 = vmatprep.subr.bf16.mxu0 %v1064
      %1115 = vmatpush1.bf16.msra.mxu0 %v1063
      %1116 = vmatprep.subr.bf16.mxu0 %v1062
      %1117 = vmatpush1.bf16.msra.mxu0 %v1061
      %1118 = vmatprep.subr.bf16.mxu0 %v1060
      %1119 = vmatpush1.bf16.msra.mxu0 %v1059
      %1120 = vmatprep.subr.bf16.mxu0 %v1058
      %1121 = vmatpush1.bf16.msra.mxu0 %v1057
      %1122 = vmatprep.subr.bf16.mxu0 0
      %1123 = vmatpush2.bf16.msra.mxu0 0
      %1124 = vmatprep.subr.bf16.mxu0 0
      %1125 = vmatpush2.bf16.msra.mxu0 0
      %1126 = vmatprep.subr.bf16.mxu0 0
      %1127 = vmatpush2.bf16.msra.mxu0 0
      %1128 = vmatprep.subr.bf16.mxu0 0
      %1129 = vmatpush2.bf16.msra.mxu0 0
      %1130 = vmatprep.subr.bf16.mxu0 0
      %1131 = vmatpush2.bf16.msra.mxu0 0
      %1132 = vmatprep.subr.bf16.mxu0 0
      %1133 = vmatpush2.bf16.msra.mxu0 0
      %1134 = vmatprep.subr.bf16.mxu0 %v1104
      %1135 = vmatpush2.bf16.msra.mxu0 %v1101
      %1136 = vmatprep.subr.bf16.mxu0 %v1074
      %1137 = vmatpush2.bf16.msra.mxu0 %v1073
      %1138 = vmatprep.mubr.bf16.mxu0 %v1097
      %1139 = vmatmul.mubr.bf16.gmra.mxu0 %v997
      %v1140 = vpop.f32.mrf.mxu0
      %v1141 = vadd.f32 0.0, %v1140
      %v1142 = vpop.f32.mrf.mxu0
      %v1143 = vadd.f32 0.0, %v1142
      %v1144 = vpop.f32.mrf.mxu0
      %v1145 = vadd.f32 0.0, %v1144
      %v1146 = vpop.f32.mrf.mxu0
      %v1147 = vadd.f32 0.0, %v1146
      %1148 = vdwg.mxu0
      %v1149 = vmax.f32 %v1141, 0.0
      %v1150 = vmax.f32 %v1143, 0.0
      %v1151 = vmax.f32 %v1145, 0.0
      %v1152 = vmax.f32 %v1147, 0.0
      %1155 = vrot.lane.b32.xlu0 %v1150, 17
      %v1156 = vpop.permute.xlu0 %1155
      %1157 = vrot.lane.b32.xlu0 %v1152, 17
      %v1158 = vpop.permute.xlu0 %1157
      %1163 = vrot.lane.b32.xlu0 %v1149, 17
      %v1164 = vpop.permute.xlu0 %1163
      %1165 = vrot.lane.b32.xlu0 %v1151, 17
      %v1166 = vpop.permute.xlu0 %1165
      %v1167 = vsel %vm287, %v1164, %v1156
      %v1168 = vsel %vm287, %v1166, %v1158
      %v1173 = vsel %vm287, %v1156, %v1164
      %v1174 = vsel %vm287, %v1158, %v1166
      %v1175 = vmul.f32 %v1173, %v295
      %v1176 = vmul.f32 %v1167, %v299
      %v1177 = vmul.f32 %v1174, %v295
      %v1178 = vmul.f32 %v1168, %v299
      %v1179 = vpack.c.bf16 %v1177, %v1175
      %v1180 = vpack.c.bf16 %v1178, %v1176
      %v1183 = vunpack.c.l.b16 %v1179
      %v1184 = vunpack.c.l.b16 %v1180
      %v1185 = vunpack.c.h.b16 %v1179
      %v1186 = vunpack.c.h.b16 %v1180
      %v1187 = vpack.c.b16 %v1184, %v1183
      %v1188 = vpack.c.b16 %v1186, %v1185
      %1191 = vst [vmem:[#allocation2] sm:$0xff] %v1187
      %1192 = vst [vmem:[#allocation2 + $0x8] sm:$0xff] %v1188
      %1193 = vrot.lane.b32.xlu0 %v1150, 16
      %v1194 = vpop.permute.xlu0 %1193
      %1195 = vrot.lane.b32.xlu0 %v1152, 16
      %v1196 = vpop.permute.xlu0 %1195
      %1199 = vrot.lane.b32.xlu0 %v1149, 16
      %v1200 = vpop.permute.xlu0 %1199
      %1201 = vrot.lane.b32.xlu0 %v1151, 16
      %v1202 = vpop.permute.xlu0 %1201
      %v1203 = vsel %vm316, %v1200, %v1194
      %v1204 = vsel %vm316, %v1202, %v1196
      %v1209 = vsel %vm316, %v1194, %v1200
      %v1210 = vsel %vm316, %v1196, %v1202
      %v1211 = vmul.f32 %v1209, %v324
      %v1212 = vmul.f32 %v1203, %v328
      %v1213 = vmul.f32 %v1210, %v324
      %v1214 = vmul.f32 %v1204, %v328
      %v1215 = vpack.c.bf16 %v1213, %v1211
      %v1216 = vpack.c.bf16 %v1214, %v1212
      %v1219 = vunpack.c.l.b16 %v1215
      %v1220 = vunpack.c.l.b16 %v1216
      %v1221 = vunpack.c.h.b16 %v1215
      %v1222 = vunpack.c.h.b16 %v1216
      %v1223 = vpack.c.b16 %v1220, %v1219
      %v1224 = vpack.c.b16 %v1222, %v1221
      %1227 = vst [vmem:[#allocation2 + $0x10] sm:$0xff] %v1223
      %1228 = vst [vmem:[#allocation2 + $0x18] sm:$0xff] %v1224
      %1229 = vrot.lane.b32.xlu0 %v1150, 15
      %v1230 = vpop.permute.xlu0 %1229
      %1231 = vrot.lane.b32.xlu0 %v1152, 15
      %v1232 = vpop.permute.xlu0 %1231
      %1235 = vrot.lane.b32.xlu0 %v1149, 15
      %v1236 = vpop.permute.xlu0 %1235
      %1237 = vrot.lane.b32.xlu0 %v1151, 15
      %v1238 = vpop.permute.xlu0 %1237
      %v1239 = vsel %vm345, %v1236, %v1230
      %v1240 = vsel %vm345, %v1238, %v1232
      %v1245 = vsel %vm345, %v1230, %v1236
      %v1246 = vsel %vm345, %v1232, %v1238
      %v1247 = vmul.f32 %v1245, %v353
      %v1248 = vmul.f32 %v1239, %v357
      %v1249 = vmul.f32 %v1246, %v353
      %v1250 = vmul.f32 %v1240, %v357
      %v1251 = vpack.c.bf16 %v1249, %v1247
      %v1252 = vpack.c.bf16 %v1250, %v1248
      %v1255 = vunpack.c.l.b16 %v1251
      %v1256 = vunpack.c.l.b16 %v1252
      %v1257 = vunpack.c.h.b16 %v1251
      %v1258 = vunpack.c.h.b16 %v1252
      %v1259 = vpack.c.b16 %v1256, %v1255
      %v1260 = vpack.c.b16 %v1258, %v1257
      %1263 = vst [vmem:[#allocation2 + $0x20] sm:$0xff] %v1259
      %1264 = vst [vmem:[#allocation2 + $0x28] sm:$0xff] %v1260
      %1265 = vrot.lane.b32.xlu0 %v1150, 1
      %v1266 = vpop.permute.xlu0 %1265
      %1267 = vrot.lane.b32.xlu0 %v1152, 1
      %v1268 = vpop.permute.xlu0 %1267
      %1271 = vrot.lane.b32.xlu0 %v1149, 1
      %v1272 = vpop.permute.xlu0 %1271
      %1273 = vrot.lane.b32.xlu0 %v1151, 1
      %v1274 = vpop.permute.xlu0 %1273
      %v1275 = vsel %vm374, %v1272, %v1266
      %v1276 = vsel %vm374, %v1274, %v1268
      %v1281 = vsel %vm374, %v1266, %v1272
      %v1282 = vsel %vm374, %v1268, %v1274
      %v1283 = vmul.f32 %v1281, %v382
      %v1284 = vmul.f32 %v1275, %v386
      %v1285 = vmul.f32 %v1282, %v382
      %v1286 = vmul.f32 %v1276, %v386
      %v1287 = vpack.c.bf16 %v1285, %v1283
      %v1288 = vpack.c.bf16 %v1286, %v1284
      %v1291 = vunpack.c.l.b16 %v1287
      %v1292 = vunpack.c.l.b16 %v1288
      %v1293 = vunpack.c.h.b16 %v1287
      %v1294 = vunpack.c.h.b16 %v1288
      %v1295 = vpack.c.b16 %v1292, %v1291
      %v1296 = vpack.c.b16 %v1294, %v1293
      %1299 = vst [vmem:[#allocation2 + $0x30] sm:$0xff] %v1295
      %1300 = vst [vmem:[#allocation2 + $0x38] sm:$0xff] %v1296
      %v1301 = vmul.f32 %v1149, %v401
      %v1302 = vmul.f32 %v1150, %v405
      %v1303 = vmul.f32 %v1151, %v401
      %v1304 = vmul.f32 %v1152, %v405
      %v1305 = vpack.c.bf16 %v1303, %v1301
      %v1306 = vpack.c.bf16 %v1304, %v1302
      %v1309 = vunpack.c.l.b16 %v1305
      %v1310 = vunpack.c.l.b16 %v1306
      %v1311 = vunpack.c.h.b16 %v1305
      %v1312 = vunpack.c.h.b16 %v1306
      %v1313 = vpack.c.b16 %v1310, %v1309
      %v1314 = vpack.c.b16 %v1312, %v1311
      %1317 = vst [vmem:[#allocation2 + $0x40] sm:$0xff] %v1313
      %1318 = vst [vmem:[#allocation2 + $0x48] sm:$0xff] %v1314
      %1319 = vrot.lane.b32.xlu0 %v1149, 127
      %v1320 = vpop.permute.xlu0 %1319
      %1321 = vrot.lane.b32.xlu0 %v1150, 127
      %v1322 = vpop.permute.xlu0 %1321
      %1323 = vrot.lane.b32.xlu0 %v1151, 127
      %v1324 = vpop.permute.xlu0 %1323
      %1325 = vrot.lane.b32.xlu0 %v1152, 127
      %v1326 = vpop.permute.xlu0 %1325
      %v1327 = vsel %vm421, %v1320, %v1322
      %v1328 = vsel %vm421, %v1324, %v1326
      %v1335 = vsel %vm421, %v1322, %v1320
      %v1336 = vsel %vm421, %v1326, %v1324
      %v1337 = vmul.f32 %v1327, %v430
      %v1338 = vmul.f32 %v1335, %v434
      %v1339 = vmul.f32 %v1328, %v430
      %v1340 = vmul.f32 %v1336, %v434
      %v1341 = vpack.c.bf16 %v1339, %v1337
      %v1342 = vpack.c.bf16 %v1340, %v1338
      %v1345 = vunpack.c.l.b16 %v1341
      %v1346 = vunpack.c.l.b16 %v1342
      %v1347 = vunpack.c.h.b16 %v1341
      %v1348 = vunpack.c.h.b16 %v1342
      %v1349 = vpack.c.b16 %v1346, %v1345
      %v1350 = vpack.c.b16 %v1348, %v1347
      %1353 = vst [vmem:[#allocation2 + $0x50] sm:$0xff] %v1349
      %1354 = vst [vmem:[#allocation2 + $0x58] sm:$0xff] %v1350
      %1355 = vrot.lane.b32.xlu0 %v1149, 113
      %v1356 = vpop.permute.xlu0 %1355
      %1357 = vrot.lane.b32.xlu0 %v1150, 113
      %v1358 = vpop.permute.xlu0 %1357
      %1359 = vrot.lane.b32.xlu0 %v1151, 113
      %v1360 = vpop.permute.xlu0 %1359
      %1361 = vrot.lane.b32.xlu0 %v1152, 113
      %v1362 = vpop.permute.xlu0 %1361
      %v1363 = vsel %vm450, %v1356, %v1358
      %v1364 = vsel %vm450, %v1360, %v1362
      %v1371 = vsel %vm450, %v1358, %v1356
      %v1372 = vsel %vm450, %v1362, %v1360
      %v1373 = vmul.f32 %v1363, %v459
      %v1374 = vmul.f32 %v1371, %v463
      %v1375 = vmul.f32 %v1364, %v459
      %v1376 = vmul.f32 %v1372, %v463
      %v1377 = vpack.c.bf16 %v1375, %v1373
      %v1378 = vpack.c.bf16 %v1376, %v1374
      %v1381 = vunpack.c.l.b16 %v1377
      %v1382 = vunpack.c.l.b16 %v1378
      %v1383 = vunpack.c.h.b16 %v1377
      %v1384 = vunpack.c.h.b16 %v1378
      %v1385 = vpack.c.b16 %v1382, %v1381
      %v1386 = vpack.c.b16 %v1384, %v1383
      %1389 = vst [vmem:[#allocation2 + $0x60] sm:$0xff] %v1385
      %1390 = vst [vmem:[#allocation2 + $0x68] sm:$0xff] %v1386
      %1391 = vrot.lane.b32.xlu0 %v1149, 112
      %v1392 = vpop.permute.xlu0 %1391
      %1393 = vrot.lane.b32.xlu0 %v1150, 112
      %v1394 = vpop.permute.xlu0 %1393
      %1395 = vrot.lane.b32.xlu0 %v1151, 112
      %v1396 = vpop.permute.xlu0 %1395
      %1397 = vrot.lane.b32.xlu0 %v1152, 112
      %v1398 = vpop.permute.xlu0 %1397
      %v1399 = vsel %vm479, %v1392, %v1394
      %v1400 = vsel %vm479, %v1396, %v1398
      %v1407 = vsel %vm479, %v1394, %v1392
      %v1408 = vsel %vm479, %v1398, %v1396
      %v1409 = vmul.f32 %v1399, %v488
      %v1410 = vmul.f32 %v1407, %v492
      %v1411 = vmul.f32 %v1400, %v488
      %v1412 = vmul.f32 %v1408, %v492
      %v1413 = vpack.c.bf16 %v1411, %v1409
      %v1414 = vpack.c.bf16 %v1412, %v1410
      %v1417 = vunpack.c.l.b16 %v1413
      %v1418 = vunpack.c.l.b16 %v1414
      %v1419 = vunpack.c.h.b16 %v1413
      %v1420 = vunpack.c.h.b16 %v1414
      %v1421 = vpack.c.b16 %v1418, %v1417
      %v1422 = vpack.c.b16 %v1420, %v1419
      %1425 = vst [vmem:[#allocation2 + $0x70] sm:$0xff] %v1421
      %1426 = vst [vmem:[#allocation2 + $0x78] sm:$0xff] %v1422
      %1427 = vrot.lane.b32.xlu0 %v1149, 111
      %v1428 = vpop.permute.xlu0 %1427
      %1429 = vrot.lane.b32.xlu0 %v1150, 111
      %v1430 = vpop.permute.xlu0 %1429
      %1431 = vrot.lane.b32.xlu0 %v1151, 111
      %v1432 = vpop.permute.xlu0 %1431
      %1433 = vrot.lane.b32.xlu0 %v1152, 111
      %v1434 = vpop.permute.xlu0 %1433
      %v1435 = vsel %vm508, %v1428, %v1430
      %v1436 = vsel %vm508, %v1432, %v1434
      %v1443 = vsel %vm508, %v1430, %v1428
      %v1444 = vsel %vm508, %v1434, %v1432
      %v1445 = vmul.f32 %v1435, %v517
      %v1446 = vmul.f32 %v1443, %v521
      %v1447 = vmul.f32 %v1436, %v517
      %v1448 = vmul.f32 %v1444, %v521
      %v1449 = vpack.c.bf16 %v1447, %v1445
      %v1450 = vpack.c.bf16 %v1448, %v1446
      %v1453 = vunpack.c.l.b16 %v1449
      %v1454 = vunpack.c.l.b16 %v1450
      %v1455 = vunpack.c.h.b16 %v1449
      %v1456 = vunpack.c.h.b16 %v1450
      %v1457 = vpack.c.b16 %v1454, %v1453
      %v1458 = vpack.c.b16 %v1456, %v1455
      %1461 = vst [vmem:[#allocation2 + $0x80] sm:$0xff] %v1457
      %1462 = vst [vmem:[#allocation2 + $0x88] sm:$0xff] %v1458
      %1463 = vst [vmem:[#allocation2 + $0x90] sm:$0xff] %v538
      %v1464 = vld [vmem:[%s4] sm:$0xf]
      %v1465 = vld [vmem:[#allocation2] sm:$0xff]
      %v1466 = vld [vmem:[#allocation2 + $0x8] sm:$0xff]
      %v1467 = vld [vmem:[#allocation2 + $0x10] sm:$0xff]
      %v1468 = vld [vmem:[#allocation2 + $0x18] sm:$0xff]
      %v1469 = vld [vmem:[#allocation2 + $0x20] sm:$0xff]
      %v1470 = vld [vmem:[#allocation2 + $0x28] sm:$0xff]
      %v1471 = vld [vmem:[#allocation2 + $0x30] sm:$0xff]
      %v1472 = vld [vmem:[#allocation2 + $0x38] sm:$0xff]
      %v1473 = vld [vmem:[#allocation2 + $0x40] sm:$0xff]
      %v1474 = vld [vmem:[#allocation2 + $0x48] sm:$0xff]
      %v1475 = vld [vmem:[#allocation2 + $0x50] sm:$0xff]
      %v1476 = vld [vmem:[#allocation2 + $0x58] sm:$0xff]
      %v1477 = vld [vmem:[#allocation2 + $0x60] sm:$0xff]
      %v1478 = vld [vmem:[#allocation2 + $0x68] sm:$0xff]
      %v1479 = vld [vmem:[#allocation2 + $0x70] sm:$0xff]
      %v1480 = vld [vmem:[#allocation2 + $0x78] sm:$0xff]
      %v1481 = vld [vmem:[#allocation2 + $0x80] sm:$0xff]
      %v1482 = vld [vmem:[#allocation2 + $0x88] sm:$0xff]
      %v1483 = vld [vmem:[#allocation2 + $0x90] sm:$0xff]
      %v1486 = vunpack.c.l.s4 1983009808
      %v1487 = vunpack.c.0.s8 %v1486
      %v1488 = vlaneseq
      %v1489 = vshrl.u32 %v1488, 7
      %v1490 = vsub.s32 %v1487, %v1489
      %v1491 = vrot.slane %v1464, %v1490
      %v1492 = vcombine.high %v1491, %v1491
      %v1513 = vunpack.c.l.b16 %v1465
      %v1514 = vunpack.c.h.b16 %v1465
      %v1515 = vunpack.c.l.b16 %v1466
      %v1516 = vunpack.c.h.b16 %v1466
      %v1517 = vunpack.c.l.b16 %v1467
      %v1518 = vunpack.c.h.b16 %v1467
      %v1519 = vunpack.c.l.b16 %v1468
      %v1520 = vunpack.c.h.b16 %v1468
      %v1521 = vunpack.c.l.b16 %v1469
      %v1522 = vunpack.c.h.b16 %v1469
      %v1523 = vunpack.c.l.b16 %v1470
      %v1524 = vunpack.c.h.b16 %v1470
      %v1525 = vunpack.c.l.b16 %v1471
      %v1526 = vunpack.c.h.b16 %v1471
      %v1527 = vunpack.c.l.b16 %v1472
      %v1528 = vunpack.c.h.b16 %v1472
      %v1529 = vunpack.c.l.b16 %v1473
      %v1530 = vunpack.c.h.b16 %v1473
      %v1531 = vunpack.c.l.b16 %v1474
      %v1532 = vunpack.c.h.b16 %v1474
      %v1533 = vunpack.c.l.b16 %v1475
      %v1534 = vunpack.c.h.b16 %v1475
      %v1535 = vunpack.c.l.b16 %v1476
      %v1536 = vunpack.c.h.b16 %v1476
      %v1537 = vunpack.c.l.b16 %v1477
      %v1538 = vunpack.c.h.b16 %v1477
      %v1539 = vunpack.c.l.b16 %v1478
      %v1540 = vunpack.c.h.b16 %v1478
      %v1541 = vunpack.c.l.b16 %v1479
      %v1542 = vunpack.c.h.b16 %v1479
      %v1543 = vunpack.c.l.b16 %v1480
      %v1544 = vunpack.c.h.b16 %v1480
      %v1545 = vunpack.c.l.b16 %v1481
      %v1546 = vunpack.c.h.b16 %v1481
      %v1547 = vunpack.c.l.b16 %v1482
      %v1548 = vunpack.c.h.b16 %v1482
      %v1549 = vunpack.c.l.b16 %v1483
      %v1550 = vunpack.c.h.b16 %v1483
      %v1551 = vpack.c.b16 %v1515, %v1513
      %v1552 = vpack.c.b16 %v1516, %v1514
      %v1553 = vpack.c.b16 %v1519, %v1517
      %v1554 = vpack.c.b16 %v1520, %v1518
      %v1555 = vpack.c.b16 %v1523, %v1521
      %v1556 = vpack.c.b16 %v1524, %v1522
      %v1557 = vpack.c.b16 %v1527, %v1525
      %v1558 = vpack.c.b16 %v1528, %v1526
      %v1559 = vpack.c.b16 %v1531, %v1529
      %v1560 = vpack.c.b16 %v1532, %v1530
      %v1561 = vpack.c.b16 %v1535, %v1533
      %v1562 = vpack.c.b16 %v1536, %v1534
      %v1563 = vpack.c.b16 %v1539, %v1537
      %v1564 = vpack.c.b16 %v1540, %v1538
      %v1565 = vpack.c.b16 %v1543, %v1541
      %v1566 = vpack.c.b16 %v1544, %v1542
      %v1567 = vpack.c.b16 %v1547, %v1545
      %v1568 = vpack.c.b16 %v1548, %v1546
      %v1569 = vpack.c.b16 %v1549, %v1549
      %v1570 = vpack.c.b16 %v1550, %v1550
      %v1590 = vsel %vm1095, %v1492, 0
      %v1593 = vsel %vm1099, %v1569, 0
      %v1596 = vsel %vm1099, %v1570, 0
      %1598 = vmatprep.subr.bf16.mxu0 %v1566
      %1599 = vmatpush1.bf16.msra.mxu0 %v1565
      %1600 = vmatprep.subr.bf16.mxu0 %v1564
      %1601 = vmatpush1.bf16.msra.mxu0 %v1563
      %1602 = vmatprep.subr.bf16.mxu0 %v1562
      %1603 = vmatpush1.bf16.msra.mxu0 %v1561
      %1604 = vmatprep.subr.bf16.mxu0 %v1560
      %1605 = vmatpush1.bf16.msra.mxu0 %v1559
      %1606 = vmatprep.subr.bf16.mxu0 %v1558
      %1607 = vmatpush1.bf16.msra.mxu0 %v1557
      %1608 = vmatprep.subr.bf16.mxu0 %v1556
      %1609 = vmatpush1.bf16.msra.mxu0 %v1555
      %1610 = vmatprep.subr.bf16.mxu0 %v1554
      %1611 = vmatpush1.bf16.msra.mxu0 %v1553
      %1612 = vmatprep.subr.bf16.mxu0 %v1552
      %1613 = vmatpush1.bf16.msra.mxu0 %v1551
      %1614 = vmatprep.subr.bf16.mxu0 0
      %1615 = vmatpush2.bf16.msra.mxu0 0
      %1616 = vmatprep.subr.bf16.mxu0 0
      %1617 = vmatpush2.bf16.msra.mxu0 0
      %1618 = vmatprep.subr.bf16.mxu0 0
      %1619 = vmatpush2.bf16.msra.mxu0 0
      %1620 = vmatprep.subr.bf16.mxu0 0
      %1621 = vmatpush2.bf16.msra.mxu0 0
      %1622 = vmatprep.subr.bf16.mxu0 0
      %1623 = vmatpush2.bf16.msra.mxu0 0
      %1624 = vmatprep.subr.bf16.mxu0 0
      %1625 = vmatpush2.bf16.msra.mxu0 0
      %1626 = vmatprep.subr.bf16.mxu0 %v1596
      %1627 = vmatpush2.bf16.msra.mxu0 %v1593
      %1628 = vmatprep.subr.bf16.mxu0 %v1568
      %1629 = vmatpush2.bf16.msra.mxu0 %v1567
      %1630 = vmatprep.mubr.bf16.mxu0 %v1590
      %1631 = vmatmul.mubr.bf16.gmra.mxu0 %v1491
      %v1632 = vpop.f32.mrf.mxu0
      %v1633 = vadd.f32 0.0, %v1632
      %v1634 = vpop.f32.mrf.mxu0
      %v1635 = vadd.f32 0.0, %v1634
      %v1636 = vpop.f32.mrf.mxu0
      %v1637 = vpop.f32.mrf.mxu0
      %1638 = vdwg.mxu0
      %v1641 = vcombine.low %v1633, %v1635
      %v1643 = vsub.f32 %v272, %v1641
      %1644 = vst [vmem:[%s264] sm:$0x77] %v1643
      %p1645 = scmp.lt.s32.totalorder %s18, 5
      %s1646 = scalar_select %p1645, %s18, 5
      %s1647 = smul.addr %s1646, 2
      %s1648 = smul.addr %s1647, 4
      %s1649 = scalar_lea.vmem %s5, %s1648
      %p1650 = scmp.lt.s32.totalorder %s18, 5
      %s1651 = scalar_select %p1650, %s18, 5
      %s1652 = smul.addr %s1651, 2
      %s1653 = smul.addr %s1652, 4
      %s1654 = scalar_lea.vmem %s6, %s1653
      // Predicated region
      $region41: #{derain_cyclegan_forward.5} parent=39 // pred_check
        %p1655 = pneg %p146
      $region42: #{derain_cyclegan_forward.5} parent=39 // pred_check_branch
        %1657 = sbr.rel (%p1655) target = $region44
      $region43: #{derain_cyclegan_forward.5} parent=39 // pred_region
        _
      $region44: #{derain_cyclegan_forward.5} parent=39 // pred_fallthru
        _
      // Predicated region
      $region45: #{derain_cyclegan_forward.5} parent=39 // pred_check
        %p1658 = pneg %p172
      $region46: #{derain_cyclegan_forward.5} parent=39 // pred_check_branch
        %1660 = sbr.rel (%p1658) target = $region48
      $region47: #{derain_cyclegan_forward.5} parent=39 // pred_region
        _
      $region48: #{derain_cyclegan_forward.5} parent=39 // pred_fallthru
        _
    $region40: #{derain_cyclegan_forward.5} parent=5 // pred_fallthru
      _
    %p1661 = scmp.le.s32.totalorder 2, %s13
    // Predicated region
    $region49: #{derain_cyclegan_forward.5} parent=5 // pred_check
      %p1662 = pneg %p1661
    $region50: #{derain_cyclegan_forward.5} parent=5 // pred_check_branch
      %1664 = sbr.rel (%p1662) target = $region52
    $region51: #{derain_cyclegan_forward.5} parent=5 // pred_region
      %s1665 = ssub.s32 %s13, 2
      // Predicated region
      $region53: #{derain_cyclegan_forward.5} parent=51 // pred_check
        %p1666 = pneg %p152
      $region54: #{derain_cyclegan_forward.5} parent=51 // pred_check_branch
        %1668 = sbr.rel (%p1666) target = $region56
      $region55: #{derain_cyclegan_forward.5} parent=51 // pred_region
        %p1669 = scmp.lt.s32.totalorder %s19, 5
        %s1670 = scalar_select %p1669, %s19, 5
        %s1671 = smul.addr %s1670, 2
        %s1672 = smul.addr %s1671, 4
        %s1673 = scalar_lea.vmem %s5, %s1672
      $region56: #{derain_cyclegan_forward.5} parent=51 // pred_fallthru
        _
      // Predicated region
      $region57: #{derain_cyclegan_forward.5} parent=51 // pred_check
        %p1674 = pneg %p178
      $region58: #{derain_cyclegan_forward.5} parent=51 // pred_check_branch
        %1676 = sbr.rel (%p1674) target = $region60
      $region59: #{derain_cyclegan_forward.5} parent=51 // pred_region
        %p1677 = scmp.lt.s32.totalorder %s19, 5
        %s1678 = scalar_select %p1677, %s19, 5
        %s1679 = smul.addr %s1678, 2
        %s1680 = smul.addr %s1679, 4
        %s1681 = scalar_lea.vmem %s6, %s1680
      $region60: #{derain_cyclegan_forward.5} parent=51 // pred_fallthru
        _
    $region52: #{derain_cyclegan_forward.5} parent=5 // pred_fallthru
      _
  $region6: #{derain_cyclegan_forward.5} parent=0 // loop_footer
    %s17 = sadd.s32 1, %s13
  $region7: #{derain_cyclegan_forward.5} parent=0 // loop_footer_branch
    %12 = sbr.rel target = $region3
  $region8: #{derain_cyclegan_forward.5} parent=0 // loop_exit
    _

</llo_original>
